<compile_context>
chip_gen: v7x
topology: tpu7x:2x2x1
jax: 0.10.0
libtpu: 0.0.40
codegen_flags: <defaults>
</compile_context>

<pallas_src>
import functools

import numpy as np
import jax
import jax.numpy as jnp
from jax.experimental import pallas as pl
from jax.experimental.pallas import tpu as pltpu

FEA = 32           # fea_channels
MID = 16           # middle_channel
N_HALF = MID // 2  # DilatedParallelConvBlockD2 split: n = ceil(16/2) = 8, n2 = 8


def _round_up(x, m):
    return (x + m - 1) // m * m


# ----------------------------------------------------------------------------
# Host-side helpers: bilinear interpolation matrices (align_corners=False).
# ----------------------------------------------------------------------------
def _bilinear_matrix(out_size, in_size):
    """Dense (out_size, in_size) matrix matching F.interpolate(bilinear,
    align_corners=False) along one axis."""
    i = np.arange(out_size, dtype=np.float64)
    src = (i + 0.5) * (in_size / out_size) - 0.5
    src = np.maximum(src, 0.0)
    i0 = np.minimum(np.floor(src).astype(np.int64), in_size - 1)
    i1 = np.minimum(i0 + 1, in_size - 1)
    frac = (src - i0).astype(np.float32)
    m = np.zeros((out_size, in_size), dtype=np.float32)
    rows = np.arange(out_size)
    m[rows, i0] += (1.0 - frac)
    m[rows, i1] += frac
    return m


def _im2col_weight(w):
    """torch (Cout, Cin, 3, 3) -> (Cout, 9*Cin), tap-major / channel-minor,
    matching the in-kernel slab ordering."""
    cout, cin = w.shape[0], w.shape[1]
    return jnp.transpose(w, (0, 2, 3, 1)).reshape(cout, 9 * cin)


# ----------------------------------------------------------------------------
# Fused head kernel.  Spatial layout inside the kernel: flat, zero-padded
# "canvas" of the low-res grid, (Hl+4) x (Wl+4) row-major (length Np), kept on
# the LANE axis; channels on sublanes.  The canvas scratch is bf16 so the
# im2col slabs feed the MXU natively; accumulation is f32.
# ----------------------------------------------------------------------------
def _mambanet2_head_kernel(
        high_ref, low_ref,
        w0_ref, rplace_ref, w12_ref, wlow_ref, b12_ref,
        a1_ref, wr_ref, b3_ref, a2_ref, wseg_ref,
        rh_ref, rw_ref,
        out_ref,
        canvas_ref,
        *, Hl, Wl, Hp, Wp, Np, ML, off1, off2):
    f32 = jnp.float32
    bf16 = jnp.bfloat16

    # Zero only the canvas margins (the interior [ML, ML+Np) is fully
    # overwritten by in0 right below; margins keep the shifted tap views NaN
    # free).  ML is a multiple of 128 so the left store is lane-dense.
    canvas_ref[:, :ML] = jnp.zeros((MID, ML), bf16)
    canvas_ref[:, ML + Np:] = jnp.zeros((MID, canvas_ref.shape[1] - ML - Np), bf16)

    # --- conv0 (1x1, 32->16) BEFORE the resize (they commute): halves the
    #     rows of the dominant (Hh*Wh, Np) matmul.
    h16 = jnp.dot(w0_ref[...], high_ref[0], preferred_element_type=f32)   # (16, Hh*Wh)
    # Bilinear resize fused with the zero-halo canvas placement (rplace has
    # zero columns outside the interior, so in0's halo is exactly zero).
    in0 = jnp.dot(h16.astype(bf16), rplace_ref[...],
                  preferred_element_type=f32)                             # (16, Np)
    canvas_ref[:, ML:ML + Np] = in0.astype(bf16)                          # aligned store

    # --- conv1 (3x3, pad 1) on channels 0..7 and conv2 (3x3, pad 2, dil 2) on
    #     channels 8..15 merged into ONE matmul with a block-diagonal weight
    #     (BN1 scale already folded into the weight rows on the host).
    slab12 = jnp.concatenate(
        [canvas_ref[:N_HALF, ML + o:ML + o + Np] for o in off1] +
        [canvas_ref[N_HALF:, ML + o:ML + o + Np] for o in off2], axis=0)  # (144, Np) bf16
    hi = jnp.dot(w12_ref[...], slab12, preferred_element_type=f32)        # (16, Np)

    # --- low branch: 1x1 conv (BN2 scale folded) in the flat low-res layout.
    lo = jnp.dot(wlow_ref[...], low_ref[0], preferred_element_type=f32)   # (16, Hl*Wl)

    # --- hi + lo + (bb1 + bb2), PReLU(16), written row-wise into the canvas
    #     interior.  This replaces the dense `plow` scatter matmul; the canvas
    #     halo keeps in0's zeros so the refine conv sees correct zero padding.
    b12 = b12_ref[...]
    a1 = a1_ref[...]
    for a in range(Hl):
        p0 = (a + 2) * Wp + 2
        row = hi[:, p0:p0 + Wl] + lo[:, a * Wl:(a + 1) * Wl] + b12        # (16, Wl)
        row = jnp.where(row >= 0.0, row, a1 * row)
        canvas_ref[:, ML + p0:ML + p0 + Wl] = row.astype(bf16)

    # --- refine: 3x3 conv (pad 1, BN3 scale folded) + bias + PReLU().
    slab_r = jnp.concatenate(
        [canvas_ref[:, ML + o:ML + o + Np] for o in off1], axis=0)        # (144, Np) bf16
    r = jnp.dot(wr_ref[...], slab_r, preferred_element_type=f32) + b3_ref[...]
    r = jnp.where(r >= 0.0, r, a2_ref[...] * r)                           # (16, Np)

    # --- SegNIN: 1x1 conv 16 -> 1.
    seg = jnp.dot(wseg_ref[...], r.astype(bf16), preferred_element_type=f32)  # (1, Np)

    # Canvas-row gather (Hp full-width rows; the 2-wide halo is annihilated by
    # zero columns/rows of the output-resize matrices, so no interior slicing
    # or masking is needed).  A value reshape (1,Np)->(Hp,Wp) would be cheaper
    # still but non-128 lane reshapes are not reliably lowered by Mosaic.
    seg2d = jnp.concatenate(
        [seg[:, i * Wp:(i + 1) * Wp] for i in range(Hp)], axis=0)         # (Hp, Wp)

    # --- final bilinear resize to (H, W_pad) + sigmoid; W_pad is lane-dense.
    t = jnp.dot(rh_ref[...], seg2d.astype(bf16), preferred_element_type=f32)  # (H, Wp)
    y = jnp.dot(t.astype(bf16), rw_ref[...], preferred_element_type=f32)      # (H, W_pad)
    out_ref[0] = jax.nn.sigmoid(y)


def mambanet2_head_forward(img_hw, high_feature, low_feature, params):
    """high_feature/low_feature: NCHW, 32 channels (synthetic RFB outputs)."""
    H, W = img_hw
    B, _, Hh, Wh = high_feature.shape
    _, _, Hl, Wl = low_feature.shape

    Hp, Wp = Hl + 4, Wl + 4      # low grid + 2-wide zero halo on each side
    Np = Hp * Wp                 # flat canvas length
    M = 2 * Wp + 2               # max |tap offset| of the dilated 3x3 conv
    ML = _round_up(M, 128)       # lane-aligned left margin
    NE = ML + _round_up(Np + M, 128)
    W_pad = _round_up(W, 128)    # lane-dense output store, sliced on host

    f32, bf16 = jnp.float32, jnp.bfloat16

    # ---- host-built constant matrices (bf16 matmul inputs) ------------------
    kron = np.kron(_bilinear_matrix(Hl, Hh), _bilinear_matrix(Wl, Wh))  # (Hl*Wl, Hh*Wh)
    cols = np.array([(i + 2) * Wp + (j + 2)
                     for i in range(Hl) for j in range(Wl)], dtype=np.int64)
    rplace = np.zeros((Hh * Wh, Np), np.float32)     # resize + zero-halo placement
    rplace[:, cols] = kron.T
    rhout = np.zeros((H, Hp), np.float32)            # halo columns = 0
    rhout[:, 2:2 + Hl] = _bilinear_matrix(H, Hl)
    rwoutt = np.zeros((Wp, W_pad), np.float32)       # halo rows = 0, pad cols = 0
    rwoutt[2:2 + Wl, :W] = _bilinear_matrix(W, Wl).T

    # flat-canvas offsets of the 3x3 taps (dilation 1 and 2), center-anchored
    off1 = tuple((ky - 1) * Wp + (kx - 1) for ky in range(3) for kx in range(3))
    off2 = tuple((2 * ky - 2) * Wp + (2 * kx - 2)
                 for ky in range(3) for kx in range(3))

    # ---- fold BN scales into the conv weights; keep only bias adds ----------
    s1, b1 = params["bn1"]
    s2, b2 = params["bn2"]
    s3, b3 = params["bn3"]
    w1 = _im2col_weight(params["w_conv1"]) * s1[:N_HALF]            # (8, 72)
    w2 = _im2col_weight(params["w_conv2"]) * s1[N_HALF:]            # (8, 72)
    w12 = jnp.zeros((MID, 2 * 9 * N_HALF), f32)                     # block-diagonal
    w12 = w12.at[:N_HALF, :9 * N_HALF].set(w1)
    w12 = w12.at[N_HALF:, 9 * N_HALF:].set(w2)
    wlow = params["w_low"] * s2                                     # (16, 32)
    wr = _im2col_weight(params["w_refine"]) * s3                    # (16, 144)
    bias12 = b1 + b2                                                # (16, 1)

    consts = [params["w_conv0"].astype(bf16),
              jnp.asarray(rplace, bf16),
              w12.astype(bf16),
              wlow.astype(bf16),
              bias12.astype(f32),
              params["alpha1"].astype(f32),
              wr.astype(bf16),
              b3.astype(f32),
              params["alpha2"].astype(f32),
              params["w_seg"].astype(bf16),
              jnp.asarray(rhout, bf16),
              jnp.asarray(rwoutt, bf16)]

    high_flat = high_feature.reshape(B, FEA, Hh * Wh).astype(bf16)
    low_flat = low_feature.reshape(B, FEA, Hl * Wl).astype(bf16)

    kern = functools.partial(_mambanet2_head_kernel, Hl=Hl, Wl=Wl, Hp=Hp, Wp=Wp,
                             Np=Np, ML=ML, off1=off1, off2=off2)

    # Explicit scoped-VMEM limit (review item; v5e default is only 16 MiB).
    const_bytes = sum(int(np.prod(c.shape)) * jnp.dtype(c.dtype).itemsize
                      for c in consts)
    step_io = FEA * (Hh * Wh + Hl * Wl) * 2 + H * W_pad * 4
    temps = 2 * (9 * MID) * Np * 2 + 4 * MID * Np * 4
    est = 2 * step_io + 2 * const_bytes + MID * NE * 2 + temps
    vmem_limit = int(min(max(est + (16 << 20), 32 << 20), 64 << 20))

    def _const_spec(arr, single_buffer):
        idx = (lambda b, n=arr.ndim: (0,) * n)
        if single_buffer:
            # Constants are grid-invariant: single-buffer them so they are not
            # doubled in VMEM (critical on v7x's 64 MiB at real resolutions).
            return pl.BlockSpec(arr.shape, idx, pipeline_mode=pl.Buffered(1))
        return pl.BlockSpec(arr.shape, idx)

    def _call(single_buffer_consts):
        return pl.pallas_call(
            kern,
            out_shape=jax.ShapeDtypeStruct((B, H, W_pad), jnp.float32),
            grid=(B,),
            in_specs=[pl.BlockSpec((1, FEA, Hh * Wh), lambda b: (b, 0, 0)),
                      pl.BlockSpec((1, FEA, Hl * Wl), lambda b: (b, 0, 0))]
                     + [_const_spec(c, single_buffer_consts) for c in consts],
            out_specs=pl.BlockSpec((1, H, W_pad), lambda b: (b, 0, 0)),
            scratch_shapes=[pltpu.VMEM((MID, NE), bf16)],
            compiler_params=pltpu.CompilerParams(
                dimension_semantics=("parallel",),
                vmem_limit_bytes=vmem_limit),
        )(high_flat, low_flat, *consts)

    # TODO(synk): for B==1 on v7x, add a second "parallel" spatial grid axis
    # (halved canvas with shared halo) so both TensorCores are used.
    try:
        out = _call(True)
    except Exception:      # graceful fallback if Buffered(1) is unsupported
        out = _call(False)
    return out[:, :, :W].reshape(B, 1, H, W)


# ----------------------------------------------------------------------------
# Deterministic parameter construction (synthetic, no checkpoint).
# ----------------------------------------------------------------------------
def _bn_fused(key, c, eps=1e-5):
    k1, k2, k3, k4 = jax.random.split(key, 4)
    gamma = 1.0 + 0.1 * jax.random.normal(k1, (c,), jnp.float32)
    beta = 0.1 * jax.random.normal(k2, (c,), jnp.float32)
    mean = 0.1 * jax.random.normal(k3, (c,), jnp.float32)
    var = jax.random.uniform(k4, (c,), jnp.float32, minval=0.5, maxval=1.5)
    scale = gamma / jnp.sqrt(var + eps)
    bias = beta - mean * scale
    return scale.reshape(c, 1), bias.reshape(c, 1)


def init_params(key):
    ks = jax.random.split(key, 9)

    def conv(k, shape, fan_in):
        return jax.random.normal(k, shape, jnp.float32) / np.sqrt(fan_in)

    p = {}
    # DilatedParallelConvBlockD2(32, 16)
    p["w_conv0"] = conv(ks[0], (MID, FEA), FEA)                   # 1x1 (Cout, Cin)
    p["w_conv1"] = conv(ks[1], (N_HALF, N_HALF, 3, 3), 9 * N_HALF)
    p["w_conv2"] = conv(ks[2], (N_HALF, N_HALF, 3, 3), 9 * N_HALF)
    p["bn1"] = _bn_fused(ks[3], MID)
    # up2_low 1x1 conv + up2_bn2
    p["w_low"] = conv(ks[4], (MID, FEA), FEA)
    p["bn2"] = _bn_fused(ks[5], MID)
    # up2_act = PReLU(16) (PyTorch default init 0.25)
    p["alpha1"] = jnp.full((MID, 1), 0.25, jnp.float32)
    # refine: 3x3 conv 16->16, BN, PReLU() (scalar alpha)
    p["w_refine"] = conv(ks[6], (MID, MID, 3, 3), 9 * MID)
    p["bn3"] = _bn_fused(ks[7], MID)
    p["alpha2"] = jnp.full((1, 1), 0.25, jnp.float32)
    # SegNIN 1x1 conv 16 -> 1
    p["w_seg"] = conv(ks[8], (1, MID), MID)
    return p


if __name__ == "__main__":
    key = jax.random.PRNGKey(0)
    k_x, k_hi, k_lo, k_p = jax.random.split(key, 4)

    # Module input: x of shape (B, N, C, H, W) with N = f_num + 1 = 6.
    B, N, C, H, W = 2, 6, 3, 64, 64
    x = jax.random.normal(k_x, (B, N, C, H, W), jnp.float32)

    # TODO(synk): res2net50_v1b_26w_4s backbone, LightRFB and VisionMamba
    # (bimamba selective scan) are not defined in the provided source;
    # high_feature / low_feature stand in for the High_RFB / Low_RFB outputs
    # (fea_channels=32): high at stride 16, low at stride 8.
    high_feature = jax.random.normal(k_hi, (B, FEA, H // 16, W // 16), jnp.float32)
    low_feature = jax.random.normal(k_lo, (B, FEA, H // 8, W // 8), jnp.float32)

    params = init_params(k_p)
    out = mambanet2_head_forward((H, W), high_feature, low_feature, params)
    out = jax.block_until_ready(out)

    assert out.shape == (B, 1, H, W), out.shape
    assert bool(jnp.all(jnp.isfinite(out)))
    assert bool(jnp.all((out >= 0.0) & (out <= 1.0)))
    print("KERNEL_OK")
</pallas_src>

<mosaic_0001>
module attributes {stable_mosaic.version = 11 : i64} {
  func.func @_mambanet2_head_kernel(%arg0: i32, %arg1: memref<1x32x16xbf16, #tpu.memory_space<vmem>>, %arg2: memref<1x32x64xbf16, #tpu.memory_space<vmem>>, %arg3: memref<16x32xbf16, #tpu.memory_space<vmem>>, %arg4: memref<16x144xbf16, #tpu.memory_space<vmem>>, %arg5: memref<16x144xbf16, #tpu.memory_space<vmem>>, %arg6: memref<16x32xbf16, #tpu.memory_space<vmem>>, %arg7: memref<16x1xf32, #tpu.memory_space<vmem>>, %arg8: memref<16x1xf32, #tpu.memory_space<vmem>>, %arg9: memref<16x144xbf16, #tpu.memory_space<vmem>>, %arg10: memref<16x1xf32, #tpu.memory_space<vmem>>, %arg11: memref<1x1xf32, #tpu.memory_space<vmem>>, %arg12: memref<1x16xbf16, #tpu.memory_space<vmem>>, %arg13: memref<64x12xbf16, #tpu.memory_space<vmem>>, %arg14: memref<12x128xbf16, #tpu.memory_space<vmem>>, %arg15: memref<1x64x128xf32, #tpu.memory_space<vmem>>, %arg16: memref<16x384xbf16, #tpu.memory_space<vmem>>) attributes {dimension_semantics = [#tpu.dimension_semantics<parallel>], iteration_bounds = array<i64: 2>, scalar_prefetch = 0 : i64, scratch_operands = 1 : i64, tpu.core_type = #tpu.core_type<tc>, window_params = [{transform_indices = @transform_0, window_bounds = array<i64: 1, 32, 16>}, {transform_indices = @transform_1, window_bounds = array<i64: 1, 32, 64>}, {pipeline_mode = #tpu.pipeline_mode<synchronous>, transform_indices = @transform_2, window_bounds = array<i64: 16, 32>}, {pipeline_mode = #tpu.pipeline_mode<synchronous>, transform_indices = @transform_3, window_bounds = array<i64: 16, 144>}, {pipeline_mode = #tpu.pipeline_mode<synchronous>, transform_indices = @transform_4, window_bounds = array<i64: 16, 144>}, {pipeline_mode = #tpu.pipeline_mode<synchronous>, transform_indices = @transform_5, window_bounds = array<i64: 16, 32>}, {pipeline_mode = #tpu.pipeline_mode<synchronous>, transform_indices = @transform_6, window_bounds = array<i64: 16, 1>}, {pipeline_mode = #tpu.pipeline_mode<synchronous>, transform_indices = @transform_7, window_bounds = array<i64: 16, 1>}, {pipeline_mode = #tpu.pipeline_mode<synchronous>, transform_indices = @transform_8, window_bounds = array<i64: 16, 144>}, {pipeline_mode = #tpu.pipeline_mode<synchronous>, transform_indices = @transform_9, window_bounds = array<i64: 16, 1>}, {pipeline_mode = #tpu.pipeline_mode<synchronous>, transform_indices = @transform_10, window_bounds = array<i64: 1, 1>}, {pipeline_mode = #tpu.pipeline_mode<synchronous>, transform_indices = @transform_11, window_bounds = array<i64: 1, 16>}, {pipeline_mode = #tpu.pipeline_mode<synchronous>, transform_indices = @transform_12, window_bounds = array<i64: 64, 12>}, {pipeline_mode = #tpu.pipeline_mode<synchronous>, transform_indices = @transform_13, window_bounds = array<i64: 12, 128>}, {transform_indices = @transform_14, window_bounds = array<i64: 1, 64, 128>}]} {
    %cst = arith.constant 0.000000e+00 : bf16
    %0 = vector.broadcast %cst : bf16 to vector<16x128xbf16>
    %c0 = arith.constant 0 : index
    %c0_0 = arith.constant 0 : index
    %1 = vector.load %arg16[%c0, %c0_0] : memref<16x384xbf16, #tpu.memory_space<vmem>>, vector<16x128xbf16>
    tpu.vector_store %arg16[%c0, %c0_0], %0 {strides = array<i32>} : memref<16x384xbf16, #tpu.memory_space<vmem>>, vector<16x128xbf16>,
    %cst_1 = arith.constant 0.000000e+00 : bf16
    %2 = vector.broadcast %cst_1 : bf16 to vector<16x112xbf16>
    %c0_2 = arith.constant 0 : index
    %c272 = arith.constant 272 : index
    %3 = vector.load %arg16[%c0_2, %c272] : memref<16x384xbf16, #tpu.memory_space<vmem>>, vector<16x112xbf16>
    tpu.vector_store %arg16[%c0_2, %c272], %2 {strides = array<i32>} : memref<16x384xbf16, #tpu.memory_space<vmem>>, vector<16x112xbf16>,
    %c0_3 = arith.constant 0 : index
    %c0_4 = arith.constant 0 : index
    %4 = vector.load %arg3[%c0_3, %c0_4] : memref<16x32xbf16, #tpu.memory_space<vmem>>, vector<16x32xbf16>
    %c0_5 = arith.constant 0 : index
    %c0_6 = arith.constant 0 : index
    %c0_7 = arith.constant 0 : index
    %5 = vector.load %arg1[%c0_5, %c0_6, %c0_7] : memref<1x32x16xbf16, #tpu.memory_space<vmem>>, vector<1x32x16xbf16>
    %6 = vector.shape_cast %5 : vector<1x32x16xbf16> to vector<32x16xbf16>
    %cst_8 = arith.constant dense<0.000000e+00> : vector<16x16xf32>
    %7 = tpu.matmul %4, %6, %cst_8 {dimension_numbers = #tpu.dot_dimension_numbers<[1], [0], [0], [1], [0, 0, 1, 1], [], []>} : vector<16x32xbf16>, vector<32x16xbf16>, vector<16x16xf32> -> vector<16x16xf32>
    %8 = arith.truncf %7 : vector<16x16xf32> to vector<16x16xbf16>
    %c0_9 = arith.constant 0 : index
    %c0_10 = arith.constant 0 : index
    %9 = vector.load %arg4[%c0_9, %c0_10] : memref<16x144xbf16, #tpu.memory_space<vmem>>, vector<16x144xbf16>
    %cst_11 = arith.constant dense<0.000000e+00> : vector<16x144xf32>
    %10 = tpu.matmul %8, %9, %cst_11 {dimension_numbers = #tpu.dot_dimension_numbers<[1], [0], [0], [1], [0, 0, 1, 1], [], []>} : vector<16x16xbf16>, vector<16x144xbf16>, vector<16x144xf32> -> vector<16x144xf32>
    %11 = arith.truncf %10 : vector<16x144xf32> to vector<16x144xbf16>
    %c0_12 = arith.constant 0 : index
    %c128 = arith.constant 128 : index
    %12 = vector.load %arg16[%c0_12, %c128] : memref<16x384xbf16, #tpu.memory_space<vmem>>, vector<16x144xbf16>
    tpu.vector_store %arg16[%c0_12, %c128], %11 {strides = array<i32>} : memref<16x384xbf16, #tpu.memory_space<vmem>>, vector<16x144xbf16>,
    %c0_13 = arith.constant 0 : index
    %c115 = arith.constant 115 : index
    %13 = vector.load %arg16[%c0_13, %c115] : memref<16x384xbf16, #tpu.memory_space<vmem>>, vector<8x144xbf16>
    %c0_14 = arith.constant 0 : index
    %c116 = arith.constant 116 : index
    %14 = vector.load %arg16[%c0_14, %c116] : memref<16x384xbf16, #tpu.memory_space<vmem>>, vector<8x144xbf16>
    %c0_15 = arith.constant 0 : index
    %c117 = arith.constant 117 : index
    %15 = vector.load %arg16[%c0_15, %c117] : memref<16x384xbf16, #tpu.memory_space<vmem>>, vector<8x144xbf16>
    %c0_16 = arith.constant 0 : index
    %c127 = arith.constant 127 : index
    %16 = vector.load %arg16[%c0_16, %c127] : memref<16x384xbf16, #tpu.memory_space<vmem>>, vector<8x144xbf16>
    %c0_17 = arith.constant 0 : index
    %c128_18 = arith.constant 128 : index
    %17 = vector.load %arg16[%c0_17, %c128_18] : memref<16x384xbf16, #tpu.memory_space<vmem>>, vector<8x144xbf16>
    %c0_19 = arith.constant 0 : index
    %c129 = arith.constant 129 : index
    %18 = vector.load %arg16[%c0_19, %c129] : memref<16x384xbf16, #tpu.memory_space<vmem>>, vector<8x144xbf16>
    %c0_20 = arith.constant 0 : index
    %c139 = arith.constant 139 : index
    %19 = vector.load %arg16[%c0_20, %c139] : memref<16x384xbf16, #tpu.memory_space<vmem>>, vector<8x144xbf16>
    %c0_21 = arith.constant 0 : index
    %c140 = arith.constant 140 : index
    %20 = vector.load %arg16[%c0_21, %c140] : memref<16x384xbf16, #tpu.memory_space<vmem>>, vector<8x144xbf16>
    %c0_22 = arith.constant 0 : index
    %c141 = arith.constant 141 : index
    %21 = vector.load %arg16[%c0_22, %c141] : memref<16x384xbf16, #tpu.memory_space<vmem>>, vector<8x144xbf16>
    %c8 = arith.constant 8 : index
    %c102 = arith.constant 102 : index
    %22 = vector.load %arg16[%c8, %c102] : memref<16x384xbf16, #tpu.memory_space<vmem>>, vector<8x144xbf16>
    %c8_23 = arith.constant 8 : index
    %c104 = arith.constant 104 : index
    %23 = vector.load %arg16[%c8_23, %c104] : memref<16x384xbf16, #tpu.memory_space<vmem>>, vector<8x144xbf16>
    %c8_24 = arith.constant 8 : index
    %c106 = arith.constant 106 : index
    %24 = vector.load %arg16[%c8_24, %c106] : memref<16x384xbf16, #tpu.memory_space<vmem>>, vector<8x144xbf16>
    %c8_25 = arith.constant 8 : index
    %c126 = arith.constant 126 : index
    %25 = vector.load %arg16[%c8_25, %c126] : memref<16x384xbf16, #tpu.memory_space<vmem>>, vector<8x144xbf16>
    %c8_26 = arith.constant 8 : index
    %c128_27 = arith.constant 128 : index
    %26 = vector.load %arg16[%c8_26, %c128_27] : memref<16x384xbf16, #tpu.memory_space<vmem>>, vector<8x144xbf16>
    %c8_28 = arith.constant 8 : index
    %c130 = arith.constant 130 : index
    %27 = vector.load %arg16[%c8_28, %c130] : memref<16x384xbf16, #tpu.memory_space<vmem>>, vector<8x144xbf16>
    %c8_29 = arith.constant 8 : index
    %c150 = arith.constant 150 : index
    %28 = vector.load %arg16[%c8_29, %c150] : memref<16x384xbf16, #tpu.memory_space<vmem>>, vector<8x144xbf16>
    %c8_30 = arith.constant 8 : index
    %c152 = arith.constant 152 : index
    %29 = vector.load %arg16[%c8_30, %c152] : memref<16x384xbf16, #tpu.memory_space<vmem>>, vector<8x144xbf16>
    %c8_31 = arith.constant 8 : index
    %c154 = arith.constant 154 : index
    %30 = vector.load %arg16[%c8_31, %c154] : memref<16x384xbf16, #tpu.memory_space<vmem>>, vector<8x144xbf16>
    %31 = tpu.concatenate %13, %14, %15, %16, %17, %18, %19, %20, %21, %22, %23, %24, %25, %26, %27, %28 in 0 : vector<8x144xbf16>, vector<8x144xbf16>, vector<8x144xbf16>, vector<8x144xbf16>, vector<8x144xbf16>, vector<8x144xbf16>, vector<8x144xbf16>, vector<8x144xbf16>, vector<8x144xbf16>, vector<8x144xbf16>, vector<8x144xbf16>, vector<8x144xbf16>, vector<8x144xbf16>, vector<8x144xbf16>, vector<8x144xbf16>, vector<8x144xbf16> -> vector<128x144xbf16>
    %32 = tpu.concatenate %29, %30 in 0 : vector<8x144xbf16>, vector<8x144xbf16> -> vector<16x144xbf16>
    %33 = tpu.concatenate %31, %32 in 0 : vector<128x144xbf16>, vector<16x144xbf16> -> vector<144x144xbf16>
    %c0_32 = arith.constant 0 : index
    %c0_33 = arith.constant 0 : index
    %34 = vector.load %arg5[%c0_32, %c0_33] : memref<16x144xbf16, #tpu.memory_space<vmem>>, vector<16x144xbf16>
    %cst_34 = arith.constant dense<0.000000e+00> : vector<16x144xf32>
    %35 = tpu.matmul %34, %33, %cst_34 {dimension_numbers = #tpu.dot_dimension_numbers<[1], [0], [0], [1], [0, 0, 1, 1], [], []>} : vector<16x144xbf16>, vector<144x144xbf16>, vector<16x144xf32> -> vector<16x144xf32>
    %c0_35 = arith.constant 0 : index
    %c0_36 = arith.constant 0 : index
    %36 = vector.load %arg6[%c0_35, %c0_36] : memref<16x32xbf16, #tpu.memory_space<vmem>>, vector<16x32xbf16>
    %c0_37 = arith.constant 0 : index
    %c0_38 = arith.constant 0 : index
    %c0_39 = arith.constant 0 : index
    %37 = vector.load %arg2[%c0_37, %c0_38, %c0_39] : memref<1x32x64xbf16, #tpu.memory_space<vmem>>, vector<1x32x64xbf16>
    %38 = vector.shape_cast %37 : vector<1x32x64xbf16> to vector<32x64xbf16>
    %cst_40 = arith.constant dense<0.000000e+00> : vector<16x64xf32>
    %39 = tpu.matmul %36, %38, %cst_40 {dimension_numbers = #tpu.dot_dimension_numbers<[1], [0], [0], [1], [0, 0, 1, 1], [], []>} : vector<16x32xbf16>, vector<32x64xbf16>, vector<16x64xf32> -> vector<16x64xf32>
    %c0_41 = arith.constant 0 : index
    %c0_42 = arith.constant 0 : index
    %40 = vector.load %arg7[%c0_41, %c0_42] : memref<16x1xf32, #tpu.memory_space<vmem>>, vector<16x1xf32>
    %c0_43 = arith.constant 0 : index
    %c0_44 = arith.constant 0 : index
    %41 = vector.load %arg8[%c0_43, %c0_44] : memref<16x1xf32, #tpu.memory_space<vmem>>, vector<16x1xf32>
    %42 = vector.extract_strided_slice %35 {offsets = [0, 26], sizes = [16, 8], strides = [1, 1]} : vector<16x144xf32> to vector<16x8xf32>
    %43 = vector.extract_strided_slice %39 {offsets = [0, 0], sizes = [16, 8], strides = [1, 1]} : vector<16x64xf32> to vector<16x8xf32>
    %44 = arith.addf %42, %43 : vector<16x8xf32>
    %45 = vector.broadcast %40 : vector<16x1xf32> to vector<16x8xf32>
    %46 = arith.addf %44, %45 : vector<16x8xf32>
    %cst_45 = arith.constant 0.000000e+00 : f32
    %47 = vector.broadcast %cst_45 : f32 to vector<16x8xf32>
    %48 = arith.cmpf oge, %46, %47 : vector<16x8xf32>
    %49 = vector.broadcast %41 : vector<16x1xf32> to vector<16x8xf32>
    %50 = arith.mulf %49, %46 : vector<16x8xf32>
    %51 = arith.select %48, %46, %50 : vector<16x8xi1>, vector<16x8xf32>
    %52 = arith.truncf %51 : vector<16x8xf32> to vector<16x8xbf16>
    %c0_46 = arith.constant 0 : index
    %c154_47 = arith.constant 154 : index
    %53 = vector.load %arg16[%c0_46, %c154_47] : memref<16x384xbf16, #tpu.memory_space<vmem>>, vector<16x8xbf16>
    tpu.vector_store %arg16[%c0_46, %c154_47], %52 {strides = array<i32>} : memref<16x384xbf16, #tpu.memory_space<vmem>>, vector<16x8xbf16>,
    %54 = vector.extract_strided_slice %35 {offsets = [0, 38], sizes = [16, 8], strides = [1, 1]} : vector<16x144xf32> to vector<16x8xf32>
    %55 = vector.extract_strided_slice %39 {offsets = [0, 8], sizes = [16, 8], strides = [1, 1]} : vector<16x64xf32> to vector<16x8xf32>
    %56 = arith.addf %54, %55 : vector<16x8xf32>
    %57 = vector.broadcast %40 : vector<16x1xf32> to vector<16x8xf32>
    %58 = arith.addf %56, %57 : vector<16x8xf32>
    %cst_48 = arith.constant 0.000000e+00 : f32
    %59 = vector.broadcast %cst_48 : f32 to vector<16x8xf32>
    %60 = arith.cmpf oge, %58, %59 : vector<16x8xf32>
    %61 = vector.broadcast %41 : vector<16x1xf32> to vector<16x8xf32>
    %62 = arith.mulf %61, %58 : vector<16x8xf32>
    %63 = arith.select %60, %58, %62 : vector<16x8xi1>, vector<16x8xf32>
    %64 = arith.truncf %63 : vector<16x8xf32> to vector<16x8xbf16>
    %c0_49 = arith.constant 0 : index
    %c166 = arith.constant 166 : index
    %65 = vector.load %arg16[%c0_49, %c166] : memref<16x384xbf16, #tpu.memory_space<vmem>>, vector<16x8xbf16>
    tpu.vector_store %arg16[%c0_49, %c166], %64 {strides = array<i32>} : memref<16x384xbf16, #tpu.memory_space<vmem>>, vector<16x8xbf16>,
    %66 = vector.extract_strided_slice %35 {offsets = [0, 50], sizes = [16, 8], strides = [1, 1]} : vector<16x144xf32> to vector<16x8xf32>
    %67 = vector.extract_strided_slice %39 {offsets = [0, 16], sizes = [16, 8], strides = [1, 1]} : vector<16x64xf32> to vector<16x8xf32>
    %68 = arith.addf %66, %67 : vector<16x8xf32>
    %69 = vector.broadcast %40 : vector<16x1xf32> to vector<16x8xf32>
    %70 = arith.addf %68, %69 : vector<16x8xf32>
    %cst_50 = arith.constant 0.000000e+00 : f32
    %71 = vector.broadcast %cst_50 : f32 to vector<16x8xf32>
    %72 = arith.cmpf oge, %70, %71 : vector<16x8xf32>
    %73 = vector.broadcast %41 : vector<16x1xf32> to vector<16x8xf32>
    %74 = arith.mulf %73, %70 : vector<16x8xf32>
    %75 = arith.select %72, %70, %74 : vector<16x8xi1>, vector<16x8xf32>
    %76 = arith.truncf %75 : vector<16x8xf32> to vector<16x8xbf16>
    %c0_51 = arith.constant 0 : index
    %c178 = arith.constant 178 : index
    %77 = vector.load %arg16[%c0_51, %c178] : memref<16x384xbf16, #tpu.memory_space<vmem>>, vector<16x8xbf16>
    tpu.vector_store %arg16[%c0_51, %c178], %76 {strides = array<i32>} : memref<16x384xbf16, #tpu.memory_space<vmem>>, vector<16x8xbf16>,
    %78 = vector.extract_strided_slice %35 {offsets = [0, 62], sizes = [16, 8], strides = [1, 1]} : vector<16x144xf32> to vector<16x8xf32>
    %79 = vector.extract_strided_slice %39 {offsets = [0, 24], sizes = [16, 8], strides = [1, 1]} : vector<16x64xf32> to vector<16x8xf32>
    %80 = arith.addf %78, %79 : vector<16x8xf32>
    %81 = vector.broadcast %40 : vector<16x1xf32> to vector<16x8xf32>
    %82 = arith.addf %80, %81 : vector<16x8xf32>
    %cst_52 = arith.constant 0.000000e+00 : f32
    %83 = vector.broadcast %cst_52 : f32 to vector<16x8xf32>
    %84 = arith.cmpf oge, %82, %83 : vector<16x8xf32>
    %85 = vector.broadcast %41 : vector<16x1xf32> to vector<16x8xf32>
    %86 = arith.mulf %85, %82 : vector<16x8xf32>
    %87 = arith.select %84, %82, %86 : vector<16x8xi1>, vector<16x8xf32>
    %88 = arith.truncf %87 : vector<16x8xf32> to vector<16x8xbf16>
    %c0_53 = arith.constant 0 : index
    %c190 = arith.constant 190 : index
    %89 = vector.load %arg16[%c0_53, %c190] : memref<16x384xbf16, #tpu.memory_space<vmem>>, vector<16x8xbf16>
    tpu.vector_store %arg16[%c0_53, %c190], %88 {strides = array<i32>} : memref<16x384xbf16, #tpu.memory_space<vmem>>, vector<16x8xbf16>,
    %90 = vector.extract_strided_slice %35 {offsets = [0, 74], sizes = [16, 8], strides = [1, 1]} : vector<16x144xf32> to vector<16x8xf32>
    %91 = vector.extract_strided_slice %39 {offsets = [0, 32], sizes = [16, 8], strides = [1, 1]} : vector<16x64xf32> to vector<16x8xf32>
    %92 = arith.addf %90, %91 : vector<16x8xf32>
    %93 = vector.broadcast %40 : vector<16x1xf32> to vector<16x8xf32>
    %94 = arith.addf %92, %93 : vector<16x8xf32>
    %cst_54 = arith.constant 0.000000e+00 : f32
    %95 = vector.broadcast %cst_54 : f32 to vector<16x8xf32>
    %96 = arith.cmpf oge, %94, %95 : vector<16x8xf32>
    %97 = vector.broadcast %41 : vector<16x1xf32> to vector<16x8xf32>
    %98 = arith.mulf %97, %94 : vector<16x8xf32>
    %99 = arith.select %96, %94, %98 : vector<16x8xi1>, vector<16x8xf32>
    %100 = arith.truncf %99 : vector<16x8xf32> to vector<16x8xbf16>
    %c0_55 = arith.constant 0 : index
    %c202 = arith.constant 202 : index
    %101 = vector.load %arg16[%c0_55, %c202] : memref<16x384xbf16, #tpu.memory_space<vmem>>, vector<16x8xbf16>
    tpu.vector_store %arg16[%c0_55, %c202], %100 {strides = array<i32>} : memref<16x384xbf16, #tpu.memory_space<vmem>>, vector<16x8xbf16>,
    %102 = vector.extract_strided_slice %35 {offsets = [0, 86], sizes = [16, 8], strides = [1, 1]} : vector<16x144xf32> to vector<16x8xf32>
    %103 = vector.extract_strided_slice %39 {offsets = [0, 40], sizes = [16, 8], strides = [1, 1]} : vector<16x64xf32> to vector<16x8xf32>
    %104 = arith.addf %102, %103 : vector<16x8xf32>
    %105 = vector.broadcast %40 : vector<16x1xf32> to vector<16x8xf32>
    %106 = arith.addf %104, %105 : vector<16x8xf32>
    %cst_56 = arith.constant 0.000000e+00 : f32
    %107 = vector.broadcast %cst_56 : f32 to vector<16x8xf32>
    %108 = arith.cmpf oge, %106, %107 : vector<16x8xf32>
    %109 = vector.broadcast %41 : vector<16x1xf32> to vector<16x8xf32>
    %110 = arith.mulf %109, %106 : vector<16x8xf32>
    %111 = arith.select %108, %106, %110 : vector<16x8xi1>, vector<16x8xf32>
    %112 = arith.truncf %111 : vector<16x8xf32> to vector<16x8xbf16>
    %c0_57 = arith.constant 0 : index
    %c214 = arith.constant 214 : index
    %113 = vector.load %arg16[%c0_57, %c214] : memref<16x384xbf16, #tpu.memory_space<vmem>>, vector<16x8xbf16>
    tpu.vector_store %arg16[%c0_57, %c214], %112 {strides = array<i32>} : memref<16x384xbf16, #tpu.memory_space<vmem>>, vector<16x8xbf16>,
    %114 = vector.extract_strided_slice %35 {offsets = [0, 98], sizes = [16, 8], strides = [1, 1]} : vector<16x144xf32> to vector<16x8xf32>
    %115 = vector.extract_strided_slice %39 {offsets = [0, 48], sizes = [16, 8], strides = [1, 1]} : vector<16x64xf32> to vector<16x8xf32>
    %116 = arith.addf %114, %115 : vector<16x8xf32>
    %117 = vector.broadcast %40 : vector<16x1xf32> to vector<16x8xf32>
    %118 = arith.addf %116, %117 : vector<16x8xf32>
    %cst_58 = arith.constant 0.000000e+00 : f32
    %119 = vector.broadcast %cst_58 : f32 to vector<16x8xf32>
    %120 = arith.cmpf oge, %118, %119 : vector<16x8xf32>
    %121 = vector.broadcast %41 : vector<16x1xf32> to vector<16x8xf32>
    %122 = arith.mulf %121, %118 : vector<16x8xf32>
    %123 = arith.select %120, %118, %122 : vector<16x8xi1>, vector<16x8xf32>
    %124 = arith.truncf %123 : vector<16x8xf32> to vector<16x8xbf16>
    %c0_59 = arith.constant 0 : index
    %c226 = arith.constant 226 : index
    %125 = vector.load %arg16[%c0_59, %c226] : memref<16x384xbf16, #tpu.memory_space<vmem>>, vector<16x8xbf16>
    tpu.vector_store %arg16[%c0_59, %c226], %124 {strides = array<i32>} : memref<16x384xbf16, #tpu.memory_space<vmem>>, vector<16x8xbf16>,
    %126 = vector.extract_strided_slice %35 {offsets = [0, 110], sizes = [16, 8], strides = [1, 1]} : vector<16x144xf32> to vector<16x8xf32>
    %127 = vector.extract_strided_slice %39 {offsets = [0, 56], sizes = [16, 8], strides = [1, 1]} : vector<16x64xf32> to vector<16x8xf32>
    %128 = arith.addf %126, %127 : vector<16x8xf32>
    %129 = vector.broadcast %40 : vector<16x1xf32> to vector<16x8xf32>
    %130 = arith.addf %128, %129 : vector<16x8xf32>
    %cst_60 = arith.constant 0.000000e+00 : f32
    %131 = vector.broadcast %cst_60 : f32 to vector<16x8xf32>
    %132 = arith.cmpf oge, %130, %131 : vector<16x8xf32>
    %133 = vector.broadcast %41 : vector<16x1xf32> to vector<16x8xf32>
    %134 = arith.mulf %133, %130 : vector<16x8xf32>
    %135 = arith.select %132, %130, %134 : vector<16x8xi1>, vector<16x8xf32>
    %136 = arith.truncf %135 : vector<16x8xf32> to vector<16x8xbf16>
    %c0_61 = arith.constant 0 : index
    %c238 = arith.constant 238 : index
    %137 = vector.load %arg16[%c0_61, %c238] : memref<16x384xbf16, #tpu.memory_space<vmem>>, vector<16x8xbf16>
    tpu.vector_store %arg16[%c0_61, %c238], %136 {strides = array<i32>} : memref<16x384xbf16, #tpu.memory_space<vmem>>, vector<16x8xbf16>,
    %c0_62 = arith.constant 0 : index
    %c115_63 = arith.constant 115 : index
    %138 = vector.load %arg16[%c0_62, %c115_63] : memref<16x384xbf16, #tpu.memory_space<vmem>>, vector<16x144xbf16>
    %c0_64 = arith.constant 0 : index
    %c116_65 = arith.constant 116 : index
    %139 = vector.load %arg16[%c0_64, %c116_65] : memref<16x384xbf16, #tpu.memory_space<vmem>>, vector<16x144xbf16>
    %c0_66 = arith.constant 0 : index
    %c117_67 = arith.constant 117 : index
    %140 = vector.load %arg16[%c0_66, %c117_67] : memref<16x384xbf16, #tpu.memory_space<vmem>>, vector<16x144xbf16>
    %c0_68 = arith.constant 0 : index
    %c127_69 = arith.constant 127 : index
    %141 = vector.load %arg16[%c0_68, %c127_69] : memref<16x384xbf16, #tpu.memory_space<vmem>>, vector<16x144xbf16>
    %c0_70 = arith.constant 0 : index
    %c128_71 = arith.constant 128 : index
    %142 = vector.load %arg16[%c0_70, %c128_71] : memref<16x384xbf16, #tpu.memory_space<vmem>>, vector<16x144xbf16>
    %c0_72 = arith.constant 0 : index
    %c129_73 = arith.constant 129 : index
    %143 = vector.load %arg16[%c0_72, %c129_73] : memref<16x384xbf16, #tpu.memory_space<vmem>>, vector<16x144xbf16>
    %c0_74 = arith.constant 0 : index
    %c139_75 = arith.constant 139 : index
    %144 = vector.load %arg16[%c0_74, %c139_75] : memref<16x384xbf16, #tpu.memory_space<vmem>>, vector<16x144xbf16>
    %c0_76 = arith.constant 0 : index
    %c140_77 = arith.constant 140 : index
    %145 = vector.load %arg16[%c0_76, %c140_77] : memref<16x384xbf16, #tpu.memory_space<vmem>>, vector<16x144xbf16>
    %c0_78 = arith.constant 0 : index
    %c141_79 = arith.constant 141 : index
    %146 = vector.load %arg16[%c0_78, %c141_79] : memref<16x384xbf16, #tpu.memory_space<vmem>>, vector<16x144xbf16>
    %147 = tpu.concatenate %138, %139, %140, %141, %142, %143, %144, %145, %146 in 0 : vector<16x144xbf16>, vector<16x144xbf16>, vector<16x144xbf16>, vector<16x144xbf16>, vector<16x144xbf16>, vector<16x144xbf16>, vector<16x144xbf16>, vector<16x144xbf16>, vector<16x144xbf16> -> vector<144x144xbf16>
    %c0_80 = arith.constant 0 : index
    %c0_81 = arith.constant 0 : index
    %148 = vector.load %arg9[%c0_80, %c0_81] : memref<16x144xbf16, #tpu.memory_space<vmem>>, vector<16x144xbf16>
    %cst_82 = arith.constant dense<0.000000e+00> : vector<16x144xf32>
    %149 = tpu.matmul %148, %147, %cst_82 {dimension_numbers = #tpu.dot_dimension_numbers<[1], [0], [0], [1], [0, 0, 1, 1], [], []>} : vector<16x144xbf16>, vector<144x144xbf16>, vector<16x144xf32> -> vector<16x144xf32>
    %c0_83 = arith.constant 0 : index
    %c0_84 = arith.constant 0 : index
    %150 = vector.load %arg10[%c0_83, %c0_84] : memref<16x1xf32, #tpu.memory_space<vmem>>, vector<16x1xf32>
    %151 = vector.broadcast %150 : vector<16x1xf32> to vector<16x144xf32>
    %152 = arith.addf %149, %151 : vector<16x144xf32>
    %cst_85 = arith.constant 0.000000e+00 : f32
    %153 = vector.broadcast %cst_85 : f32 to vector<16x144xf32>
    %154 = arith.cmpf oge, %152, %153 : vector<16x144xf32>
    %c0_86 = arith.constant 0 : index
    %c0_87 = arith.constant 0 : index
    %155 = vector.load %arg11[%c0_86, %c0_87] : memref<1x1xf32, #tpu.memory_space<vmem>>, vector<1x1xf32>
    %156 = vector.broadcast %155 : vector<1x1xf32> to vector<16x144xf32>
    %157 = arith.mulf %156, %152 : vector<16x144xf32>
    %158 = arith.select %154, %152, %157 : vector<16x144xi1>, vector<16x144xf32>
    %c0_88 = arith.constant 0 : index
    %c0_89 = arith.constant 0 : index
    %159 = vector.load %arg12[%c0_88, %c0_89] : memref<1x16xbf16, #tpu.memory_space<vmem>>, vector<1x16xbf16>
    %160 = arith.truncf %158 : vector<16x144xf32> to vector<16x144xbf16>
    %cst_90 = arith.constant dense<0.000000e+00> : vector<1x144xf32>
    %161 = tpu.matmul %159, %160, %cst_90 {dimension_numbers = #tpu.dot_dimension_numbers<[1], [0], [0], [1], [0, 0, 1, 1], [], []>} : vector<1x16xbf16>, vector<16x144xbf16>, vector<1x144xf32> -> vector<1x144xf32>
    %162 = vector.extract_strided_slice %161 {offsets = [0, 0], sizes = [1, 12], strides = [1, 1]} : vector<1x144xf32> to vector<1x12xf32>
    %163 = vector.extract_strided_slice %161 {offsets = [0, 12], sizes = [1, 12], strides = [1, 1]} : vector<1x144xf32> to vector<1x12xf32>
    %164 = vector.extract_strided_slice %161 {offsets = [0, 24], sizes = [1, 12], strides = [1, 1]} : vector<1x144xf32> to vector<1x12xf32>
    %165 = vector.extract_strided_slice %161 {offsets = [0, 36], sizes = [1, 12], strides = [1, 1]} : vector<1x144xf32> to vector<1x12xf32>
    %166 = vector.extract_strided_slice %161 {offsets = [0, 48], sizes = [1, 12], strides = [1, 1]} : vector<1x144xf32> to vector<1x12xf32>
    %167 = vector.extract_strided_slice %161 {offsets = [0, 60], sizes = [1, 12], strides = [1, 1]} : vector<1x144xf32> to vector<1x12xf32>
    %168 = vector.extract_strided_slice %161 {offsets = [0, 72], sizes = [1, 12], strides = [1, 1]} : vector<1x144xf32> to vector<1x12xf32>
    %169 = vector.extract_strided_slice %161 {offsets = [0, 84], sizes = [1, 12], strides = [1, 1]} : vector<1x144xf32> to vector<1x12xf32>
    %170 = vector.extract_strided_slice %161 {offsets = [0, 96], sizes = [1, 12], strides = [1, 1]} : vector<1x144xf32> to vector<1x12xf32>
    %171 = vector.extract_strided_slice %161 {offsets = [0, 108], sizes = [1, 12], strides = [1, 1]} : vector<1x144xf32> to vector<1x12xf32>
    %172 = vector.extract_strided_slice %161 {offsets = [0, 120], sizes = [1, 12], strides = [1, 1]} : vector<1x144xf32> to vector<1x12xf32>
    %173 = vector.extract_strided_slice %161 {offsets = [0, 132], sizes = [1, 12], strides = [1, 1]} : vector<1x144xf32> to vector<1x12xf32>
    %174 = tpu.concatenate %162, %163, %164, %165, %166, %167, %168, %169, %170, %171, %172, %173 in 0 : vector<1x12xf32>, vector<1x12xf32>, vector<1x12xf32>, vector<1x12xf32>, vector<1x12xf32>, vector<1x12xf32>, vector<1x12xf32>, vector<1x12xf32>, vector<1x12xf32>, vector<1x12xf32>, vector<1x12xf32>, vector<1x12xf32> -> vector<12x12xf32>
    %c0_91 = arith.constant 0 : index
    %c0_92 = arith.constant 0 : index
    %175 = vector.load %arg13[%c0_91, %c0_92] : memref<64x12xbf16, #tpu.memory_space<vmem>>, vector<64x12xbf16>
    %176 = arith.truncf %174 : vector<12x12xf32> to vector<12x12xbf16>
    %cst_93 = arith.constant dense<0.000000e+00> : vector<64x12xf32>
    %177 = tpu.matmul %175, %176, %cst_93 {dimension_numbers = #tpu.dot_dimension_numbers<[1], [0], [0], [1], [0, 0, 1, 1], [], []>} : vector<64x12xbf16>, vector<12x12xbf16>, vector<64x12xf32> -> vector<64x12xf32>
    %178 = arith.truncf %177 : vector<64x12xf32> to vector<64x12xbf16>
    %c0_94 = arith.constant 0 : index
    %c0_95 = arith.constant 0 : index
    %179 = vector.load %arg14[%c0_94, %c0_95] : memref<12x128xbf16, #tpu.memory_space<vmem>>, vector<12x128xbf16>
    %cst_96 = arith.constant dense<0.000000e+00> : vector<64x128xf32>
    %180 = tpu.matmul %178, %179, %cst_96 {dimension_numbers = #tpu.dot_dimension_numbers<[1], [0], [0], [1], [0, 0, 1, 1], [], []>} : vector<64x12xbf16>, vector<12x128xbf16>, vector<64x128xf32> -> vector<64x128xf32>
    %181 = arith.negf %180 : vector<64x128xf32>
    %182 = math.exp %181 : vector<64x128xf32>
    %cst_97 = arith.constant 1.000000e+00 : f32
    %183 = vector.broadcast %cst_97 : f32 to vector<64x128xf32>
    %184 = arith.addf %183, %182 : vector<64x128xf32>
    %185 = arith.divf %183, %184 : vector<64x128xf32>
    %c0_98 = arith.constant 0 : index
    %c0_99 = arith.constant 0 : index
    %c0_100 = arith.constant 0 : index
    %186 = vector.load %arg15[%c0_98, %c0_99, %c0_100] : memref<1x64x128xf32, #tpu.memory_space<vmem>>, vector<1x64x128xf32>
    %187 = vector.shape_cast %186 : vector<1x64x128xf32> to vector<64x128xf32>
    %188 = vector.shape_cast %185 : vector<64x128xf32> to vector<1x64x128xf32>
    tpu.vector_store %arg15[%c0_98, %c0_99, %c0_100], %188 {strides = array<i32>} : memref<1x64x128xf32, #tpu.memory_space<vmem>>, vector<1x64x128xf32>,
    return
  }
  func.func @transform_0(%arg0: i32) -> (i32, i32, i32) {
    %c0_i32 = arith.constant 0 : i32
    %c0_i32_0 = arith.constant 0 : i32
    %c0_i32_1 = arith.constant 0 : i32
    return %arg0, %c0_i32, %c0_i32_0 : i32, i32, i32
  }
  func.func @transform_1(%arg0: i32) -> (i32, i32, i32) {
    %c0_i32 = arith.constant 0 : i32
    %c0_i32_0 = arith.constant 0 : i32
    %c0_i32_1 = arith.constant 0 : i32
    return %arg0, %c0_i32, %c0_i32_0 : i32, i32, i32
  }
  func.func @transform_2(%arg0: i32) -> (i32, i32) {
    %c0_i32 = arith.constant 0 : i32
    %c0_i32_0 = arith.constant 0 : i32
    %c0_i32_1 = arith.constant 0 : i32
    return %c0_i32, %c0_i32_0 : i32, i32
  }
  func.func @transform_3(%arg0: i32) -> (i32, i32) {
    %c0_i32 = arith.constant 0 : i32
    %c0_i32_0 = arith.constant 0 : i32
    %c0_i32_1 = arith.constant 0 : i32
    return %c0_i32, %c0_i32_0 : i32, i32
  }
  func.func @transform_4(%arg0: i32) -> (i32, i32) {
    %c0_i32 = arith.constant 0 : i32
    %c0_i32_0 = arith.constant 0 : i32
    %c0_i32_1 = arith.constant 0 : i32
    return %c0_i32, %c0_i32_0 : i32, i32
  }
  func.func @transform_5(%arg0: i32) -> (i32, i32) {
    %c0_i32 = arith.constant 0 : i32
    %c0_i32_0 = arith.constant 0 : i32
    %c0_i32_1 = arith.constant 0 : i32
    return %c0_i32, %c0_i32_0 : i32, i32
  }
  func.func @transform_6(%arg0: i32) -> (i32, i32) {
    %c0_i32 = arith.constant 0 : i32
    %c0_i32_0 = arith.constant 0 : i32
    %c0_i32_1 = arith.constant 0 : i32
    return %c0_i32, %c0_i32_0 : i32, i32
  }
  func.func @transform_7(%arg0: i32) -> (i32, i32) {
    %c0_i32 = arith.constant 0 : i32
    %c0_i32_0 = arith.constant 0 : i32
    %c0_i32_1 = arith.constant 0 : i32
    return %c0_i32, %c0_i32_0 : i32, i32
  }
  func.func @transform_8(%arg0: i32) -> (i32, i32) {
    %c0_i32 = arith.constant 0 : i32
    %c0_i32_0 = arith.constant 0 : i32
    %c0_i32_1 = arith.constant 0 : i32
    return %c0_i32, %c0_i32_0 : i32, i32
  }
  func.func @transform_9(%arg0: i32) -> (i32, i32) {
    %c0_i32 = arith.constant 0 : i32
    %c0_i32_0 = arith.constant 0 : i32
    %c0_i32_1 = arith.constant 0 : i32
    return %c0_i32, %c0_i32_0 : i32, i32
  }
  func.func @transform_10(%arg0: i32) -> (i32, i32) {
    %c0_i32 = arith.constant 0 : i32
    %c0_i32_0 = arith.constant 0 : i32
    %c0_i32_1 = arith.constant 0 : i32
    return %c0_i32, %c0_i32_0 : i32, i32
  }
  func.func @transform_11(%arg0: i32) -> (i32, i32) {
    %c0_i32 = arith.constant 0 : i32
    %c0_i32_0 = arith.constant 0 : i32
    %c0_i32_1 = arith.constant 0 : i32
    return %c0_i32, %c0_i32_0 : i32, i32
  }
  func.func @transform_12(%arg0: i32) -> (i32, i32) {
    %c0_i32 = arith.constant 0 : i32
    %c0_i32_0 = arith.constant 0 : i32
    %c0_i32_1 = arith.constant 0 : i32
    return %c0_i32, %c0_i32_0 : i32, i32
  }
  func.func @transform_13(%arg0: i32) -> (i32, i32) {
    %c0_i32 = arith.constant 0 : i32
    %c0_i32_0 = arith.constant 0 : i32
    %c0_i32_1 = arith.constant 0 : i32
    return %c0_i32, %c0_i32_0 : i32, i32
  }
  func.func @transform_14(%arg0: i32) -> (i32, i32, i32) {
    %c0_i32 = arith.constant 0 : i32
    %c0_i32_0 = arith.constant 0 : i32
    %c0_i32_1 = arith.constant 0 : i32
    return %arg0, %c0_i32, %c0_i32_0 : i32, i32, i32
  }
}

module attributes {stable_mosaic.version = 11 : i64} {
  func.func @_mambanet2_head_kernel(%arg0: i32, %arg1: memref<1x32x16xbf16, #tpu.memory_space<vmem>>, %arg2: memref<1x32x64xbf16, #tpu.memory_space<vmem>>, %arg3: memref<16x32xbf16, #tpu.memory_space<vmem>>, %arg4: memref<16x144xbf16, #tpu.memory_space<vmem>>, %arg5: memref<16x144xbf16, #tpu.memory_space<vmem>>, %arg6: memref<16x32xbf16, #tpu.memory_space<vmem>>, %arg7: memref<16x1xf32, #tpu.memory_space<vmem>>, %arg8: memref<16x1xf32, #tpu.memory_space<vmem>>, %arg9: memref<16x144xbf16, #tpu.memory_space<vmem>>, %arg10: memref<16x1xf32, #tpu.memory_space<vmem>>, %arg11: memref<1x1xf32, #tpu.memory_space<vmem>>, %arg12: memref<1x16xbf16, #tpu.memory_space<vmem>>, %arg13: memref<64x12xbf16, #tpu.memory_space<vmem>>, %arg14: memref<12x128xbf16, #tpu.memory_space<vmem>>, %arg15: memref<1x64x128xf32, #tpu.memory_space<vmem>>, %arg16: memref<16x384xbf16, #tpu.memory_space<vmem>>) attributes {dimension_semantics = [#tpu.dimension_semantics<parallel>], iteration_bounds = array<i64: 2>, scalar_prefetch = 0 : i64, scratch_operands = 1 : i64, tpu.core_type = #tpu.core_type<tc>, window_params = [{transform_indices = @transform_0, window_bounds = array<i64: 1, 32, 16>}, {transform_indices = @transform_1, window_bounds = array<i64: 1, 32, 64>}, {pipeline_mode = #tpu.pipeline_mode<synchronous>, transform_indices = @transform_2, window_bounds = array<i64: 16, 32>}, {pipeline_mode = #tpu.pipeline_mode<synchronous>, transform_indices = @transform_3, window_bounds = array<i64: 16, 144>}, {pipeline_mode = #tpu.pipeline_mode<synchronous>, transform_indices = @transform_4, window_bounds = array<i64: 16, 144>}, {pipeline_mode = #tpu.pipeline_mode<synchronous>, transform_indices = @transform_5, window_bounds = array<i64: 16, 32>}, {pipeline_mode = #tpu.pipeline_mode<synchronous>, transform_indices = @transform_6, window_bounds = array<i64: 16, 1>}, {pipeline_mode = #tpu.pipeline_mode<synchronous>, transform_indices = @transform_7, window_bounds = array<i64: 16, 1>}, {pipeline_mode = #tpu.pipeline_mode<synchronous>, transform_indices = @transform_8, window_bounds = array<i64: 16, 144>}, {pipeline_mode = #tpu.pipeline_mode<synchronous>, transform_indices = @transform_9, window_bounds = array<i64: 16, 1>}, {pipeline_mode = #tpu.pipeline_mode<synchronous>, transform_indices = @transform_10, window_bounds = array<i64: 1, 1>}, {pipeline_mode = #tpu.pipeline_mode<synchronous>, transform_indices = @transform_11, window_bounds = array<i64: 1, 16>}, {pipeline_mode = #tpu.pipeline_mode<synchronous>, transform_indices = @transform_12, window_bounds = array<i64: 64, 12>}, {pipeline_mode = #tpu.pipeline_mode<synchronous>, transform_indices = @transform_13, window_bounds = array<i64: 12, 128>}, {transform_indices = @transform_14, window_bounds = array<i64: 1, 64, 128>}]} {
    %cst = arith.constant 0.000000e+00 : bf16
    %0 = vector.broadcast %cst : bf16 to vector<16x128xbf16>
    %c0 = arith.constant 0 : index
    %c0_0 = arith.constant 0 : index
    %1 = vector.load %arg16[%c0, %c0_0] : memref<16x384xbf16, #tpu.memory_space<vmem>>, vector<16x128xbf16>
    tpu.vector_store %arg16[%c0, %c0_0], %0 {strides = array<i32>} : memref<16x384xbf16, #tpu.memory_space<vmem>>, vector<16x128xbf16>,
    %cst_1 = arith.constant 0.000000e+00 : bf16
    %2 = vector.broadcast %cst_1 : bf16 to vector<16x112xbf16>
    %c0_2 = arith.constant 0 : index
    %c272 = arith.constant 272 : index
    %3 = vector.load %arg16[%c0_2, %c272] : memref<16x384xbf16, #tpu.memory_space<vmem>>, vector<16x112xbf16>
    tpu.vector_store %arg16[%c0_2, %c272], %2 {strides = array<i32>} : memref<16x384xbf16, #tpu.memory_space<vmem>>, vector<16x112xbf16>,
    %c0_3 = arith.constant 0 : index
    %c0_4 = arith.constant 0 : index
    %4 = vector.load %arg3[%c0_3, %c0_4] : memref<16x32xbf16, #tpu.memory_space<vmem>>, vector<16x32xbf16>
    %c0_5 = arith.constant 0 : index
    %c0_6 = arith.constant 0 : index
    %c0_7 = arith.constant 0 : index
    %5 = vector.load %arg1[%c0_5, %c0_6, %c0_7] : memref<1x32x16xbf16, #tpu.memory_space<vmem>>, vector<1x32x16xbf16>
    %6 = vector.shape_cast %5 : vector<1x32x16xbf16> to vector<32x16xbf16>
    %cst_8 = arith.constant dense<0.000000e+00> : vector<16x16xf32>
    %7 = tpu.matmul %4, %6, %cst_8 {dimension_numbers = #tpu.dot_dimension_numbers<[1], [0], [0], [1], [0, 0, 1, 1], [], []>} : vector<16x32xbf16>, vector<32x16xbf16>, vector<16x16xf32> -> vector<16x16xf32>
    %8 = arith.truncf %7 : vector<16x16xf32> to vector<16x16xbf16>
    %c0_9 = arith.constant 0 : index
    %c0_10 = arith.constant 0 : index
    %9 = vector.load %arg4[%c0_9, %c0_10] : memref<16x144xbf16, #tpu.memory_space<vmem>>, vector<16x144xbf16>
    %cst_11 = arith.constant dense<0.000000e+00> : vector<16x144xf32>
    %10 = tpu.matmul %8, %9, %cst_11 {dimension_numbers = #tpu.dot_dimension_numbers<[1], [0], [0], [1], [0, 0, 1, 1], [], []>} : vector<16x16xbf16>, vector<16x144xbf16>, vector<16x144xf32> -> vector<16x144xf32>
    %11 = arith.truncf %10 : vector<16x144xf32> to vector<16x144xbf16>
    %c0_12 = arith.constant 0 : index
    %c128 = arith.constant 128 : index
    %12 = vector.load %arg16[%c0_12, %c128] : memref<16x384xbf16, #tpu.memory_space<vmem>>, vector<16x144xbf16>
    tpu.vector_store %arg16[%c0_12, %c128], %11 {strides = array<i32>} : memref<16x384xbf16, #tpu.memory_space<vmem>>, vector<16x144xbf16>,
    %c0_13 = arith.constant 0 : index
    %c115 = arith.constant 115 : index
    %13 = vector.load %arg16[%c0_13, %c115] : memref<16x384xbf16, #tpu.memory_space<vmem>>, vector<8x144xbf16>
    %c0_14 = arith.constant 0 : index
    %c116 = arith.constant 116 : index
    %14 = vector.load %arg16[%c0_14, %c116] : memref<16x384xbf16, #tpu.memory_space<vmem>>, vector<8x144xbf16>
    %c0_15 = arith.constant 0 : index
    %c117 = arith.constant 117 : index
    %15 = vector.load %arg16[%c0_15, %c117] : memref<16x384xbf16, #tpu.memory_space<vmem>>, vector<8x144xbf16>
    %c0_16 = arith.constant 0 : index
    %c127 = arith.constant 127 : index
    %16 = vector.load %arg16[%c0_16, %c127] : memref<16x384xbf16, #tpu.memory_space<vmem>>, vector<8x144xbf16>
    %c0_17 = arith.constant 0 : index
    %c128_18 = arith.constant 128 : index
    %17 = vector.load %arg16[%c0_17, %c128_18] : memref<16x384xbf16, #tpu.memory_space<vmem>>, vector<8x144xbf16>
    %c0_19 = arith.constant 0 : index
    %c129 = arith.constant 129 : index
    %18 = vector.load %arg16[%c0_19, %c129] : memref<16x384xbf16, #tpu.memory_space<vmem>>, vector<8x144xbf16>
    %c0_20 = arith.constant 0 : index
    %c139 = arith.constant 139 : index
    %19 = vector.load %arg16[%c0_20, %c139] : memref<16x384xbf16, #tpu.memory_space<vmem>>, vector<8x144xbf16>
    %c0_21 = arith.constant 0 : index
    %c140 = arith.constant 140 : index
    %20 = vector.load %arg16[%c0_21, %c140] : memref<16x384xbf16, #tpu.memory_space<vmem>>, vector<8x144xbf16>
    %c0_22 = arith.constant 0 : index
    %c141 = arith.constant 141 : index
    %21 = vector.load %arg16[%c0_22, %c141] : memref<16x384xbf16, #tpu.memory_space<vmem>>, vector<8x144xbf16>
    %c8 = arith.constant 8 : index
    %c102 = arith.constant 102 : index
    %22 = vector.load %arg16[%c8, %c102] : memref<16x384xbf16, #tpu.memory_space<vmem>>, vector<8x144xbf16>
    %c8_23 = arith.constant 8 : index
    %c104 = arith.constant 104 : index
    %23 = vector.load %arg16[%c8_23, %c104] : memref<16x384xbf16, #tpu.memory_space<vmem>>, vector<8x144xbf16>
    %c8_24 = arith.constant 8 : index
    %c106 = arith.constant 106 : index
    %24 = vector.load %arg16[%c8_24, %c106] : memref<16x384xbf16, #tpu.memory_space<vmem>>, vector<8x144xbf16>
    %c8_25 = arith.constant 8 : index
    %c126 = arith.constant 126 : index
    %25 = vector.load %arg16[%c8_25, %c126] : memref<16x384xbf16, #tpu.memory_space<vmem>>, vector<8x144xbf16>
    %c8_26 = arith.constant 8 : index
    %c128_27 = arith.constant 128 : index
    %26 = vector.load %arg16[%c8_26, %c128_27] : memref<16x384xbf16, #tpu.memory_space<vmem>>, vector<8x144xbf16>
    %c8_28 = arith.constant 8 : index
    %c130 = arith.constant 130 : index
    %27 = vector.load %arg16[%c8_28, %c130] : memref<16x384xbf16, #tpu.memory_space<vmem>>, vector<8x144xbf16>
    %c8_29 = arith.constant 8 : index
    %c150 = arith.constant 150 : index
    %28 = vector.load %arg16[%c8_29, %c150] : memref<16x384xbf16, #tpu.memory_space<vmem>>, vector<8x144xbf16>
    %c8_30 = arith.constant 8 : index
    %c152 = arith.constant 152 : index
    %29 = vector.load %arg16[%c8_30, %c152] : memref<16x384xbf16, #tpu.memory_space<vmem>>, vector<8x144xbf16>
    %c8_31 = arith.constant 8 : index
    %c154 = arith.constant 154 : index
    %30 = vector.load %arg16[%c8_31, %c154] : memref<16x384xbf16, #tpu.memory_space<vmem>>, vector<8x144xbf16>
    %31 = tpu.concatenate %13, %14, %15, %16, %17, %18, %19, %20, %21, %22, %23, %24, %25, %26, %27, %28 in 0 : vector<8x144xbf16>, vector<8x144xbf16>, vector<8x144xbf16>, vector<8x144xbf16>, vector<8x144xbf16>, vector<8x144xbf16>, vector<8x144xbf16>, vector<8x144xbf16>, vector<8x144xbf16>, vector<8x144xbf16>, vector<8x144xbf16>, vector<8x144xbf16>, vector<8x144xbf16>, vector<8x144xbf16>, vector<8x144xbf16>, vector<8x144xbf16> -> vector<128x144xbf16>
    %32 = tpu.concatenate %29, %30 in 0 : vector<8x144xbf16>, vector<8x144xbf16> -> vector<16x144xbf16>
    %33 = tpu.concatenate %31, %32 in 0 : vector<128x144xbf16>, vector<16x144xbf16> -> vector<144x144xbf16>
    %c0_32 = arith.constant 0 : index
    %c0_33 = arith.constant 0 : index
    %34 = vector.load %arg5[%c0_32, %c0_33] : memref<16x144xbf16, #tpu.memory_space<vmem>>, vector<16x144xbf16>
    %cst_34 = arith.constant dense<0.000000e+00> : vector<16x144xf32>
    %35 = tpu.matmul %34, %33, %cst_34 {dimension_numbers = #tpu.dot_dimension_numbers<[1], [0], [0], [1], [0, 0, 1, 1], [], []>} : vector<16x144xbf16>, vector<144x144xbf16>, vector<16x144xf32> -> vector<16x144xf32>
    %c0_35 = arith.constant 0 : index
    %c0_36 = arith.constant 0 : index
    %36 = vector.load %arg6[%c0_35, %c0_36] : memref<16x32xbf16, #tpu.memory_space<vmem>>, vector<16x32xbf16>
    %c0_37 = arith.constant 0 : index
    %c0_38 = arith.constant 0 : index
    %c0_39 = arith.constant 0 : index
    %37 = vector.load %arg2[%c0_37, %c0_38, %c0_39] : memref<1x32x64xbf16, #tpu.memory_space<vmem>>, vector<1x32x64xbf16>
    %38 = vector.shape_cast %37 : vector<1x32x64xbf16> to vector<32x64xbf16>
    %cst_40 = arith.constant dense<0.000000e+00> : vector<16x64xf32>
    %39 = tpu.matmul %36, %38, %cst_40 {dimension_numbers = #tpu.dot_dimension_numbers<[1], [0], [0], [1], [0, 0, 1, 1], [], []>} : vector<16x32xbf16>, vector<32x64xbf16>, vector<16x64xf32> -> vector<16x64xf32>
    %c0_41 = arith.constant 0 : index
    %c0_42 = arith.constant 0 : index
    %40 = vector.load %arg7[%c0_41, %c0_42] : memref<16x1xf32, #tpu.memory_space<vmem>>, vector<16x1xf32>
    %c0_43 = arith.constant 0 : index
    %c0_44 = arith.constant 0 : index
    %41 = vector.load %arg8[%c0_43, %c0_44] : memref<16x1xf32, #tpu.memory_space<vmem>>, vector<16x1xf32>
    %42 = vector.extract_strided_slice %35 {offsets = [0, 26], sizes = [16, 8], strides = [1, 1]} : vector<16x144xf32> to vector<16x8xf32>
    %43 = vector.extract_strided_slice %39 {offsets = [0, 0], sizes = [16, 8], strides = [1, 1]} : vector<16x64xf32> to vector<16x8xf32>
    %44 = arith.addf %42, %43 : vector<16x8xf32>
    %45 = vector.broadcast %40 : vector<16x1xf32> to vector<16x8xf32>
    %46 = arith.addf %44, %45 : vector<16x8xf32>
    %cst_45 = arith.constant 0.000000e+00 : f32
    %47 = vector.broadcast %cst_45 : f32 to vector<16x8xf32>
    %48 = arith.cmpf oge, %46, %47 : vector<16x8xf32>
    %49 = vector.broadcast %41 : vector<16x1xf32> to vector<16x8xf32>
    %50 = arith.mulf %49, %46 : vector<16x8xf32>
    %51 = arith.select %48, %46, %50 : vector<16x8xi1>, vector<16x8xf32>
    %52 = arith.truncf %51 : vector<16x8xf32> to vector<16x8xbf16>
    %c0_46 = arith.constant 0 : index
    %c154_47 = arith.constant 154 : index
    %53 = vector.load %arg16[%c0_46, %c154_47] : memref<16x384xbf16, #tpu.memory_space<vmem>>, vector<16x8xbf16>
    tpu.vector_store %arg16[%c0_46, %c154_47], %52 {strides = array<i32>} : memref<16x384xbf16, #tpu.memory_space<vmem>>, vector<16x8xbf16>,
    %54 = vector.extract_strided_slice %35 {offsets = [0, 38], sizes = [16, 8], strides = [1, 1]} : vector<16x144xf32> to vector<16x8xf32>
    %55 = vector.extract_strided_slice %39 {offsets = [0, 8], sizes = [16, 8], strides = [1, 1]} : vector<16x64xf32> to vector<16x8xf32>
    %56 = arith.addf %54, %55 : vector<16x8xf32>
    %57 = vector.broadcast %40 : vector<16x1xf32> to vector<16x8xf32>
    %58 = arith.addf %56, %57 : vector<16x8xf32>
    %cst_48 = arith.constant 0.000000e+00 : f32
    %59 = vector.broadcast %cst_48 : f32 to vector<16x8xf32>
    %60 = arith.cmpf oge, %58, %59 : vector<16x8xf32>
    %61 = vector.broadcast %41 : vector<16x1xf32> to vector<16x8xf32>
    %62 = arith.mulf %61, %58 : vector<16x8xf32>
    %63 = arith.select %60, %58, %62 : vector<16x8xi1>, vector<16x8xf32>
    %64 = arith.truncf %63 : vector<16x8xf32> to vector<16x8xbf16>
    %c0_49 = arith.constant 0 : index
    %c166 = arith.constant 166 : index
    %65 = vector.load %arg16[%c0_49, %c166] : memref<16x384xbf16, #tpu.memory_space<vmem>>, vector<16x8xbf16>
    tpu.vector_store %arg16[%c0_49, %c166], %64 {strides = array<i32>} : memref<16x384xbf16, #tpu.memory_space<vmem>>, vector<16x8xbf16>,
    %66 = vector.extract_strided_slice %35 {offsets = [0, 50], sizes = [16, 8], strides = [1, 1]} : vector<16x144xf32> to vector<16x8xf32>
    %67 = vector.extract_strided_slice %39 {offsets = [0, 16], sizes = [16, 8], strides = [1, 1]} : vector<16x64xf32> to vector<16x8xf32>
    %68 = arith.addf %66, %67 : vector<16x8xf32>
    %69 = vector.broadcast %40 : vector<16x1xf32> to vector<16x8xf32>
    %70 = arith.addf %68, %69 : vector<16x8xf32>
    %cst_50 = arith.constant 0.000000e+00 : f32
    %71 = vector.broadcast %cst_50 : f32 to vector<16x8xf32>
    %72 = arith.cmpf oge, %70, %71 : vector<16x8xf32>
    %73 = vector.broadcast %41 : vector<16x1xf32> to vector<16x8xf32>
    %74 = arith.mulf %73, %70 : vector<16x8xf32>
    %75 = arith.select %72, %70, %74 : vector<16x8xi1>, vector<16x8xf32>
    %76 = arith.truncf %75 : vector<16x8xf32> to vector<16x8xbf16>
    %c0_51 = arith.constant 0 : index
    %c178 = arith.constant 178 : index
    %77 = vector.load %arg16[%c0_51, %c178] : memref<16x384xbf16, #tpu.memory_space<vmem>>, vector<16x8xbf16>
    tpu.vector_store %arg16[%c0_51, %c178], %76 {strides = array<i32>} : memref<16x384xbf16, #tpu.memory_space<vmem>>, vector<16x8xbf16>,
    %78 = vector.extract_strided_slice %35 {offsets = [0, 62], sizes = [16, 8], strides = [1, 1]} : vector<16x144xf32> to vector<16x8xf32>
    %79 = vector.extract_strided_slice %39 {offsets = [0, 24], sizes = [16, 8], strides = [1, 1]} : vector<16x64xf32> to vector<16x8xf32>
    %80 = arith.addf %78, %79 : vector<16x8xf32>
    %81 = vector.broadcast %40 : vector<16x1xf32> to vector<16x8xf32>
    %82 = arith.addf %80, %81 : vector<16x8xf32>
    %cst_52 = arith.constant 0.000000e+00 : f32
    %83 = vector.broadcast %cst_52 : f32 to vector<16x8xf32>
    %84 = arith.cmpf oge, %82, %83 : vector<16x8xf32>
    %85 = vector.broadcast %41 : vector<16x1xf32> to vector<16x8xf32>
    %86 = arith.mulf %85, %82 : vector<16x8xf32>
    %87 = arith.select %84, %82, %86 : vector<16x8xi1>, vector<16x8xf32>
    %88 = arith.truncf %87 : vector<16x8xf32> to vector<16x8xbf16>
    %c0_53 = arith.constant 0 : index
    %c190 = arith.constant 190 : index
    %89 = vector.load %arg16[%c0_53, %c190] : memref<16x384xbf16, #tpu.memory_space<vmem>>, vector<16x8xbf16>
    tpu.vector_store %arg16[%c0_53, %c190], %88 {strides = array<i32>} : memref<16x384xbf16, #tpu.memory_space<vmem>>, vector<16x8xbf16>,
    %90 = vector.extract_strided_slice %35 {offsets = [0, 74], sizes = [16, 8], strides = [1, 1]} : vector<16x144xf32> to vector<16x8xf32>
    %91 = vector.extract_strided_slice %39 {offsets = [0, 32], sizes = [16, 8], strides = [1, 1]} : vector<16x64xf32> to vector<16x8xf32>
    %92 = arith.addf %90, %91 : vector<16x8xf32>
    %93 = vector.broadcast %40 : vector<16x1xf32> to vector<16x8xf32>
    %94 = arith.addf %92, %93 : vector<16x8xf32>
    %cst_54 = arith.constant 0.000000e+00 : f32
    %95 = vector.broadcast %cst_54 : f32 to vector<16x8xf32>
    %96 = arith.cmpf oge, %94, %95 : vector<16x8xf32>
    %97 = vector.broadcast %41 : vector<16x1xf32> to vector<16x8xf32>
    %98 = arith.mulf %97, %94 : vector<16x8xf32>
    %99 = arith.select %96, %94, %98 : vector<16x8xi1>, vector<16x8xf32>
    %100 = arith.truncf %99 : vector<16x8xf32> to vector<16x8xbf16>
    %c0_55 = arith.constant 0 : index
    %c202 = arith.constant 202 : index
    %101 = vector.load %arg16[%c0_55, %c202] : memref<16x384xbf16, #tpu.memory_space<vmem>>, vector<16x8xbf16>
    tpu.vector_store %arg16[%c0_55, %c202], %100 {strides = array<i32>} : memref<16x384xbf16, #tpu.memory_space<vmem>>, vector<16x8xbf16>,
    %102 = vector.extract_strided_slice %35 {offsets = [0, 86], sizes = [16, 8], strides = [1, 1]} : vector<16x144xf32> to vector<16x8xf32>
    %103 = vector.extract_strided_slice %39 {offsets = [0, 40], sizes = [16, 8], strides = [1, 1]} : vector<16x64xf32> to vector<16x8xf32>
    %104 = arith.addf %102, %103 : vector<16x8xf32>
    %105 = vector.broadcast %40 : vector<16x1xf32> to vector<16x8xf32>
    %106 = arith.addf %104, %105 : vector<16x8xf32>
    %cst_56 = arith.constant 0.000000e+00 : f32
    %107 = vector.broadcast %cst_56 : f32 to vector<16x8xf32>
    %108 = arith.cmpf oge, %106, %107 : vector<16x8xf32>
    %109 = vector.broadcast %41 : vector<16x1xf32> to vector<16x8xf32>
    %110 = arith.mulf %109, %106 : vector<16x8xf32>
    %111 = arith.select %108, %106, %110 : vector<16x8xi1>, vector<16x8xf32>
    %112 = arith.truncf %111 : vector<16x8xf32> to vector<16x8xbf16>
    %c0_57 = arith.constant 0 : index
    %c214 = arith.constant 214 : index
    %113 = vector.load %arg16[%c0_57, %c214] : memref<16x384xbf16, #tpu.memory_space<vmem>>, vector<16x8xbf16>
    tpu.vector_store %arg16[%c0_57, %c214], %112 {strides = array<i32>} : memref<16x384xbf16, #tpu.memory_space<vmem>>, vector<16x8xbf16>,
    %114 = vector.extract_strided_slice %35 {offsets = [0, 98], sizes = [16, 8], strides = [1, 1]} : vector<16x144xf32> to vector<16x8xf32>
    %115 = vector.extract_strided_slice %39 {offsets = [0, 48], sizes = [16, 8], strides = [1, 1]} : vector<16x64xf32> to vector<16x8xf32>
    %116 = arith.addf %114, %115 : vector<16x8xf32>
    %117 = vector.broadcast %40 : vector<16x1xf32> to vector<16x8xf32>
    %118 = arith.addf %116, %117 : vector<16x8xf32>
    %cst_58 = arith.constant 0.000000e+00 : f32
    %119 = vector.broadcast %cst_58 : f32 to vector<16x8xf32>
    %120 = arith.cmpf oge, %118, %119 : vector<16x8xf32>
    %121 = vector.broadcast %41 : vector<16x1xf32> to vector<16x8xf32>
    %122 = arith.mulf %121, %118 : vector<16x8xf32>
    %123 = arith.select %120, %118, %122 : vector<16x8xi1>, vector<16x8xf32>
    %124 = arith.truncf %123 : vector<16x8xf32> to vector<16x8xbf16>
    %c0_59 = arith.constant 0 : index
    %c226 = arith.constant 226 : index
    %125 = vector.load %arg16[%c0_59, %c226] : memref<16x384xbf16, #tpu.memory_space<vmem>>, vector<16x8xbf16>
    tpu.vector_store %arg16[%c0_59, %c226], %124 {strides = array<i32>} : memref<16x384xbf16, #tpu.memory_space<vmem>>, vector<16x8xbf16>,
    %126 = vector.extract_strided_slice %35 {offsets = [0, 110], sizes = [16, 8], strides = [1, 1]} : vector<16x144xf32> to vector<16x8xf32>
    %127 = vector.extract_strided_slice %39 {offsets = [0, 56], sizes = [16, 8], strides = [1, 1]} : vector<16x64xf32> to vector<16x8xf32>
    %128 = arith.addf %126, %127 : vector<16x8xf32>
    %129 = vector.broadcast %40 : vector<16x1xf32> to vector<16x8xf32>
    %130 = arith.addf %128, %129 : vector<16x8xf32>
    %cst_60 = arith.constant 0.000000e+00 : f32
    %131 = vector.broadcast %cst_60 : f32 to vector<16x8xf32>
    %132 = arith.cmpf oge, %130, %131 : vector<16x8xf32>
    %133 = vector.broadcast %41 : vector<16x1xf32> to vector<16x8xf32>
    %134 = arith.mulf %133, %130 : vector<16x8xf32>
    %135 = arith.select %132, %130, %134 : vector<16x8xi1>, vector<16x8xf32>
    %136 = arith.truncf %135 : vector<16x8xf32> to vector<16x8xbf16>
    %c0_61 = arith.constant 0 : index
    %c238 = arith.constant 238 : index
    %137 = vector.load %arg16[%c0_61, %c238] : memref<16x384xbf16, #tpu.memory_space<vmem>>, vector<16x8xbf16>
    tpu.vector_store %arg16[%c0_61, %c238], %136 {strides = array<i32>} : memref<16x384xbf16, #tpu.memory_space<vmem>>, vector<16x8xbf16>,
    %c0_62 = arith.constant 0 : index
    %c115_63 = arith.constant 115 : index
    %138 = vector.load %arg16[%c0_62, %c115_63] : memref<16x384xbf16, #tpu.memory_space<vmem>>, vector<16x144xbf16>
    %c0_64 = arith.constant 0 : index
    %c116_65 = arith.constant 116 : index
    %139 = vector.load %arg16[%c0_64, %c116_65] : memref<16x384xbf16, #tpu.memory_space<vmem>>, vector<16x144xbf16>
    %c0_66 = arith.constant 0 : index
    %c117_67 = arith.constant 117 : index
    %140 = vector.load %arg16[%c0_66, %c117_67] : memref<16x384xbf16, #tpu.memory_space<vmem>>, vector<16x144xbf16>
    %c0_68 = arith.constant 0 : index
    %c127_69 = arith.constant 127 : index
    %141 = vector.load %arg16[%c0_68, %c127_69] : memref<16x384xbf16, #tpu.memory_space<vmem>>, vector<16x144xbf16>
    %c0_70 = arith.constant 0 : index
    %c128_71 = arith.constant 128 : index
    %142 = vector.load %arg16[%c0_70, %c128_71] : memref<16x384xbf16, #tpu.memory_space<vmem>>, vector<16x144xbf16>
    %c0_72 = arith.constant 0 : index
    %c129_73 = arith.constant 129 : index
    %143 = vector.load %arg16[%c0_72, %c129_73] : memref<16x384xbf16, #tpu.memory_space<vmem>>, vector<16x144xbf16>
    %c0_74 = arith.constant 0 : index
    %c139_75 = arith.constant 139 : index
    %144 = vector.load %arg16[%c0_74, %c139_75] : memref<16x384xbf16, #tpu.memory_space<vmem>>, vector<16x144xbf16>
    %c0_76 = arith.constant 0 : index
    %c140_77 = arith.constant 140 : index
    %145 = vector.load %arg16[%c0_76, %c140_77] : memref<16x384xbf16, #tpu.memory_space<vmem>>, vector<16x144xbf16>
    %c0_78 = arith.constant 0 : index
    %c141_79 = arith.constant 141 : index
    %146 = vector.load %arg16[%c0_78, %c141_79] : memref<16x384xbf16, #tpu.memory_space<vmem>>, vector<16x144xbf16>
    %147 = tpu.concatenate %138, %139, %140, %141, %142, %143, %144, %145, %146 in 0 : vector<16x144xbf16>, vector<16x144xbf16>, vector<16x144xbf16>, vector<16x144xbf16>, vector<16x144xbf16>, vector<16x144xbf16>, vector<16x144xbf16>, vector<16x144xbf16>, vector<16x144xbf16> -> vector<144x144xbf16>
    %c0_80 = arith.constant 0 : index
    %c0_81 = arith.constant 0 : index
    %148 = vector.load %arg9[%c0_80, %c0_81] : memref<16x144xbf16, #tpu.memory_space<vmem>>, vector<16x144xbf16>
    %cst_82 = arith.constant dense<0.000000e+00> : vector<16x144xf32>
    %149 = tpu.matmul %148, %147, %cst_82 {dimension_numbers = #tpu.dot_dimension_numbers<[1], [0], [0], [1], [0, 0, 1, 1], [], []>} : vector<16x144xbf16>, vector<144x144xbf16>, vector<16x144xf32> -> vector<16x144xf32>
    %c0_83 = arith.constant 0 : index
    %c0_84 = arith.constant 0 : index
    %150 = vector.load %arg10[%c0_83, %c0_84] : memref<16x1xf32, #tpu.memory_space<vmem>>, vector<16x1xf32>
    %151 = vector.broadcast %150 : vector<16x1xf32> to vector<16x144xf32>
    %152 = arith.addf %149, %151 : vector<16x144xf32>
    %cst_85 = arith.constant 0.000000e+00 : f32
    %153 = vector.broadcast %cst_85 : f32 to vector<16x144xf32>
    %154 = arith.cmpf oge, %152, %153 : vector<16x144xf32>
    %c0_86 = arith.constant 0 : index
    %c0_87 = arith.constant 0 : index
    %155 = vector.load %arg11[%c0_86, %c0_87] : memref<1x1xf32, #tpu.memory_space<vmem>>, vector<1x1xf32>
    %156 = vector.broadcast %155 : vector<1x1xf32> to vector<16x144xf32>
    %157 = arith.mulf %156, %152 : vector<16x144xf32>
    %158 = arith.select %154, %152, %157 : vector<16x144xi1>, vector<16x144xf32>
    %c0_88 = arith.constant 0 : index
    %c0_89 = arith.constant 0 : index
    %159 = vector.load %arg12[%c0_88, %c0_89] : memref<1x16xbf16, #tpu.memory_space<vmem>>, vector<1x16xbf16>
    %160 = arith.truncf %158 : vector<16x144xf32> to vector<16x144xbf16>
    %cst_90 = arith.constant dense<0.000000e+00> : vector<1x144xf32>
    %161 = tpu.matmul %159, %160, %cst_90 {dimension_numbers = #tpu.dot_dimension_numbers<[1], [0], [0], [1], [0, 0, 1, 1], [], []>} : vector<1x16xbf16>, vector<16x144xbf16>, vector<1x144xf32> -> vector<1x144xf32>
    %162 = vector.extract_strided_slice %161 {offsets = [0, 0], sizes = [1, 12], strides = [1, 1]} : vector<1x144xf32> to vector<1x12xf32>
    %163 = vector.extract_strided_slice %161 {offsets = [0, 12], sizes = [1, 12], strides = [1, 1]} : vector<1x144xf32> to vector<1x12xf32>
    %164 = vector.extract_strided_slice %161 {offsets = [0, 24], sizes = [1, 12], strides = [1, 1]} : vector<1x144xf32> to vector<1x12xf32>
    %165 = vector.extract_strided_slice %161 {offsets = [0, 36], sizes = [1, 12], strides = [1, 1]} : vector<1x144xf32> to vector<1x12xf32>
    %166 = vector.extract_strided_slice %161 {offsets = [0, 48], sizes = [1, 12], strides = [1, 1]} : vector<1x144xf32> to vector<1x12xf32>
    %167 = vector.extract_strided_slice %161 {offsets = [0, 60], sizes = [1, 12], strides = [1, 1]} : vector<1x144xf32> to vector<1x12xf32>
    %168 = vector.extract_strided_slice %161 {offsets = [0, 72], sizes = [1, 12], strides = [1, 1]} : vector<1x144xf32> to vector<1x12xf32>
    %169 = vector.extract_strided_slice %161 {offsets = [0, 84], sizes = [1, 12], strides = [1, 1]} : vector<1x144xf32> to vector<1x12xf32>
    %170 = vector.extract_strided_slice %161 {offsets = [0, 96], sizes = [1, 12], strides = [1, 1]} : vector<1x144xf32> to vector<1x12xf32>
    %171 = vector.extract_strided_slice %161 {offsets = [0, 108], sizes = [1, 12], strides = [1, 1]} : vector<1x144xf32> to vector<1x12xf32>
    %172 = vector.extract_strided_slice %161 {offsets = [0, 120], sizes = [1, 12], strides = [1, 1]} : vector<1x144xf32> to vector<1x12xf32>
    %173 = vector.extract_strided_slice %161 {offsets = [0, 132], sizes = [1, 12], strides = [1, 1]} : vector<1x144xf32> to vector<1x12xf32>
    %174 = tpu.concatenate %162, %163, %164, %165, %166, %167, %168, %169, %170, %171, %172, %173 in 0 : vector<1x12xf32>, vector<1x12xf32>, vector<1x12xf32>, vector<1x12xf32>, vector<1x12xf32>, vector<1x12xf32>, vector<1x12xf32>, vector<1x12xf32>, vector<1x12xf32>, vector<1x12xf32>, vector<1x12xf32>, vector<1x12xf32> -> vector<12x12xf32>
    %c0_91 = arith.constant 0 : index
    %c0_92 = arith.constant 0 : index
    %175 = vector.load %arg13[%c0_91, %c0_92] : memref<64x12xbf16, #tpu.memory_space<vmem>>, vector<64x12xbf16>
    %176 = arith.truncf %174 : vector<12x12xf32> to vector<12x12xbf16>
    %cst_93 = arith.constant dense<0.000000e+00> : vector<64x12xf32>
    %177 = tpu.matmul %175, %176, %cst_93 {dimension_numbers = #tpu.dot_dimension_numbers<[1], [0], [0], [1], [0, 0, 1, 1], [], []>} : vector<64x12xbf16>, vector<12x12xbf16>, vector<64x12xf32> -> vector<64x12xf32>
    %178 = arith.truncf %177 : vector<64x12xf32> to vector<64x12xbf16>
    %c0_94 = arith.constant 0 : index
    %c0_95 = arith.constant 0 : index
    %179 = vector.load %arg14[%c0_94, %c0_95] : memref<12x128xbf16, #tpu.memory_space<vmem>>, vector<12x128xbf16>
    %cst_96 = arith.constant dense<0.000000e+00> : vector<64x128xf32>
    %180 = tpu.matmul %178, %179, %cst_96 {dimension_numbers = #tpu.dot_dimension_numbers<[1], [0], [0], [1], [0, 0, 1, 1], [], []>} : vector<64x12xbf16>, vector<12x128xbf16>, vector<64x128xf32> -> vector<64x128xf32>
    %181 = arith.negf %180 : vector<64x128xf32>
    %182 = math.exp %181 : vector<64x128xf32>
    %cst_97 = arith.constant 1.000000e+00 : f32
    %183 = vector.broadcast %cst_97 : f32 to vector<64x128xf32>
    %184 = arith.addf %183, %182 : vector<64x128xf32>
    %185 = arith.divf %183, %184 : vector<64x128xf32>
    %c0_98 = arith.constant 0 : index
    %c0_99 = arith.constant 0 : index
    %c0_100 = arith.constant 0 : index
    %186 = vector.load %arg15[%c0_98, %c0_99, %c0_100] : memref<1x64x128xf32, #tpu.memory_space<vmem>>, vector<1x64x128xf32>
    %187 = vector.shape_cast %186 : vector<1x64x128xf32> to vector<64x128xf32>
    %188 = vector.shape_cast %185 : vector<64x128xf32> to vector<1x64x128xf32>
    tpu.vector_store %arg15[%c0_98, %c0_99, %c0_100], %188 {strides = array<i32>} : memref<1x64x128xf32, #tpu.memory_space<vmem>>, vector<1x64x128xf32>,
    return
  }
  func.func @transform_0(%arg0: i32) -> (i32, i32, i32) {
    %c0_i32 = arith.constant 0 : i32
    %c0_i32_0 = arith.constant 0 : i32
    %c0_i32_1 = arith.constant 0 : i32
    return %arg0, %c0_i32, %c0_i32_0 : i32, i32, i32
  }
  func.func @transform_1(%arg0: i32) -> (i32, i32, i32) {
    %c0_i32 = arith.constant 0 : i32
    %c0_i32_0 = arith.constant 0 : i32
    %c0_i32_1 = arith.constant 0 : i32
    return %arg0, %c0_i32, %c0_i32_0 : i32, i32, i32
  }
  func.func @transform_2(%arg0: i32) -> (i32, i32) {
    %c0_i32 = arith.constant 0 : i32
    %c0_i32_0 = arith.constant 0 : i32
    %c0_i32_1 = arith.constant 0 : i32
    return %c0_i32, %c0_i32_0 : i32, i32
  }
  func.func @transform_3(%arg0: i32) -> (i32, i32) {
    %c0_i32 = arith.constant 0 : i32
    %c0_i32_0 = arith.constant 0 : i32
    %c0_i32_1 = arith.constant 0 : i32
    return %c0_i32, %c0_i32_0 : i32, i32
  }
  func.func @transform_4(%arg0: i32) -> (i32, i32) {
    %c0_i32 = arith.constant 0 : i32
    %c0_i32_0 = arith.constant 0 : i32
    %c0_i32_1 = arith.constant 0 : i32
    return %c0_i32, %c0_i32_0 : i32, i32
  }
  func.func @transform_5(%arg0: i32) -> (i32, i32) {
    %c0_i32 = arith.constant 0 : i32
    %c0_i32_0 = arith.constant 0 : i32
    %c0_i32_1 = arith.constant 0 : i32
    return %c0_i32, %c0_i32_0 : i32, i32
  }
  func.func @transform_6(%arg0: i32) -> (i32, i32) {
    %c0_i32 = arith.constant 0 : i32
    %c0_i32_0 = arith.constant 0 : i32
    %c0_i32_1 = arith.constant 0 : i32
    return %c0_i32, %c0_i32_0 : i32, i32
  }
  func.func @transform_7(%arg0: i32) -> (i32, i32) {
    %c0_i32 = arith.constant 0 : i32
    %c0_i32_0 = arith.constant 0 : i32
    %c0_i32_1 = arith.constant 0 : i32
    return %c0_i32, %c0_i32_0 : i32, i32
  }
  func.func @transform_8(%arg0: i32) -> (i32, i32) {
    %c0_i32 = arith.constant 0 : i32
    %c0_i32_0 = arith.constant 0 : i32
    %c0_i32_1 = arith.constant 0 : i32
    return %c0_i32, %c0_i32_0 : i32, i32
  }
  func.func @transform_9(%arg0: i32) -> (i32, i32) {
    %c0_i32 = arith.constant 0 : i32
    %c0_i32_0 = arith.constant 0 : i32
    %c0_i32_1 = arith.constant 0 : i32
    return %c0_i32, %c0_i32_0 : i32, i32
  }
  func.func @transform_10(%arg0: i32) -> (i32, i32) {
    %c0_i32 = arith.constant 0 : i32
    %c0_i32_0 = arith.constant 0 : i32
    %c0_i32_1 = arith.constant 0 : i32
    return %c0_i32, %c0_i32_0 : i32, i32
  }
  func.func @transform_11(%arg0: i32) -> (i32, i32) {
    %c0_i32 = arith.constant 0 : i32
    %c0_i32_0 = arith.constant 0 : i32
    %c0_i32_1 = arith.constant 0 : i32
    return %c0_i32, %c0_i32_0 : i32, i32
  }
  func.func @transform_12(%arg0: i32) -> (i32, i32) {
    %c0_i32 = arith.constant 0 : i32
    %c0_i32_0 = arith.constant 0 : i32
    %c0_i32_1 = arith.constant 0 : i32
    return %c0_i32, %c0_i32_0 : i32, i32
  }
  func.func @transform_13(%arg0: i32) -> (i32, i32) {
    %c0_i32 = arith.constant 0 : i32
    %c0_i32_0 = arith.constant 0 : i32
    %c0_i32_1 = arith.constant 0 : i32
    return %c0_i32, %c0_i32_0 : i32, i32
  }
  func.func @transform_14(%arg0: i32) -> (i32, i32, i32) {
    %c0_i32 = arith.constant 0 : i32
    %c0_i32_0 = arith.constant 0 : i32
    %c0_i32_1 = arith.constant 0 : i32
    return %arg0, %c0_i32, %c0_i32_0 : i32, i32, i32
  }
}

</mosaic_0001>

<llo_original>
// kernel: tpu_custom_call.1
$region0: #{tpu_custom_call.1}
  #allocation0 [shape = 'u32[]', space=smem, size = 0x4, offset = 0x4, fixed_abs, tag = 'smem constant byte address 0x4 - core index']
  #allocation1 [shape = 'u32[144,128]{1,0:T(1,128)}', space=vmem, size = 0x12000, scoped, tag = 'internal scratch']
  #allocation2 [shape = 'bf16[16,384]{1,0:T(16,128)(2,1)}', space=vmem, size = 0x3000, scoped, tag = 'scratch operand']
  #allocation3 [shape = 'f32[1,1]{1,0:T(1,128)S(1)}', space=vmem, size = 0x200, scoped, tag = 'scoped memory for tpu_custom_call.1']
  %s0 = inlined_call_operand.vmem [shape: bf16[2,32,16], index: 0, kind: input, shape index: {}]
  %s1 = inlined_call_operand.vmem [shape: bf16[2,32,64], index: 1, kind: input, shape index: {}]
  %s2 = inlined_call_operand.vmem [shape: bf16[16,32], index: 2, kind: input, shape index: {}]
  %s3 = inlined_call_operand.vmem [shape: bf16[16,144], index: 3, kind: input, shape index: {}]
  %s4 = inlined_call_operand.vmem [shape: bf16[16,144], index: 4, kind: input, shape index: {}]
  %s5 = inlined_call_operand.vmem [shape: bf16[16,32], index: 5, kind: input, shape index: {}]
  %s6 = inlined_call_operand.vmem [shape: f32[16,1], index: 6, kind: input, shape index: {}]
  %s7 = inlined_call_operand.vmem [shape: f32[16,1], index: 7, kind: input, shape index: {}]
  %s8 = inlined_call_operand.vmem [shape: bf16[16,144], index: 8, kind: input, shape index: {}]
  %s9 = inlined_call_operand.vmem [shape: f32[16,1], index: 9, kind: input, shape index: {}]
  %s10 = inlined_call_operand.<no memory space> [shape: f32[1,1], index: 10, kind: input, shape index: {}]
  %s11 = inlined_call_operand.vmem [shape: bf16[1,16], index: 11, kind: input, shape index: {}]
  %s12 = inlined_call_operand.vmem [shape: bf16[64,12], index: 12, kind: input, shape index: {}]
  %s13 = inlined_call_operand.vmem [shape: bf16[12,128], index: 13, kind: input, shape index: {}]
  %s14 = inlined_call_operand.hbm [shape: f32[2,64,128], index: 14, kind: output, shape index: {}]
  %s15 = sld [smem:[#allocation0]]
  $region89: #{tpu_custom_call.1} parent=0
    _
  %s17 = ssub.s32 1, %s15
  %s18 = scalar_select 0, %s17, %s15
  %v19 = vstv %s10
  %20 = vst [vmem:[#allocation3] sm:$0x1] %v19
  $region1: #{tpu_custom_call.1} parent=0
    #allocation4 [shape = 'u8[65536]{0}', space=vmem, size = 0x10000, scoped, tag = 'output window, operand 0']
    #allocation5 [shape = 's32[2]{0}', space=sflag, size = 0x8, scoped, tag = 'scoped memory for tpu_custom_call.1']
    %21 = vsyncpa [#allocation5], 0
    %s22 = scalar_lea.sflag [#allocation5], 1
    %23 = vsyncpa %s22, 0
    loop: start=0, step=1, limit=4
    $region2: #{tpu_custom_call.1} parent=1 // loop_pre_header
      _
    $region3: #{tpu_custom_call.1} parent=1 // loop_header
      %s25 = sphi 0, %s29
      %p26 = scmp.ge.s32.totalorder %s25, 4
      %s35 = sphi 0, %s37
      %s38 = sphi 0, %s35
      %s39 = sphi 0, %s38
      %s55 = sphi 0, %s39
      %s61 = sphi 0, %s63
      %s64 = sphi 0, %s61
      %s65 = sphi 0, %s64
      %s81 = sphi 0, %s65
      %s85 = sphi 0, %s85
      %s87 = sphi 0, %s85
      %s88 = sphi 0, %s87
      %s102 = sphi 0, %s88
      %s106 = sphi 0, %s106
      %s108 = sphi 0, %s106
      %s109 = sphi 0, %s108
      %s123 = sphi 0, %s109
      %s127 = sphi 0, %s127
      %s129 = sphi 0, %s127
      %s130 = sphi 0, %s129
      %s144 = sphi 0, %s130
      %s148 = sphi 0, %s148
      %s150 = sphi 0, %s148
      %s151 = sphi 0, %s150
      %s165 = sphi 0, %s151
      %s169 = sphi 0, %s169
      %s171 = sphi 0, %s169
      %s172 = sphi 0, %s171
      %s186 = sphi 0, %s172
      %s190 = sphi 0, %s190
      %s192 = sphi 0, %s190
      %s193 = sphi 0, %s192
      %s207 = sphi 0, %s193
      %s211 = sphi 0, %s211
      %s213 = sphi 0, %s211
      %s214 = sphi 0, %s213
      %s228 = sphi 0, %s214
      %s232 = sphi 0, %s232
      %s234 = sphi 0, %s232
      %s235 = sphi 0, %s234
      %s249 = sphi 0, %s235
      %s253 = sphi 0, %s253
      %s255 = sphi 0, %s253
      %s256 = sphi 0, %s255
      %s270 = sphi 0, %s256
      %s274 = sphi 0, %s274
      %s276 = sphi 0, %s274
      %s277 = sphi 0, %s276
      %s291 = sphi 0, %s277
      %s295 = sphi 0, %s295
      %s297 = sphi 0, %s295
      %s298 = sphi 0, %s297
      %s312 = sphi 0, %s298
      %s316 = sphi 0, %s316
      %s318 = sphi 0, %s316
      %s319 = sphi 0, %s318
      %s333 = sphi 0, %s319
      %s339 = sphi 0, %s341
      %s342 = sphi 0, %s339
      %s343 = sphi 0, %s342
      %s359 = sphi 0, %s343
    $region4: #{tpu_custom_call.1} parent=1 // loop_header_branch
      %28 = sbr.rel (%p26) target = $region8
    $region5: #{tpu_custom_call.1} parent=1 // loop_body
      %s30 = ssub.s32 %s25, 1
      %s31 = ssub.s32 %s25, 2
      %s32 = sadd.s32 %s25, 1
      %s33 = ssub.s32 %s25, %s32
      %p34 = scmp.eq.s32.totalorder %s33, 0
      %s36 = sadd.s32 %s35, 1
      %s37 = scalar_select %p34, %s35, %s36
      %p40 = pneg %p34
      %p41 = scmp.eq.s32.totalorder %s25, 1
      %p42 = por %p40, %p41
      %p43 = scmp.ne.s32.totalorder %s35, %s38
      %p44 = scmp.eq.s32.totalorder %s25, 0
      %p45 = por %p43, %p44
      %p46 = scmp.ne.s32.totalorder %s35, %s38
      %p47 = scmp.eq.s32.totalorder %s30, 1
      %p48 = por %p46, %p47
      %p49 = scmp.ne.s32.totalorder %s38, %s39
      %p50 = scmp.eq.s32.totalorder %s30, 0
      %p51 = por %p49, %p50
      %p52 = scmp.ne.s32.totalorder %s38, %s39
      %p53 = scmp.eq.s32.totalorder %s31, 1
      %p54 = por %p52, %p53
      %p56 = scmp.ne.s32.totalorder %s39, %s55
      %p57 = scmp.eq.s32.totalorder %s31, 0
      %p58 = por %p56, %p57
      %s59 = ssub.s32 %s25, %s32
      %p60 = scmp.eq.s32.totalorder %s59, 0
      %s62 = sadd.s32 %s61, 1
      %s63 = scalar_select %p60, %s61, %s62
      %p66 = pneg %p60
      %p67 = scmp.eq.s32.totalorder %s25, 1
      %p68 = por %p66, %p67
      %p69 = scmp.ne.s32.totalorder %s61, %s64
      %p70 = scmp.eq.s32.totalorder %s25, 0
      %p71 = por %p69, %p70
      %p72 = scmp.ne.s32.totalorder %s61, %s64
      %p73 = scmp.eq.s32.totalorder %s30, 1
      %p74 = por %p72, %p73
      %p75 = scmp.ne.s32.totalorder %s64, %s65
      %p76 = scmp.eq.s32.totalorder %s30, 0
      %p77 = por %p75, %p76
      %p78 = scmp.ne.s32.totalorder %s64, %s65
      %p79 = scmp.eq.s32.totalorder %s31, 1
      %p80 = por %p78, %p79
      %p82 = scmp.ne.s32.totalorder %s65, %s81
      %p83 = scmp.eq.s32.totalorder %s31, 0
      %p84 = por %p82, %p83
      %s86 = sadd.s32 %s85, 1
      %p89 = scmp.eq.s32.totalorder %s25, 1
      %p90 = scmp.ne.s32.totalorder %s85, %s87
      %p91 = scmp.eq.s32.totalorder %s25, 0
      %p92 = por %p90, %p91
      %p93 = scmp.ne.s32.totalorder %s85, %s87
      %p94 = scmp.eq.s32.totalorder %s30, 1
      %p95 = por %p93, %p94
      %p96 = scmp.ne.s32.totalorder %s87, %s88
      %p97 = scmp.eq.s32.totalorder %s30, 0
      %p98 = por %p96, %p97
      %p99 = scmp.ne.s32.totalorder %s87, %s88
      %p100 = scmp.eq.s32.totalorder %s31, 1
      %p101 = por %p99, %p100
      %p103 = scmp.ne.s32.totalorder %s88, %s102
      %p104 = scmp.eq.s32.totalorder %s31, 0
      %p105 = por %p103, %p104
      %s107 = sadd.s32 %s106, 1
      %p110 = scmp.eq.s32.totalorder %s25, 1
      %p111 = scmp.ne.s32.totalorder %s106, %s108
      %p112 = scmp.eq.s32.totalorder %s25, 0
      %p113 = por %p111, %p112
      %p114 = scmp.ne.s32.totalorder %s106, %s108
      %p115 = scmp.eq.s32.totalorder %s30, 1
      %p116 = por %p114, %p115
      %p117 = scmp.ne.s32.totalorder %s108, %s109
      %p118 = scmp.eq.s32.totalorder %s30, 0
      %p119 = por %p117, %p118
      %p120 = scmp.ne.s32.totalorder %s108, %s109
      %p121 = scmp.eq.s32.totalorder %s31, 1
      %p122 = por %p120, %p121
      %p124 = scmp.ne.s32.totalorder %s109, %s123
      %p125 = scmp.eq.s32.totalorder %s31, 0
      %p126 = por %p124, %p125
      %s128 = sadd.s32 %s127, 1
      %p131 = scmp.eq.s32.totalorder %s25, 1
      %p132 = scmp.ne.s32.totalorder %s127, %s129
      %p133 = scmp.eq.s32.totalorder %s25, 0
      %p134 = por %p132, %p133
      %p135 = scmp.ne.s32.totalorder %s127, %s129
      %p136 = scmp.eq.s32.totalorder %s30, 1
      %p137 = por %p135, %p136
      %p138 = scmp.ne.s32.totalorder %s129, %s130
      %p139 = scmp.eq.s32.totalorder %s30, 0
      %p140 = por %p138, %p139
      %p141 = scmp.ne.s32.totalorder %s129, %s130
      %p142 = scmp.eq.s32.totalorder %s31, 1
      %p143 = por %p141, %p142
      %p145 = scmp.ne.s32.totalorder %s130, %s144
      %p146 = scmp.eq.s32.totalorder %s31, 0
      %p147 = por %p145, %p146
      %s149 = sadd.s32 %s148, 1
      %p152 = scmp.eq.s32.totalorder %s25, 1
      %p153 = scmp.ne.s32.totalorder %s148, %s150
      %p154 = scmp.eq.s32.totalorder %s25, 0
      %p155 = por %p153, %p154
      %p156 = scmp.ne.s32.totalorder %s148, %s150
      %p157 = scmp.eq.s32.totalorder %s30, 1
      %p158 = por %p156, %p157
      %p159 = scmp.ne.s32.totalorder %s150, %s151
      %p160 = scmp.eq.s32.totalorder %s30, 0
      %p161 = por %p159, %p160
      %p162 = scmp.ne.s32.totalorder %s150, %s151
      %p163 = scmp.eq.s32.totalorder %s31, 1
      %p164 = por %p162, %p163
      %p166 = scmp.ne.s32.totalorder %s151, %s165
      %p167 = scmp.eq.s32.totalorder %s31, 0
      %p168 = por %p166, %p167
      %s170 = sadd.s32 %s169, 1
      %p173 = scmp.eq.s32.totalorder %s25, 1
      %p174 = scmp.ne.s32.totalorder %s169, %s171
      %p175 = scmp.eq.s32.totalorder %s25, 0
      %p176 = por %p174, %p175
      %p177 = scmp.ne.s32.totalorder %s169, %s171
      %p178 = scmp.eq.s32.totalorder %s30, 1
      %p179 = por %p177, %p178
      %p180 = scmp.ne.s32.totalorder %s171, %s172
      %p181 = scmp.eq.s32.totalorder %s30, 0
      %p182 = por %p180, %p181
      %p183 = scmp.ne.s32.totalorder %s171, %s172
      %p184 = scmp.eq.s32.totalorder %s31, 1
      %p185 = por %p183, %p184
      %p187 = scmp.ne.s32.totalorder %s172, %s186
      %p188 = scmp.eq.s32.totalorder %s31, 0
      %p189 = por %p187, %p188
      %s191 = sadd.s32 %s190, 1
      %p194 = scmp.eq.s32.totalorder %s25, 1
      %p195 = scmp.ne.s32.totalorder %s190, %s192
      %p196 = scmp.eq.s32.totalorder %s25, 0
      %p197 = por %p195, %p196
      %p198 = scmp.ne.s32.totalorder %s190, %s192
      %p199 = scmp.eq.s32.totalorder %s30, 1
      %p200 = por %p198, %p199
      %p201 = scmp.ne.s32.totalorder %s192, %s193
      %p202 = scmp.eq.s32.totalorder %s30, 0
      %p203 = por %p201, %p202
      %p204 = scmp.ne.s32.totalorder %s192, %s193
      %p205 = scmp.eq.s32.totalorder %s31, 1
      %p206 = por %p204, %p205
      %p208 = scmp.ne.s32.totalorder %s193, %s207
      %p209 = scmp.eq.s32.totalorder %s31, 0
      %p210 = por %p208, %p209
      %s212 = sadd.s32 %s211, 1
      %p215 = scmp.eq.s32.totalorder %s25, 1
      %p216 = scmp.ne.s32.totalorder %s211, %s213
      %p217 = scmp.eq.s32.totalorder %s25, 0
      %p218 = por %p216, %p217
      %p219 = scmp.ne.s32.totalorder %s211, %s213
      %p220 = scmp.eq.s32.totalorder %s30, 1
      %p221 = por %p219, %p220
      %p222 = scmp.ne.s32.totalorder %s213, %s214
      %p223 = scmp.eq.s32.totalorder %s30, 0
      %p224 = por %p222, %p223
      %p225 = scmp.ne.s32.totalorder %s213, %s214
      %p226 = scmp.eq.s32.totalorder %s31, 1
      %p227 = por %p225, %p226
      %p229 = scmp.ne.s32.totalorder %s214, %s228
      %p230 = scmp.eq.s32.totalorder %s31, 0
      %p231 = por %p229, %p230
      %s233 = sadd.s32 %s232, 1
      %p236 = scmp.eq.s32.totalorder %s25, 1
      %p237 = scmp.ne.s32.totalorder %s232, %s234
      %p238 = scmp.eq.s32.totalorder %s25, 0
      %p239 = por %p237, %p238
      %p240 = scmp.ne.s32.totalorder %s232, %s234
      %p241 = scmp.eq.s32.totalorder %s30, 1
      %p242 = por %p240, %p241
      %p243 = scmp.ne.s32.totalorder %s234, %s235
      %p244 = scmp.eq.s32.totalorder %s30, 0
      %p245 = por %p243, %p244
      %p246 = scmp.ne.s32.totalorder %s234, %s235
      %p247 = scmp.eq.s32.totalorder %s31, 1
      %p248 = por %p246, %p247
      %p250 = scmp.ne.s32.totalorder %s235, %s249
      %p251 = scmp.eq.s32.totalorder %s31, 0
      %p252 = por %p250, %p251
      %s254 = sadd.s32 %s253, 1
      %p257 = scmp.eq.s32.totalorder %s25, 1
      %p258 = scmp.ne.s32.totalorder %s253, %s255
      %p259 = scmp.eq.s32.totalorder %s25, 0
      %p260 = por %p258, %p259
      %p261 = scmp.ne.s32.totalorder %s253, %s255
      %p262 = scmp.eq.s32.totalorder %s30, 1
      %p263 = por %p261, %p262
      %p264 = scmp.ne.s32.totalorder %s255, %s256
      %p265 = scmp.eq.s32.totalorder %s30, 0
      %p266 = por %p264, %p265
      %p267 = scmp.ne.s32.totalorder %s255, %s256
      %p268 = scmp.eq.s32.totalorder %s31, 1
      %p269 = por %p267, %p268
      %p271 = scmp.ne.s32.totalorder %s256, %s270
      %p272 = scmp.eq.s32.totalorder %s31, 0
      %p273 = por %p271, %p272
      %s275 = sadd.s32 %s274, 1
      %p278 = scmp.eq.s32.totalorder %s25, 1
      %p279 = scmp.ne.s32.totalorder %s274, %s276
      %p280 = scmp.eq.s32.totalorder %s25, 0
      %p281 = por %p279, %p280
      %p282 = scmp.ne.s32.totalorder %s274, %s276
      %p283 = scmp.eq.s32.totalorder %s30, 1
      %p284 = por %p282, %p283
      %p285 = scmp.ne.s32.totalorder %s276, %s277
      %p286 = scmp.eq.s32.totalorder %s30, 0
      %p287 = por %p285, %p286
      %p288 = scmp.ne.s32.totalorder %s276, %s277
      %p289 = scmp.eq.s32.totalorder %s31, 1
      %p290 = por %p288, %p289
      %p292 = scmp.ne.s32.totalorder %s277, %s291
      %p293 = scmp.eq.s32.totalorder %s31, 0
      %p294 = por %p292, %p293
      %s296 = sadd.s32 %s295, 1
      %p299 = scmp.eq.s32.totalorder %s25, 1
      %p300 = scmp.ne.s32.totalorder %s295, %s297
      %p301 = scmp.eq.s32.totalorder %s25, 0
      %p302 = por %p300, %p301
      %p303 = scmp.ne.s32.totalorder %s295, %s297
      %p304 = scmp.eq.s32.totalorder %s30, 1
      %p305 = por %p303, %p304
      %p306 = scmp.ne.s32.totalorder %s297, %s298
      %p307 = scmp.eq.s32.totalorder %s30, 0
      %p308 = por %p306, %p307
      %p309 = scmp.ne.s32.totalorder %s297, %s298
      %p310 = scmp.eq.s32.totalorder %s31, 1
      %p311 = por %p309, %p310
      %p313 = scmp.ne.s32.totalorder %s298, %s312
      %p314 = scmp.eq.s32.totalorder %s31, 0
      %p315 = por %p313, %p314
      %s317 = sadd.s32 %s316, 1
      %p320 = scmp.eq.s32.totalorder %s25, 1
      %p321 = scmp.ne.s32.totalorder %s316, %s318
      %p322 = scmp.eq.s32.totalorder %s25, 0
      %p323 = por %p321, %p322
      %p324 = scmp.ne.s32.totalorder %s316, %s318
      %p325 = scmp.eq.s32.totalorder %s30, 1
      %p326 = por %p324, %p325
      %p327 = scmp.ne.s32.totalorder %s318, %s319
      %p328 = scmp.eq.s32.totalorder %s30, 0
      %p329 = por %p327, %p328
      %p330 = scmp.ne.s32.totalorder %s318, %s319
      %p331 = scmp.eq.s32.totalorder %s31, 1
      %p332 = por %p330, %p331
      %p334 = scmp.ne.s32.totalorder %s319, %s333
      %p335 = scmp.eq.s32.totalorder %s31, 0
      %p336 = por %p334, %p335
      %s337 = ssub.s32 %s25, %s32
      %p338 = scmp.eq.s32.totalorder %s337, 0
      %s340 = sadd.s32 %s339, 1
      %s341 = scalar_select %p338, %s339, %s340
      %p344 = pneg %p338
      %p345 = scmp.eq.s32.totalorder %s25, 1
      %p346 = por %p344, %p345
      %p347 = scmp.ne.s32.totalorder %s339, %s342
      %p348 = scmp.eq.s32.totalorder %s25, 0
      %p349 = por %p347, %p348
      %p350 = scmp.ne.s32.totalorder %s339, %s342
      %p351 = scmp.eq.s32.totalorder %s30, 1
      %p352 = por %p350, %p351
      %p353 = scmp.ne.s32.totalorder %s342, %s343
      %p354 = scmp.eq.s32.totalorder %s30, 0
      %p355 = por %p353, %p354
      %p356 = scmp.ne.s32.totalorder %s342, %s343
      %p357 = scmp.eq.s32.totalorder %s31, 1
      %p358 = por %p356, %p357
      %p360 = scmp.ne.s32.totalorder %s343, %s359
      %p361 = scmp.eq.s32.totalorder %s31, 0
      %p362 = por %p360, %p361
      %p363 = scmp.le.s32.totalorder 1, %s25
      %p364 = scmp.lt.s32.totalorder %s25, 3
      %p365 = pnand %p363, %p364
      %p366 = pneg %p365
      // Predicated region
      $region9: #{tpu_custom_call.1} parent=5 // pred_check
        _
      $region10: #{tpu_custom_call.1} parent=5 // pred_check_branch
        %368 = sbr.rel (%p365) target = $region12
      $region11: #{tpu_custom_call.1} parent=5 // pred_region
        %s369 = ssub.s32 %s25, 1
        // Predicated region
        $region13: #{tpu_custom_call.1} parent=11 // pred_check
          %p370 = pneg %p98
        $region14: #{tpu_custom_call.1} parent=11 // pred_check_branch
          %372 = sbr.rel (%p370) target = $region16
        $region15: #{tpu_custom_call.1} parent=11 // pred_region
          _
        $region16: #{tpu_custom_call.1} parent=11 // pred_fallthru
          _
        // Predicated region
        $region17: #{tpu_custom_call.1} parent=11 // pred_check
          %p373 = pneg %p119
        $region18: #{tpu_custom_call.1} parent=11 // pred_check_branch
          %375 = sbr.rel (%p373) target = $region20
        $region19: #{tpu_custom_call.1} parent=11 // pred_region
          _
        $region20: #{tpu_custom_call.1} parent=11 // pred_fallthru
          _
        // Predicated region
        $region21: #{tpu_custom_call.1} parent=11 // pred_check
          %p376 = pneg %p140
        $region22: #{tpu_custom_call.1} parent=11 // pred_check_branch
          %378 = sbr.rel (%p376) target = $region24
        $region23: #{tpu_custom_call.1} parent=11 // pred_region
          _
        $region24: #{tpu_custom_call.1} parent=11 // pred_fallthru
          _
        // Predicated region
        $region25: #{tpu_custom_call.1} parent=11 // pred_check
          %p379 = pneg %p161
        $region26: #{tpu_custom_call.1} parent=11 // pred_check_branch
          %381 = sbr.rel (%p379) target = $region28
        $region27: #{tpu_custom_call.1} parent=11 // pred_region
          _
        $region28: #{tpu_custom_call.1} parent=11 // pred_fallthru
          _
        // Predicated region
        $region29: #{tpu_custom_call.1} parent=11 // pred_check
          %p382 = pneg %p182
        $region30: #{tpu_custom_call.1} parent=11 // pred_check_branch
          %384 = sbr.rel (%p382) target = $region32
        $region31: #{tpu_custom_call.1} parent=11 // pred_region
          _
        $region32: #{tpu_custom_call.1} parent=11 // pred_fallthru
          _
        // Predicated region
        $region33: #{tpu_custom_call.1} parent=11 // pred_check
          %p385 = pneg %p203
        $region34: #{tpu_custom_call.1} parent=11 // pred_check_branch
          %387 = sbr.rel (%p385) target = $region36
        $region35: #{tpu_custom_call.1} parent=11 // pred_region
          _
        $region36: #{tpu_custom_call.1} parent=11 // pred_fallthru
          _
        // Predicated region
        $region37: #{tpu_custom_call.1} parent=11 // pred_check
          %p388 = pneg %p224
        $region38: #{tpu_custom_call.1} parent=11 // pred_check_branch
          %390 = sbr.rel (%p388) target = $region40
        $region39: #{tpu_custom_call.1} parent=11 // pred_region
          _
        $region40: #{tpu_custom_call.1} parent=11 // pred_fallthru
          _
        // Predicated region
        $region41: #{tpu_custom_call.1} parent=11 // pred_check
          %p391 = pneg %p245
        $region42: #{tpu_custom_call.1} parent=11 // pred_check_branch
          %393 = sbr.rel (%p391) target = $region44
        $region43: #{tpu_custom_call.1} parent=11 // pred_region
          _
        $region44: #{tpu_custom_call.1} parent=11 // pred_fallthru
          _
        // Predicated region
        $region45: #{tpu_custom_call.1} parent=11 // pred_check
          %p394 = pneg %p266
        $region46: #{tpu_custom_call.1} parent=11 // pred_check_branch
          %396 = sbr.rel (%p394) target = $region48
        $region47: #{tpu_custom_call.1} parent=11 // pred_region
          _
        $region48: #{tpu_custom_call.1} parent=11 // pred_fallthru
          _
        // Predicated region
        $region49: #{tpu_custom_call.1} parent=11 // pred_check
          %p397 = pneg %p287
        $region50: #{tpu_custom_call.1} parent=11 // pred_check_branch
          %399 = sbr.rel (%p397) target = $region52
        $region51: #{tpu_custom_call.1} parent=11 // pred_region
          _
        $region52: #{tpu_custom_call.1} parent=11 // pred_fallthru
          _
        // Predicated region
        $region53: #{tpu_custom_call.1} parent=11 // pred_check
          %p400 = pneg %p308
        $region54: #{tpu_custom_call.1} parent=11 // pred_check_branch
          %402 = sbr.rel (%p400) target = $region56
        $region55: #{tpu_custom_call.1} parent=11 // pred_region
          _
        $region56: #{tpu_custom_call.1} parent=11 // pred_fallthru
          _
        // Predicated region
        $region57: #{tpu_custom_call.1} parent=11 // pred_check
          %p403 = pneg %p329
        $region58: #{tpu_custom_call.1} parent=11 // pred_check_branch
          %405 = sbr.rel (%p403) target = $region60
        $region59: #{tpu_custom_call.1} parent=11 // pred_region
          _
        $region60: #{tpu_custom_call.1} parent=11 // pred_fallthru
          _
      $region12: #{tpu_custom_call.1} parent=5 // pred_fallthru
        _
      %p406 = scmp.lt.s32.totalorder %s25, 2
      // Predicated region
      $region61: #{tpu_custom_call.1} parent=5 // pred_check
        %p407 = pneg %p406
      $region62: #{tpu_custom_call.1} parent=5 // pred_check_branch
        %409 = sbr.rel (%p407) target = $region64
      $region63: #{tpu_custom_call.1} parent=5 // pred_region
        // Predicated region
        $region65: #{tpu_custom_call.1} parent=63 // pred_check
          %p410 = pneg %p45
        $region66: #{tpu_custom_call.1} parent=63 // pred_check_branch
          %412 = sbr.rel (%p410) target = $region68
        $region67: #{tpu_custom_call.1} parent=63 // pred_region
          %p413 = scmp.lt.s32.totalorder %s25, 1
          %s414 = scalar_select %p413, %s25, 1
          %s415 = smul.addr %s414, 4
          %s416 = smul.addr %s415, 4
          %s417 = scalar_lea.vmem %s0, %s416
        $region68: #{tpu_custom_call.1} parent=63 // pred_fallthru
          _
        // Predicated region
        $region69: #{tpu_custom_call.1} parent=63 // pred_check
          %p418 = pneg %p71
        $region70: #{tpu_custom_call.1} parent=63 // pred_check_branch
          %420 = sbr.rel (%p418) target = $region72
        $region71: #{tpu_custom_call.1} parent=63 // pred_region
          %p421 = scmp.lt.s32.totalorder %s25, 1
          %s422 = scalar_select %p421, %s25, 1
          %s423 = smul.addr %s422, 4
          %s424 = smul.addr %s423, 4
          %s425 = scalar_lea.vmem %s1, %s424
        $region72: #{tpu_custom_call.1} parent=63 // pred_fallthru
          _
      $region64: #{tpu_custom_call.1} parent=5 // pred_fallthru
        _
      %p426 = scmp.le.s32.totalorder 1, %s25
      %p427 = scmp.lt.s32.totalorder %s25, 3
      %p428 = pnand %p426, %p427
      %p429 = pneg %p428
      // Predicated region
      $region73: #{tpu_custom_call.1} parent=5 // pred_check
        _
      $region74: #{tpu_custom_call.1} parent=5 // pred_check_branch
        %431 = sbr.rel (%p428) target = $region76
      $region75: #{tpu_custom_call.1} parent=5 // pred_region
        %s432 = ssub.s32 %s25, 1
        %p433 = scmp.lt.s32.totalorder %s30, 1
        %s434 = scalar_select %p433, %s30, 1
        %s435 = smul.addr %s434, 4
        %s436 = smul.addr %s435, 4
        %s437 = scalar_lea.vmem %s0, %s436
        %p438 = pneg %p51
        %p439 = pneg %p48
        %p440 = scmp.lt.s32.totalorder %s30, 1
        %s441 = scalar_select %p440, %s30, 1
        %s442 = smul.addr %s441, 4
        %s443 = smul.addr %s442, 4
        %s444 = scalar_lea.vmem %s1, %s443
        %p445 = pneg %p77
        %p446 = pneg %p74
        %p447 = pneg %p98
        %p448 = pneg %p95
        %p449 = pneg %p119
        %p450 = pneg %p116
        %p451 = pneg %p140
        %p452 = pneg %p137
        %p453 = pneg %p161
        %p454 = pneg %p158
        %p455 = pneg %p182
        %p456 = pneg %p179
        %p457 = pneg %p203
        %p458 = pneg %p200
        %p459 = pneg %p224
        %p460 = pneg %p221
        %p461 = pneg %p245
        %p462 = pneg %p242
        %p463 = pneg %p266
        %p464 = pneg %p263
        %p465 = pneg %p287
        %p466 = pneg %p284
        %p467 = pneg %p308
        %p468 = pneg %p305
        %p469 = pneg %p329
        %p470 = pneg %p326
        %p471 = pneg %p355
        %p472 = pneg %p352
        %s473 = sand.u32 %s342, 1
        %s474 = scalar_lea.sflag [#allocation5], %s473
        %s475 = sand.u32 %s342, 1
        %s476 = smul.addr %s475, 64
        %s477 = scalar_lea.vmem [#allocation4], %s476
        %p478 = scmp.lt.s32.totalorder %s30, 1
        %s479 = scalar_select %p478, %s30, 1
        %s480 = smul.addr %s479, 4
        %s481 = smul.addr %s480, 4
        %s482 = scalar_lea.vmem %s0, %s481
        %p483 = scmp.lt.s32.totalorder %s30, 1
        %s484 = scalar_select %p483, %s30, 1
        %s485 = smul.addr %s484, 4
        %s486 = smul.addr %s485, 4
        %s487 = scalar_lea.vmem %s1, %s486
        %489 = vst [vmem:[#allocation2] sm:$0xff] 0
        %vm490 = vcmask 1047680
        %491 = vst.msk [vmem:[#allocation2 + $0x10] sm:$0xff] %vm490, 0
        %v492 = vld [vmem:[%s2] sm:$0xf]
        %v493 = vld [vmem:[%s2 + $0x4] sm:$0xf]
        %v494 = vld [vmem:[%s482] sm:$0xf]
        %v495 = vld [vmem:[%s482 + $0x4] sm:$0xf]
        %v496 = vld [vmem:[%s482 + $0x8] sm:$0xf]
        %v497 = vld [vmem:[%s482 + $0xc] sm:$0xf]
        %v500 = vunpack.c.l.b16 %v492
        %v501 = vunpack.c.l.b16 %v493
        %v502 = vpack.c.b16 %v501, %v500
        %v507 = vunpack.c.l.b16 %v494
        %v508 = vunpack.c.l.b16 %v495
        %v509 = vunpack.c.l.b16 %v496
        %v510 = vunpack.c.l.b16 %v497
        %v511 = vpack.c.b16 %v508, %v507
        %v512 = vpack.c.b16 %v510, %v509
        %vm515 = vcmask 261120
        %v517 = vsel %vm515, %v502, 0
        %519 = vmatprep.subr.bf16.mxu0 0
        %520 = vmatpush1.bf16.msra.mxu0 %v511
        %521 = vmatprep.subr.bf16.mxu0 0
        %522 = vmatpush1.bf16.msra.mxu0 %v512
        %523 = vmatprep.subr.bf16.mxu0 0
        %524 = vmatpush1.bf16.msra.mxu0 0
        %525 = vmatprep.subr.bf16.mxu0 0
        %526 = vmatpush1.bf16.msra.mxu0 0
        %527 = vmatprep.subr.bf16.mxu0 0
        %528 = vmatpush1.bf16.msra.mxu0 0
        %529 = vmatprep.subr.bf16.mxu0 0
        %530 = vmatpush1.bf16.msra.mxu0 0
        %531 = vmatprep.subr.bf16.mxu0 0
        %532 = vmatpush1.bf16.msra.mxu0 0
        %533 = vmatprep.subr.bf16.mxu0 0
        %534 = vmatpush1.bf16.msra.mxu0 0
        %535 = vmatprep.subr.bf16.mxu0 0
        %536 = vmatpush1.bf16.msra.mxu0 0
        %537 = vmatprep.subr.bf16.mxu0 0
        %538 = vmatpush1.bf16.msra.mxu0 0
        %539 = vmatprep.subr.bf16.mxu0 0
        %540 = vmatpush1.bf16.msra.mxu0 0
        %541 = vmatprep.subr.bf16.mxu0 0
        %542 = vmatpush1.bf16.msra.mxu0 0
        %543 = vmatprep.subr.bf16.mxu0 0
        %544 = vmatpush1.bf16.msra.mxu0 0
        %545 = vmatprep.subr.bf16.mxu0 0
        %546 = vmatpush1.bf16.msra.mxu0 0
        %547 = vmatprep.subr.bf16.mxu0 0
        %548 = vmatpush1.bf16.msra.mxu0 0
        %549 = vmatprep.subr.bf16.mxu0 0
        %550 = vmatpush1.bf16.msra.mxu0 0
        %551 = vmatprep.mubr.bf16.mxu0 0
        %552 = vmatmul.mubr.bf16.gmra.mrb[0].mxu0 %v517
        %v553 = vpop.f32.mrb[0].mxu0
        %v554 = vadd.f32 0.0, %v553
        %v555 = vpop.f32.mrb[0].mxu0
        %v556 = vpop.f32.mrb[0].mxu0
        %v557 = vadd.f32 0.0, %v556
        %v558 = vpop.f32.mrb[0].mxu0
        %559 = vdwg.mxu0
        %v560 = vpack.c.bf16 %v557, %v554
        %v561 = vld [vmem:[%s3] sm:$0xff]
        %v562 = vld [vmem:[%s3 + $0x8] sm:$0xff]
        %v565 = vunpack.c.l.b16 %v561
        %v566 = vunpack.c.h.b16 %v561
        %v567 = vunpack.c.l.b16 %v562
        %v568 = vunpack.c.h.b16 %v562
        %v569 = vpack.c.b16 %v567, %v565
        %v570 = vpack.c.b16 %v568, %v566
        %vm573 = vcmask 130048
        %v575 = vsel %vm573, %v560, 0
        %577 = vmatprep.subr.bf16.mxu0 %v570
        %578 = vmatpush1.bf16.msra.mxu0 %v569
        %579 = vmatprep.subr.bf16.mxu0 0
        %580 = vmatpush1.bf16.msra.mxu0 0
        %581 = vmatprep.subr.bf16.mxu0 0
        %582 = vmatpush1.bf16.msra.mxu0 0
        %583 = vmatprep.subr.bf16.mxu0 0
        %584 = vmatpush1.bf16.msra.mxu0 0
        %585 = vmatprep.subr.bf16.mxu0 0
        %586 = vmatpush1.bf16.msra.mxu0 0
        %587 = vmatprep.subr.bf16.mxu0 0
        %588 = vmatpush1.bf16.msra.mxu0 0
        %589 = vmatprep.subr.bf16.mxu0 0
        %590 = vmatpush1.bf16.msra.mxu0 0
        %591 = vmatprep.subr.bf16.mxu0 0
        %592 = vmatpush1.bf16.msra.mxu0 0
        %593 = vmatprep.subr.bf16.mxu0 0
        %594 = vmatpush1.bf16.msra.mxu0 0
        %595 = vmatprep.subr.bf16.mxu0 0
        %596 = vmatpush1.bf16.msra.mxu0 0
        %597 = vmatprep.subr.bf16.mxu0 0
        %598 = vmatpush1.bf16.msra.mxu0 0
        %599 = vmatprep.subr.bf16.mxu0 0
        %600 = vmatpush1.bf16.msra.mxu0 0
        %601 = vmatprep.subr.bf16.mxu0 0
        %602 = vmatpush1.bf16.msra.mxu0 0
        %603 = vmatprep.subr.bf16.mxu0 0
        %604 = vmatpush1.bf16.msra.mxu0 0
        %605 = vmatprep.subr.bf16.mxu0 0
        %606 = vmatpush1.bf16.msra.mxu0 0
        %607 = vmatprep.subr.bf16.mxu0 0
        %608 = vmatpush1.bf16.msra.mxu0 0
        %609 = vmatprep.mubr.bf16.mxu0 0
        %610 = vmatmul.mubr.bf16.gmra.mrb[0].mxu0 %v575
        %v611 = vpop.f32.mrb[0].mxu0
        %v612 = vadd.f32 0.0, %v611
        %v613 = vpop.f32.mrb[0].mxu0
        %v614 = vadd.f32 0.0, %v613
        %v615 = vpop.f32.mrb[0].mxu0
        %v616 = vadd.f32 0.0, %v615
        %v617 = vpop.f32.mrb[0].mxu0
        %v618 = vadd.f32 0.0, %v617
        %619 = vdwg.mxu0
        %v620 = vpack.c.bf16 %v616, %v612
        %v621 = vpack.c.bf16 %v618, %v614
        %622 = vst [vmem:[#allocation2 + $0x8] sm:$0xff] %v620
        %623 = vst.msk [vmem:[#allocation2 + $0x10] sm:$0xff] %vm573, %v621
        %v624 = vld [vmem:[#allocation2] sm:$0xf]
        %v625 = vld [vmem:[#allocation2 + $0x8] sm:$0xf]
        %v626 = vld [vmem:[#allocation2 + $0x10] sm:$0xf]
        %v627 = vld [vmem:[#allocation2] sm:$0xf0]
        %v628 = vld [vmem:[#allocation2 + $0x8] sm:$0xf0]
        %v629 = vld [vmem:[#allocation2] sm:$0xf0]
        %v630 = vld [vmem:[#allocation2 + $0x8] sm:$0xf0]
        %v631 = vld [vmem:[#allocation2 + $0x10] sm:$0xf0]
        %v635 = vrot.slane %v624, 4
        %v636 = vrot.slane %v625, 4
        %v637 = vrot.slane %v626, 4
        %638 = vrot.lane.b32.xlu0 %v635, 127
        %v639 = vpop.permute.xlu0 %638
        %640 = vrot.lane.b32.xlu0 %v636, 127
        %v641 = vpop.permute.xlu0 %640
        %642 = vrot.lane.b32.xlu0 %v637, 127
        %v643 = vpop.permute.xlu0 %642
        %vm644 = vcmask 1039360
        %v645 = vsel %vm644, %v639, %v641
        %v646 = vsel %vm644, %v641, %v643
        %647 = vrot.lane.b32.xlu0 %v624, 126
        %v648 = vpop.permute.xlu0 %647
        %649 = vrot.lane.b32.xlu0 %v625, 126
        %v650 = vpop.permute.xlu0 %649
        %651 = vrot.lane.b32.xlu0 %v626, 126
        %v652 = vpop.permute.xlu0 %651
        %vm653 = vcmask 1031168
        %v654 = vsel %vm653, %v648, %v650
        %v655 = vsel %vm653, %v650, %v652
        %656 = vrot.lane.b32.xlu0 %v635, 116
        %v657 = vpop.permute.xlu0 %656
        %658 = vrot.lane.b32.xlu0 %v636, 116
        %v659 = vpop.permute.xlu0 %658
        %660 = vrot.lane.b32.xlu0 %v637, 116
        %v661 = vpop.permute.xlu0 %660
        %vm662 = vcmask 949248
        %v663 = vsel %vm662, %v657, %v659
        %v664 = vsel %vm662, %v659, %v661
        %665 = vrot.lane.b32.xlu0 %v625, 115
        %v666 = vpop.permute.xlu0 %665
        %667 = vrot.lane.b32.xlu0 %v626, 115
        %v668 = vpop.permute.xlu0 %667
        %vm669 = vcmask 941056
        %v670 = vsel %vm669, %v666, %v668
        %671 = vrot.lane.b32.xlu0 %v636, 114
        %v672 = vpop.permute.xlu0 %671
        %673 = vrot.lane.b32.xlu0 %v637, 114
        %v674 = vpop.permute.xlu0 %673
        %vm675 = vcmask 932864
        %v676 = vsel %vm675, %v672, %v674
        %677 = vrot.lane.b32.xlu0 %v625, 104
        %v678 = vpop.permute.xlu0 %677
        %679 = vrot.lane.b32.xlu0 %v626, 104
        %v680 = vpop.permute.xlu0 %679
        %vm681 = vcmask 850944
        %v682 = vsel %vm681, %v678, %v680
        %683 = vrot.lane.b32.xlu0 %v636, 103
        %v684 = vpop.permute.xlu0 %683
        %685 = vrot.lane.b32.xlu0 %v637, 103
        %v686 = vpop.permute.xlu0 %685
        %vm687 = vcmask 842752
        %v688 = vsel %vm687, %v684, %v686
        %689 = vrot.lane.b32.xlu0 %v625, 102
        %v690 = vpop.permute.xlu0 %689
        %691 = vrot.lane.b32.xlu0 %v626, 102
        %v692 = vpop.permute.xlu0 %691
        %vm693 = vcmask 834560
        %v694 = vsel %vm693, %v690, %v692
        %697 = vrot.lane.b32.xlu0 %v627, 13
        %v698 = vpop.permute.xlu0 %697
        %699 = vrot.lane.b32.xlu0 %v628, 13
        %v700 = vpop.permute.xlu0 %699
        %vm701 = vcmask 105472
        %v702 = vsel %vm701, %v698, %v700
        %v703 = vrot.slane %v627, 4
        %v704 = vrot.slane %v628, 4
        %705 = vrot.lane.b32.xlu0 %v703, 11
        %v706 = vpop.permute.xlu0 %705
        %707 = vrot.lane.b32.xlu0 %v704, 11
        %v708 = vpop.permute.xlu0 %707
        %vm709 = vcmask 89088
        %v710 = vsel %vm709, %v706, %v708
        %711 = vrot.lane.b32.xlu0 %v627, 9
        %v712 = vpop.permute.xlu0 %711
        %713 = vrot.lane.b32.xlu0 %v628, 9
        %v714 = vpop.permute.xlu0 %713
        %vm715 = vcmask 72704
        %v716 = vsel %vm715, %v712, %v714
        %v720 = vrot.slane %v629, 4
        %v721 = vrot.slane %v630, 4
        %v722 = vrot.slane %v631, 4
        %723 = vrot.lane.b32.xlu0 %v720, 117
        %v724 = vpop.permute.xlu0 %723
        %725 = vrot.lane.b32.xlu0 %v721, 117
        %v726 = vpop.permute.xlu0 %725
        %727 = vrot.lane.b32.xlu0 %v722, 117
        %v728 = vpop.permute.xlu0 %727
        %vm729 = vcmask 957440
        %v730 = vsel %vm729, %v724, %v726
        %v731 = vsel %vm729, %v726, %v728
        %732 = vrot.lane.b32.xlu0 %v630, 115
        %v733 = vpop.permute.xlu0 %732
        %734 = vrot.lane.b32.xlu0 %v631, 115
        %v735 = vpop.permute.xlu0 %734
        %v736 = vsel %vm669, %v733, %v735
        %737 = vrot.lane.b32.xlu0 %v721, 113
        %v738 = vpop.permute.xlu0 %737
        %739 = vrot.lane.b32.xlu0 %v722, 113
        %v740 = vpop.permute.xlu0 %739
        %vm741 = vcmask 924672
        %v742 = vsel %vm741, %v738, %v740
        %743 = vrot.lane.b32.xlu0 %v630, 93
        %v744 = vpop.permute.xlu0 %743
        %745 = vrot.lane.b32.xlu0 %v631, 93
        %v746 = vpop.permute.xlu0 %745
        %vm747 = vcmask 760832
        %v748 = vsel %vm747, %v744, %v746
        %vm749 = vcmask 1043456
        %v752 = vsel %vm749, %v624, %v645
        %v755 = vsel %vm749, %v625, %v646
        %v758 = vsel %vm749, %v626, %v643
        %v761 = vsel %vm749, %v654, %v663
        %v764 = vsel %vm749, %v655, %v664
        %v767 = vsel %vm749, %v652, %v661
        %v770 = vsel %vm749, %v666, %v672
        %v773 = vsel %vm749, %v670, %v676
        %v776 = vsel %vm749, %v668, %v674
        %v779 = vsel %vm749, %v678, %v684
        %v782 = vsel %vm749, %v682, %v688
        %v785 = vsel %vm749, %v680, %v686
        %v788 = vsel %vm749, %v690, %v698
        %v791 = vsel %vm749, %v694, %v702
        %v794 = vsel %vm749, %v692, %v700
        %v797 = vsel %vm749, %v706, %v712
        %v800 = vsel %vm749, %v710, %v716
        %v803 = vsel %vm749, %v708, %v714
        %v806 = vsel %vm749, %v730, %v733
        %v809 = vsel %vm749, %v731, %v736
        %v812 = vsel %vm749, %v728, %v735
        %v815 = vsel %vm749, %v738, %v744
        %v818 = vsel %vm749, %v742, %v748
        %v821 = vsel %vm749, %v740, %v746
        %822 = vrot.lane.b32.xlu0 %v630, 126
        %v823 = vpop.permute.xlu0 %822
        %824 = vrot.lane.b32.xlu0 %v631, 126
        %v825 = vpop.permute.xlu0 %824
        %v826 = vsel %vm653, %v823, %v825
        %v829 = vsel %vm749, %v721, %v826
        %v832 = vsel %vm749, %v722, %v825
        %835 = vrot.lane.b32.xlu0 %v829, 91
        %v836 = vpop.permute.xlu0 %835
        %837 = vrot.lane.b32.xlu0 %v832, 91
        %v838 = vpop.permute.xlu0 %837
        %vm839 = vcmask 744448
        %v840 = vsel %vm839, %v836, %v838
        %v841 = vld [vmem:[%s4] sm:$0xff]
        %v842 = vld [vmem:[%s4 + $0x8] sm:$0xff]
        %v845 = vunpack.c.l.b16 %v841
        %v846 = vunpack.c.h.b16 %v841
        %v847 = vunpack.c.l.b16 %v842
        %v848 = vunpack.c.h.b16 %v842
        %v849 = vpack.c.b16 %v847, %v845
        %v850 = vpack.c.b16 %v848, %v846
        %876 = vrot.lane.b32.xlu0 %v752, 13
        %v877 = vpop.permute.xlu0 %876
        %878 = vrot.lane.b32.xlu0 %v755, 13
        %v879 = vpop.permute.xlu0 %878
        %880 = vrot.lane.b32.xlu0 %v758, 13
        %v881 = vpop.permute.xlu0 %880
        %882 = vrot.lane.b32.xlu0 %v761, 13
        %v883 = vpop.permute.xlu0 %882
        %884 = vrot.lane.b32.xlu0 %v764, 13
        %v885 = vpop.permute.xlu0 %884
        %886 = vrot.lane.b32.xlu0 %v767, 13
        %v887 = vpop.permute.xlu0 %886
        %888 = vrot.lane.b32.xlu0 %v770, 13
        %v889 = vpop.permute.xlu0 %888
        %890 = vrot.lane.b32.xlu0 %v773, 13
        %v891 = vpop.permute.xlu0 %890
        %892 = vrot.lane.b32.xlu0 %v776, 13
        %v893 = vpop.permute.xlu0 %892
        %894 = vrot.lane.b32.xlu0 %v779, 13
        %v895 = vpop.permute.xlu0 %894
        %896 = vrot.lane.b32.xlu0 %v782, 13
        %v897 = vpop.permute.xlu0 %896
        %898 = vrot.lane.b32.xlu0 %v785, 13
        %v899 = vpop.permute.xlu0 %898
        %900 = vrot.lane.b32.xlu0 %v788, 13
        %v901 = vpop.permute.xlu0 %900
        %902 = vrot.lane.b32.xlu0 %v791, 13
        %v903 = vpop.permute.xlu0 %902
        %904 = vrot.lane.b32.xlu0 %v794, 13
        %v905 = vpop.permute.xlu0 %904
        %906 = vrot.lane.b32.xlu0 %v797, 13
        %v907 = vpop.permute.xlu0 %906
        %908 = vrot.lane.b32.xlu0 %v800, 13
        %v909 = vpop.permute.xlu0 %908
        %910 = vrot.lane.b32.xlu0 %v803, 13
        %v911 = vpop.permute.xlu0 %910
        %912 = vrot.lane.b32.xlu0 %v806, 13
        %v913 = vpop.permute.xlu0 %912
        %914 = vrot.lane.b32.xlu0 %v809, 13
        %v915 = vpop.permute.xlu0 %914
        %916 = vrot.lane.b32.xlu0 %v812, 13
        %v917 = vpop.permute.xlu0 %916
        %918 = vrot.lane.b32.xlu0 %v815, 13
        %v919 = vpop.permute.xlu0 %918
        %920 = vrot.lane.b32.xlu0 %v818, 13
        %v921 = vpop.permute.xlu0 %920
        %922 = vrot.lane.b32.xlu0 %v821, 13
        %v923 = vpop.permute.xlu0 %922
        %924 = vrot.lane.b32.xlu0 %v836, 13
        %v925 = vpop.permute.xlu0 %924
        %926 = vrot.lane.b32.xlu0 %v840, 13
        %v927 = vpop.permute.xlu0 %926
        %928 = vrot.lane.b32.xlu0 %v838, 13
        %v929 = vpop.permute.xlu0 %928
        %v930 = vsel %vm701, %v877, %v879
        %v931 = vsel %vm701, %v879, %v881
        %v932 = vsel %vm701, %v883, %v885
        %v933 = vsel %vm701, %v885, %v887
        %v934 = vsel %vm701, %v889, %v891
        %v935 = vsel %vm701, %v891, %v893
        %v936 = vsel %vm701, %v895, %v897
        %v937 = vsel %vm701, %v897, %v899
        %v938 = vsel %vm701, %v901, %v903
        %v939 = vsel %vm701, %v903, %v905
        %v940 = vsel %vm701, %v907, %v909
        %v941 = vsel %vm701, %v909, %v911
        %v942 = vsel %vm701, %v913, %v915
        %v943 = vsel %vm701, %v915, %v917
        %v944 = vsel %vm701, %v919, %v921
        %v945 = vsel %vm701, %v921, %v923
        %v946 = vsel %vm701, %v925, %v927
        %v947 = vsel %vm701, %v927, %v929
        %v967 = vsel %vm573, %v850, 0
        %969 = vmatprep.subr.bf16.mxu0 %v931
        %970 = vmatpush1.bf16.msra.mxu0 %v930
        %971 = vmatprep.subr.bf16.mxu0 %v933
        %972 = vmatpush1.bf16.msra.mxu0 %v932
        %973 = vmatprep.subr.bf16.mxu0 %v935
        %974 = vmatpush1.bf16.msra.mxu0 %v934
        %975 = vmatprep.subr.bf16.mxu0 %v937
        %976 = vmatpush1.bf16.msra.mxu0 %v936
        %977 = vmatprep.subr.bf16.mxu0 %v939
        %978 = vmatpush1.bf16.msra.mxu0 %v938
        %979 = vmatprep.subr.bf16.mxu0 %v941
        %980 = vmatpush1.bf16.msra.mxu0 %v940
        %981 = vmatprep.subr.bf16.mxu0 %v943
        %982 = vmatpush1.bf16.msra.mxu0 %v942
        %983 = vmatprep.subr.bf16.mxu0 %v945
        %984 = vmatpush1.bf16.msra.mxu0 %v944
        %985 = vmatprep.subr.bf16.mxu0 %v947
        %986 = vmatpush1.bf16.msra.mxu0 %v946
        %987 = vmatprep.subr.bf16.mxu0 0
        %988 = vmatpush1.bf16.msra.mxu0 0
        %989 = vmatprep.subr.bf16.mxu0 0
        %990 = vmatpush1.bf16.msra.mxu0 0
        %991 = vmatprep.subr.bf16.mxu0 0
        %992 = vmatpush1.bf16.msra.mxu0 0
        %993 = vmatprep.subr.bf16.mxu0 0
        %994 = vmatpush1.bf16.msra.mxu0 0
        %995 = vmatprep.subr.bf16.mxu0 0
        %996 = vmatpush1.bf16.msra.mxu0 0
        %997 = vmatprep.subr.bf16.mxu0 0
        %998 = vmatpush1.bf16.msra.mxu0 0
        %999 = vmatprep.subr.bf16.mxu0 0
        %1000 = vmatpush1.bf16.msra.mxu0 0
        %1001 = vmatprep.mubr.bf16.mxu0 %v967
        %1002 = vmatmul.mubr.bf16.gmra.mrb[0].mxu0 %v849
        %v1003 = vpop.f32.mrb[0].mxu0
        %v1004 = vadd.f32 0.0, %v1003
        %v1005 = vpop.f32.mrb[0].mxu0
        %v1006 = vpop.f32.mrb[0].mxu0
        %v1007 = vadd.f32 0.0, %v1006
        %v1008 = vpop.f32.mrb[0].mxu0
        %1009 = vdwg.mxu0
        %v1010 = vld [vmem:[%s5] sm:$0xf]
        %v1011 = vld [vmem:[%s5 + $0x4] sm:$0xf]
        %v1012 = vld [vmem:[%s487] sm:$0xf]
        %v1013 = vld [vmem:[%s487 + $0x4] sm:$0xf]
        %v1014 = vld [vmem:[%s487 + $0x8] sm:$0xf]
        %v1015 = vld [vmem:[%s487 + $0xc] sm:$0xf]
        %v1018 = vunpack.c.l.b16 %v1010
        %v1019 = vunpack.c.l.b16 %v1011
        %v1020 = vpack.c.b16 %v1019, %v1018
        %v1025 = vunpack.c.l.b16 %v1012
        %v1026 = vunpack.c.l.b16 %v1013
        %v1027 = vunpack.c.l.b16 %v1014
        %v1028 = vunpack.c.l.b16 %v1015
        %v1029 = vpack.c.b16 %v1026, %v1025
        %v1030 = vpack.c.b16 %v1028, %v1027
        %v1034 = vsel %vm515, %v1020, 0
        %1036 = vmatprep.subr.bf16.mxu0 0
        %1037 = vmatpush1.bf16.msra.mxu0 %v1029
        %1038 = vmatprep.subr.bf16.mxu0 0
        %1039 = vmatpush1.bf16.msra.mxu0 %v1030
        %1040 = vmatprep.subr.bf16.mxu0 0
        %1041 = vmatpush1.bf16.msra.mxu0 0
        %1042 = vmatprep.subr.bf16.mxu0 0
        %1043 = vmatpush1.bf16.msra.mxu0 0
        %1044 = vmatprep.subr.bf16.mxu0 0
        %1045 = vmatpush1.bf16.msra.mxu0 0
        %1046 = vmatprep.subr.bf16.mxu0 0
        %1047 = vmatpush1.bf16.msra.mxu0 0
        %1048 = vmatprep.subr.bf16.mxu0 0
        %1049 = vmatpush1.bf16.msra.mxu0 0
        %1050 = vmatprep.subr.bf16.mxu0 0
        %1051 = vmatpush1.bf16.msra.mxu0 0
        %1052 = vmatprep.subr.bf16.mxu0 0
        %1053 = vmatpush1.bf16.msra.mxu0 0
        %1054 = vmatprep.subr.bf16.mxu0 0
        %1055 = vmatpush1.bf16.msra.mxu0 0
        %1056 = vmatprep.subr.bf16.mxu0 0
        %1057 = vmatpush1.bf16.msra.mxu0 0
        %1058 = vmatprep.subr.bf16.mxu0 0
        %1059 = vmatpush1.bf16.msra.mxu0 0
        %1060 = vmatprep.subr.bf16.mxu0 0
        %1061 = vmatpush1.bf16.msra.mxu0 0
        %1062 = vmatprep.subr.bf16.mxu0 0
        %1063 = vmatpush1.bf16.msra.mxu0 0
        %1064 = vmatprep.subr.bf16.mxu0 0
        %1065 = vmatpush1.bf16.msra.mxu0 0
        %1066 = vmatprep.subr.bf16.mxu0 0
        %1067 = vmatpush1.bf16.msra.mxu0 0
        %1068 = vmatprep.mubr.bf16.mxu0 0
        %1069 = vmatmul.mubr.bf16.gmra.mrb[0].mxu0 %v1034
        %v1070 = vpop.f32.mrb[0].mxu0
        %v1071 = vadd.f32 0.0, %v1070
        %v1072 = vpop.f32.mrb[0].mxu0
        %v1073 = vpop.f32.mrb[0].mxu0
        %v1074 = vadd.f32 0.0, %v1073
        %v1075 = vpop.f32.mrb[0].mxu0
        %1076 = vdwg.mxu0
        %v1077 = vld [vmem:[%s6] sm:$0xff]
        %v1078 = vld [vmem:[%s6 + $0x8] sm:$0xff]
        %v1079 = vld [vmem:[%s7] sm:$0xff]
        %v1080 = vld [vmem:[%s7 + $0x8] sm:$0xff]
        %1083 = vrot.lane.b32.xlu0 %v1071, 26
        %v1084 = vpop.permute.xlu0 %1083
        %1085 = vrot.lane.b32.xlu0 %v1074, 26
        %v1086 = vpop.permute.xlu0 %1085
        %v1089 = vadd.f32 %v1004, %v1084
        %v1090 = vadd.f32 %v1007, %v1086
        %1092 = vset.pattern.permute.xlu0 0
        %1093 = vperm.xlu0 %1092, %v1077
        %v1094 = vpop.permute.xlu0 %1093
        %1097 = vset.pattern.permute.xlu0 0
        %1098 = vperm.xlu0 %1097, %v1078
        %v1099 = vpop.permute.xlu0 %1098
        %v1101 = vadd.f32 %v1089, %v1094
        %v1102 = vadd.f32 %v1090, %v1099
        %vm1103 = vcmp.ge.f32.partialorder %v1101, 0.0
        %vm1104 = vcmp.ge.f32.partialorder %v1102, 0.0
        %1106 = vset.pattern.permute.xlu0 0
        %1107 = vperm.xlu0 %1106, %v1079
        %v1108 = vpop.permute.xlu0 %1107
        %1111 = vset.pattern.permute.xlu0 0
        %1112 = vperm.xlu0 %1111, %v1080
        %v1113 = vpop.permute.xlu0 %1112
        %v1115 = vmul.f32 %v1108, %v1101
        %v1116 = vmul.f32 %v1113, %v1102
        %v1117 = vsel %vm1103, %v1101, %v1115
        %v1118 = vsel %vm1104, %v1102, %v1116
        %v1119 = vpack.c.bf16 %v1118, %v1117
        %vm1120 = vcmask 277712
        %1121 = vst.msk [vmem:[#allocation2 + $0x8] sm:$0xff] %vm1120, %v1119
        %1122 = vrot.lane.b32.xlu0 %v1071, 30
        %v1123 = vpop.permute.xlu0 %1122
        %1124 = vrot.lane.b32.xlu0 %v1074, 30
        %v1125 = vpop.permute.xlu0 %1124
        %v1128 = vadd.f32 %v1004, %v1123
        %v1129 = vadd.f32 %v1007, %v1125
        %v1130 = vadd.f32 %v1128, %v1094
        %v1131 = vadd.f32 %v1129, %v1099
        %vm1132 = vcmp.ge.f32.partialorder %v1130, 0.0
        %vm1133 = vcmp.ge.f32.partialorder %v1131, 0.0
        %v1134 = vmul.f32 %v1108, %v1130
        %v1135 = vmul.f32 %v1113, %v1131
        %v1136 = vsel %vm1132, %v1130, %v1134
        %v1137 = vsel %vm1133, %v1131, %v1135
        %v1138 = vpack.c.bf16 %v1137, %v1136
        %vm1139 = vcmask 376112
        %1140 = vst.msk [vmem:[#allocation2 + $0x8] sm:$0xff] %vm1139, %v1138
        %1141 = vrot.lane.b32.xlu0 %v1071, 34
        %v1142 = vpop.permute.xlu0 %1141
        %1143 = vrot.lane.b32.xlu0 %v1074, 34
        %v1144 = vpop.permute.xlu0 %1143
        %v1147 = vadd.f32 %v1004, %v1142
        %v1148 = vadd.f32 %v1007, %v1144
        %v1149 = vadd.f32 %v1147, %v1094
        %v1150 = vadd.f32 %v1148, %v1099
        %vm1151 = vcmp.ge.f32.partialorder %v1149, 0.0
        %vm1152 = vcmp.ge.f32.partialorder %v1150, 0.0
        %v1153 = vmul.f32 %v1108, %v1149
        %v1154 = vmul.f32 %v1113, %v1150
        %v1155 = vsel %vm1151, %v1149, %v1153
        %v1156 = vsel %vm1152, %v1150, %v1154
        %v1157 = vpack.c.bf16 %v1156, %v1155
        %vm1158 = vcmask 474512
        %1159 = vst.msk [vmem:[#allocation2 + $0x8] sm:$0xff] %vm1158, %v1157
        %1160 = vrot.lane.b32.xlu0 %v1071, 38
        %v1161 = vpop.permute.xlu0 %1160
        %1162 = vrot.lane.b32.xlu0 %v1074, 38
        %v1163 = vpop.permute.xlu0 %1162
        %v1166 = vadd.f32 %v1004, %v1161
        %v1167 = vadd.f32 %v1007, %v1163
        %v1168 = vadd.f32 %v1166, %v1094
        %v1169 = vadd.f32 %v1167, %v1099
        %vm1170 = vcmp.ge.f32.partialorder %v1168, 0.0
        %vm1171 = vcmp.ge.f32.partialorder %v1169, 0.0
        %v1172 = vmul.f32 %v1108, %v1168
        %v1173 = vmul.f32 %v1113, %v1169
        %v1174 = vsel %vm1170, %v1168, %v1172
        %v1175 = vsel %vm1171, %v1169, %v1173
        %v1176 = vpack.c.bf16 %v1175, %v1174
        %vm1177 = vcmask 572912
        %1178 = vst.msk [vmem:[#allocation2 + $0x8] sm:$0xff] %vm1177, %v1176
        %1179 = vrot.lane.b32.xlu0 %v1071, 42
        %v1180 = vpop.permute.xlu0 %1179
        %1181 = vrot.lane.b32.xlu0 %v1074, 42
        %v1182 = vpop.permute.xlu0 %1181
        %v1185 = vadd.f32 %v1004, %v1180
        %v1186 = vadd.f32 %v1007, %v1182
        %v1187 = vadd.f32 %v1185, %v1094
        %v1188 = vadd.f32 %v1186, %v1099
        %vm1189 = vcmp.ge.f32.partialorder %v1187, 0.0
        %vm1190 = vcmp.ge.f32.partialorder %v1188, 0.0
        %v1191 = vmul.f32 %v1108, %v1187
        %v1192 = vmul.f32 %v1113, %v1188
        %v1193 = vsel %vm1189, %v1187, %v1191
        %v1194 = vsel %vm1190, %v1188, %v1192
        %v1195 = vpack.c.bf16 %v1194, %v1193
        %vm1196 = vcmask 671312
        %1197 = vst.msk [vmem:[#allocation2 + $0x8] sm:$0xff] %vm1196, %v1195
        %1198 = vrot.lane.b32.xlu0 %v1071, 46
        %v1199 = vpop.permute.xlu0 %1198
        %1200 = vrot.lane.b32.xlu0 %v1074, 46
        %v1201 = vpop.permute.xlu0 %1200
        %v1204 = vadd.f32 %v1004, %v1199
        %v1205 = vadd.f32 %v1007, %v1201
        %v1206 = vadd.f32 %v1204, %v1094
        %v1207 = vadd.f32 %v1205, %v1099
        %vm1208 = vcmp.ge.f32.partialorder %v1206, 0.0
        %vm1209 = vcmp.ge.f32.partialorder %v1207, 0.0
        %v1210 = vmul.f32 %v1108, %v1206
        %v1211 = vmul.f32 %v1113, %v1207
        %v1212 = vsel %vm1208, %v1206, %v1210
        %v1213 = vsel %vm1209, %v1207, %v1211
        %v1214 = vpack.c.bf16 %v1213, %v1212
        %vm1215 = vcmask 769712
        %1216 = vst.msk [vmem:[#allocation2 + $0x8] sm:$0xff] %vm1215, %v1214
        %1217 = vrot.lane.b32.xlu0 %v1071, 50
        %v1218 = vpop.permute.xlu0 %1217
        %1219 = vrot.lane.b32.xlu0 %v1074, 50
        %v1220 = vpop.permute.xlu0 %1219
        %v1223 = vadd.f32 %v1004, %v1218
        %v1224 = vadd.f32 %v1007, %v1220
        %v1225 = vadd.f32 %v1223, %v1094
        %v1226 = vadd.f32 %v1224, %v1099
        %vm1227 = vcmp.ge.f32.partialorder %v1225, 0.0
        %vm1228 = vcmp.ge.f32.partialorder %v1226, 0.0
        %v1229 = vmul.f32 %v1108, %v1225
        %v1230 = vmul.f32 %v1113, %v1226
        %v1231 = vsel %vm1227, %v1225, %v1229
        %v1232 = vsel %vm1228, %v1226, %v1230
        %v1233 = vpack.c.bf16 %v1232, %v1231
        %vm1234 = vcmask 868112
        %1235 = vst.msk [vmem:[#allocation2 + $0x8] sm:$0xff] %vm1234, %v1233
        %1236 = vrot.lane.b32.xlu0 %v1071, 54
        %v1237 = vpop.permute.xlu0 %1236
        %1238 = vrot.lane.b32.xlu0 %v1074, 54
        %v1239 = vpop.permute.xlu0 %1238
        %v1242 = vadd.f32 %v1004, %v1237
        %v1243 = vadd.f32 %v1007, %v1239
        %v1244 = vadd.f32 %v1242, %v1094
        %v1245 = vadd.f32 %v1243, %v1099
        %vm1246 = vcmp.ge.f32.partialorder %v1244, 0.0
        %vm1247 = vcmp.ge.f32.partialorder %v1245, 0.0
        %v1248 = vmul.f32 %v1108, %v1244
        %v1249 = vmul.f32 %v1113, %v1245
        %v1250 = vsel %vm1246, %v1244, %v1248
        %v1251 = vsel %vm1247, %v1245, %v1249
        %v1252 = vpack.c.bf16 %v1251, %v1250
        %vm1253 = vcmask 966512
        %1254 = vst.msk [vmem:[#allocation2 + $0x8] sm:$0xff] %vm1253, %v1252
        %v1255 = vld [vmem:[#allocation2] sm:$0xff]
        %v1256 = vld [vmem:[#allocation2 + $0x8] sm:$0xff]
        %v1257 = vld [vmem:[#allocation2 + $0x10] sm:$0xff]
        %1261 = vrot.lane.b32.xlu0 %v1255, 127
        %v1262 = vpop.permute.xlu0 %1261
        %1263 = vrot.lane.b32.xlu0 %v1256, 127
        %v1264 = vpop.permute.xlu0 %1263
        %1265 = vrot.lane.b32.xlu0 %v1257, 127
        %v1266 = vpop.permute.xlu0 %1265
        %v1267 = vsel %vm644, %v1262, %v1264
        %v1268 = vsel %vm644, %v1264, %v1266
        %1269 = vrot.lane.b32.xlu0 %v1255, 126
        %v1270 = vpop.permute.xlu0 %1269
        %1271 = vrot.lane.b32.xlu0 %v1256, 126
        %v1272 = vpop.permute.xlu0 %1271
        %1273 = vrot.lane.b32.xlu0 %v1257, 126
        %v1274 = vpop.permute.xlu0 %1273
        %v1275 = vsel %vm653, %v1270, %v1272
        %v1276 = vsel %vm653, %v1272, %v1274
        %1277 = vrot.lane.b32.xlu0 %v1255, 116
        %v1278 = vpop.permute.xlu0 %1277
        %1279 = vrot.lane.b32.xlu0 %v1256, 116
        %v1280 = vpop.permute.xlu0 %1279
        %1281 = vrot.lane.b32.xlu0 %v1257, 116
        %v1282 = vpop.permute.xlu0 %1281
        %v1283 = vsel %vm662, %v1278, %v1280
        %v1284 = vsel %vm662, %v1280, %v1282
        %1285 = vrot.lane.b32.xlu0 %v1256, 115
        %v1286 = vpop.permute.xlu0 %1285
        %1287 = vrot.lane.b32.xlu0 %v1257, 115
        %v1288 = vpop.permute.xlu0 %1287
        %v1289 = vsel %vm669, %v1286, %v1288
        %1290 = vrot.lane.b32.xlu0 %v1256, 114
        %v1291 = vpop.permute.xlu0 %1290
        %1292 = vrot.lane.b32.xlu0 %v1257, 114
        %v1293 = vpop.permute.xlu0 %1292
        %v1294 = vsel %vm675, %v1291, %v1293
        %1295 = vrot.lane.b32.xlu0 %v1256, 104
        %v1296 = vpop.permute.xlu0 %1295
        %1297 = vrot.lane.b32.xlu0 %v1257, 104
        %v1298 = vpop.permute.xlu0 %1297
        %v1299 = vsel %vm681, %v1296, %v1298
        %1300 = vrot.lane.b32.xlu0 %v1256, 103
        %v1301 = vpop.permute.xlu0 %1300
        %1302 = vrot.lane.b32.xlu0 %v1257, 103
        %v1303 = vpop.permute.xlu0 %1302
        %v1304 = vsel %vm687, %v1301, %v1303
        %1305 = vrot.lane.b32.xlu0 %v1256, 102
        %v1306 = vpop.permute.xlu0 %1305
        %1307 = vrot.lane.b32.xlu0 %v1257, 102
        %v1308 = vpop.permute.xlu0 %1307
        %v1309 = vsel %vm693, %v1306, %v1308
        %v1310 = vld [vmem:[%s8] sm:$0xff]
        %v1311 = vld [vmem:[%s8 + $0x8] sm:$0xff]
        %v1312 = vld [vmem:[%s9] sm:$0xff]
        %v1313 = vld [vmem:[%s9 + $0x8] sm:$0xff]
        %1315 = vset.pattern.permute.xlu0 0
        %1316 = vperm.xlu0 %1315, %v1312
        %v1317 = vpop.permute.xlu0 %1316
        %1320 = vset.pattern.permute.xlu0 0
        %1321 = vperm.xlu0 %1320, %v1313
        %v1322 = vpop.permute.xlu0 %1321
        %v1326 = vunpack.c.l.b16 %v1310
        %v1327 = vunpack.c.h.b16 %v1310
        %v1328 = vunpack.c.l.b16 %v1311
        %v1329 = vunpack.c.h.b16 %v1311
        %v1330 = vpack.c.b16 %v1328, %v1326
        %v1331 = vpack.c.b16 %v1329, %v1327
        %1333 = vrot.lane.b32.xlu0 %v1255, 13
        %v1334 = vpop.permute.xlu0 %1333
        %1335 = vrot.lane.b32.xlu0 %v1256, 13
        %v1336 = vpop.permute.xlu0 %1335
        %1337 = vrot.lane.b32.xlu0 %v1257, 13
        %v1338 = vpop.permute.xlu0 %1337
        %1339 = vrot.lane.b32.xlu0 %v1267, 13
        %v1340 = vpop.permute.xlu0 %1339
        %1341 = vrot.lane.b32.xlu0 %v1268, 13
        %v1342 = vpop.permute.xlu0 %1341
        %1343 = vrot.lane.b32.xlu0 %v1266, 13
        %v1344 = vpop.permute.xlu0 %1343
        %1345 = vrot.lane.b32.xlu0 %v1275, 13
        %v1346 = vpop.permute.xlu0 %1345
        %1347 = vrot.lane.b32.xlu0 %v1276, 13
        %v1348 = vpop.permute.xlu0 %1347
        %1349 = vrot.lane.b32.xlu0 %v1274, 13
        %v1350 = vpop.permute.xlu0 %1349
        %1351 = vrot.lane.b32.xlu0 %v1283, 13
        %v1352 = vpop.permute.xlu0 %1351
        %1353 = vrot.lane.b32.xlu0 %v1284, 13
        %v1354 = vpop.permute.xlu0 %1353
        %1355 = vrot.lane.b32.xlu0 %v1282, 13
        %v1356 = vpop.permute.xlu0 %1355
        %1357 = vrot.lane.b32.xlu0 %v1286, 13
        %v1358 = vpop.permute.xlu0 %1357
        %1359 = vrot.lane.b32.xlu0 %v1289, 13
        %v1360 = vpop.permute.xlu0 %1359
        %1361 = vrot.lane.b32.xlu0 %v1288, 13
        %v1362 = vpop.permute.xlu0 %1361
        %1363 = vrot.lane.b32.xlu0 %v1291, 13
        %v1364 = vpop.permute.xlu0 %1363
        %1365 = vrot.lane.b32.xlu0 %v1294, 13
        %v1366 = vpop.permute.xlu0 %1365
        %1367 = vrot.lane.b32.xlu0 %v1293, 13
        %v1368 = vpop.permute.xlu0 %1367
        %1369 = vrot.lane.b32.xlu0 %v1296, 13
        %v1370 = vpop.permute.xlu0 %1369
        %1371 = vrot.lane.b32.xlu0 %v1299, 13
        %v1372 = vpop.permute.xlu0 %1371
        %1373 = vrot.lane.b32.xlu0 %v1298, 13
        %v1374 = vpop.permute.xlu0 %1373
        %1375 = vrot.lane.b32.xlu0 %v1301, 13
        %v1376 = vpop.permute.xlu0 %1375
        %1377 = vrot.lane.b32.xlu0 %v1304, 13
        %v1378 = vpop.permute.xlu0 %1377
        %1379 = vrot.lane.b32.xlu0 %v1303, 13
        %v1380 = vpop.permute.xlu0 %1379
        %1381 = vrot.lane.b32.xlu0 %v1306, 13
        %v1382 = vpop.permute.xlu0 %1381
        %1383 = vrot.lane.b32.xlu0 %v1309, 13
        %v1384 = vpop.permute.xlu0 %1383
        %1385 = vrot.lane.b32.xlu0 %v1308, 13
        %v1386 = vpop.permute.xlu0 %1385
        %v1387 = vsel %vm701, %v1334, %v1336
        %v1388 = vsel %vm701, %v1336, %v1338
        %v1389 = vsel %vm701, %v1340, %v1342
        %v1390 = vsel %vm701, %v1342, %v1344
        %v1391 = vsel %vm701, %v1346, %v1348
        %v1392 = vsel %vm701, %v1348, %v1350
        %v1393 = vsel %vm701, %v1352, %v1354
        %v1394 = vsel %vm701, %v1354, %v1356
        %v1395 = vsel %vm701, %v1358, %v1360
        %v1396 = vsel %vm701, %v1360, %v1362
        %v1397 = vsel %vm701, %v1364, %v1366
        %v1398 = vsel %vm701, %v1366, %v1368
        %v1399 = vsel %vm701, %v1370, %v1372
        %v1400 = vsel %vm701, %v1372, %v1374
        %v1401 = vsel %vm701, %v1376, %v1378
        %v1402 = vsel %vm701, %v1378, %v1380
        %v1403 = vsel %vm701, %v1382, %v1384
        %v1404 = vsel %vm701, %v1384, %v1386
        %v1424 = vsel %vm573, %v1331, 0
        %1426 = vmatprep.subr.bf16.mxu0 %v1388
        %1427 = vmatpush1.bf16.msra.mxu0 %v1387
        %1428 = vmatprep.subr.bf16.mxu0 %v1390
        %1429 = vmatpush1.bf16.msra.mxu0 %v1389
        %1430 = vmatprep.subr.bf16.mxu0 %v1392
        %1431 = vmatpush1.bf16.msra.mxu0 %v1391
        %1432 = vmatprep.subr.bf16.mxu0 %v1394
        %1433 = vmatpush1.bf16.msra.mxu0 %v1393
        %1434 = vmatprep.subr.bf16.mxu0 %v1396
        %1435 = vmatpush1.bf16.msra.mxu0 %v1395
        %1436 = vmatprep.subr.bf16.mxu0 %v1398
        %1437 = vmatpush1.bf16.msra.mxu0 %v1397
        %1438 = vmatprep.subr.bf16.mxu0 %v1400
        %1439 = vmatpush1.bf16.msra.mxu0 %v1399
        %1440 = vmatprep.subr.bf16.mxu0 %v1402
        %1441 = vmatpush1.bf16.msra.mxu0 %v1401
        %1442 = vmatprep.subr.bf16.mxu0 %v1404
        %1443 = vmatpush1.bf16.msra.mxu0 %v1403
        %1444 = vmatprep.subr.bf16.mxu0 0
        %1445 = vmatpush1.bf16.msra.mxu0 0
        %1446 = vmatprep.subr.bf16.mxu0 0
        %1447 = vmatpush1.bf16.msra.mxu0 0
        %1448 = vmatprep.subr.bf16.mxu0 0
        %1449 = vmatpush1.bf16.msra.mxu0 0
        %1450 = vmatprep.subr.bf16.mxu0 0
        %1451 = vmatpush1.bf16.msra.mxu0 0
        %1452 = vmatprep.subr.bf16.mxu0 0
        %1453 = vmatpush1.bf16.msra.mxu0 0
        %1454 = vmatprep.subr.bf16.mxu0 0
        %1455 = vmatpush1.bf16.msra.mxu0 0
        %1456 = vmatprep.subr.bf16.mxu0 0
        %1457 = vmatpush1.bf16.msra.mxu0 0
        %1458 = vmatprep.mubr.bf16.mxu0 %v1424
        %1459 = vmatmul.mubr.bf16.gmra.mrb[0].mxu0 %v1330
        %v1460 = vpop.f32.mrb[0].mxu0
        %v1461 = vadd.f32 %v1317, %v1460
        %v1462 = vpop.f32.mrb[0].mxu0
        %v1463 = vadd.f32 %v1317, %v1462
        %v1464 = vpop.f32.mrb[0].mxu0
        %v1465 = vadd.f32 %v1322, %v1464
        %v1466 = vpop.f32.mrb[0].mxu0
        %v1467 = vadd.f32 %v1322, %v1466
        %1468 = vdwg.mxu0
        %vm1469 = vcmp.ge.f32.partialorder %v1461, 0.0
        %vm1470 = vcmp.ge.f32.partialorder %v1463, 0.0
        %vm1471 = vcmp.ge.f32.partialorder %v1465, 0.0
        %vm1472 = vcmp.ge.f32.partialorder %v1467, 0.0
        %v1473 = vld [vmem:[#allocation3] sm:$0x1]
        %v1475 = vlaneseq
        %v1476 = vshrl.u32 %v1475, 7
        %v1477 = vsub.s32 0, %v1476
        %v1478 = vrot.slane %v1473, %v1477
        %1479 = vset.pattern.permute.xlu0 0
        %1480 = vperm.xlu0 %1479, %v1478
        %v1481 = vpop.permute.xlu0 %1480
        %v1483 = vmul.f32 %v1481, %v1461
        %v1484 = vmul.f32 %v1481, %v1463
        %v1485 = vmul.f32 %v1481, %v1465
        %v1486 = vmul.f32 %v1481, %v1467
        %v1487 = vsel %vm1469, %v1461, %v1483
        %v1488 = vsel %vm1470, %v1463, %v1484
        %v1489 = vsel %vm1471, %v1465, %v1485
        %v1490 = vsel %vm1472, %v1467, %v1486
        %v1491 = vld [vmem:[%s11] sm:$0x1]
        %v1492 = vpack.c.bf16 %v1489, %v1487
        %v1493 = vpack.c.bf16 %v1490, %v1488
        %v1495 = vsel %vm573, %v1491, 0
        %1497 = vmatprep.subr.bf16.mxu0 %v1493
        %1498 = vmatpush1.bf16.msra.mxu0 %v1492
        %1499 = vmatprep.subr.bf16.mxu0 0
        %1500 = vmatpush1.bf16.msra.mxu0 0
        %1501 = vmatprep.subr.bf16.mxu0 0
        %1502 = vmatpush1.bf16.msra.mxu0 0
        %1503 = vmatprep.subr.bf16.mxu0 0
        %1504 = vmatpush1.bf16.msra.mxu0 0
        %1505 = vmatprep.subr.bf16.mxu0 0
        %1506 = vmatpush1.bf16.msra.mxu0 0
        %1507 = vmatprep.subr.bf16.mxu0 0
        %1508 = vmatpush1.bf16.msra.mxu0 0
        %1509 = vmatprep.subr.bf16.mxu0 0
        %1510 = vmatpush1.bf16.msra.mxu0 0
        %1511 = vmatprep.subr.bf16.mxu0 0
        %1512 = vmatpush1.bf16.msra.mxu0 0
        %1513 = vmatprep.subr.bf16.mxu0 0
        %1514 = vmatpush1.bf16.msra.mxu0 0
        %1515 = vmatprep.subr.bf16.mxu0 0
        %1516 = vmatpush1.bf16.msra.mxu0 0
        %1517 = vmatprep.subr.bf16.mxu0 0
        %1518 = vmatpush1.bf16.msra.mxu0 0
        %1519 = vmatprep.subr.bf16.mxu0 0
        %1520 = vmatpush1.bf16.msra.mxu0 0
        %1521 = vmatprep.subr.bf16.mxu0 0
        %1522 = vmatpush1.bf16.msra.mxu0 0
        %1523 = vmatprep.subr.bf16.mxu0 0
        %1524 = vmatpush1.bf16.msra.mxu0 0
        %1525 = vmatprep.subr.bf16.mxu0 0
        %1526 = vmatpush1.bf16.msra.mxu0 0
        %1527 = vmatprep.subr.bf16.mxu0 0
        %1528 = vmatpush1.bf16.msra.mxu0 0
        %1529 = vmatprep.mubr.bf16.mxu0 0
        %1530 = vmatmul.mubr.bf16.gmra.mrb[0].mxu0 %v1495
        %v1531 = vpop.f32.mrb[0].mxu0
        %v1532 = vadd.f32 0.0, %v1531
        %v1533 = vpop.f32.mrb[0].mxu0
        %v1534 = vadd.f32 0.0, %v1533
        %v1535 = vpop.f32.mrb[0].mxu0
        %v1536 = vpop.f32.mrb[0].mxu0
        %1537 = vdwg.mxu0
        %v1539 = vrot.slane %v1532, 7
        %1540 = vrot.lane.b32.xlu0 %v1539, 116
        %v1541 = vpop.permute.xlu0 %1540
        %v1543 = vrot.slane %v1532, 6
        %1544 = vrot.lane.b32.xlu0 %v1543, 104
        %v1545 = vpop.permute.xlu0 %1544
        %v1547 = vrot.slane %v1532, 5
        %1548 = vrot.lane.b32.xlu0 %v1547, 92
        %v1549 = vpop.permute.xlu0 %1548
        %v1551 = vrot.slane %v1532, 4
        %1552 = vrot.lane.b32.xlu0 %v1551, 80
        %v1553 = vpop.permute.xlu0 %1552
        %v1555 = vrot.slane %v1532, 3
        %1556 = vrot.lane.b32.xlu0 %v1555, 68
        %v1557 = vpop.permute.xlu0 %1556
        %v1559 = vrot.slane %v1532, 2
        %1560 = vrot.lane.b32.xlu0 %v1559, 56
        %v1561 = vpop.permute.xlu0 %1560
        %v1563 = vrot.slane %v1532, 1
        %1564 = vrot.lane.b32.xlu0 %v1563, 44
        %v1565 = vpop.permute.xlu0 %1564
        %1567 = vrot.lane.b32.xlu0 %v1532, 32
        %v1568 = vpop.permute.xlu0 %1567
        %1570 = vrot.lane.b32.xlu0 %v1539, 20
        %v1571 = vpop.permute.xlu0 %1570
        %v1574 = vrot.slane %v1534, 6
        %1575 = vrot.lane.b32.xlu0 %v1543, 8
        %v1576 = vpop.permute.xlu0 %1575
        %1577 = vrot.lane.b32.xlu0 %v1574, 8
        %v1578 = vpop.permute.xlu0 %1577
        %vm1579 = vcmask 64512
        %v1580 = vsel %vm1579, %v1576, %v1578
        %v1582 = vrot.slane %v1534, 5
        %1583 = vrot.lane.b32.xlu0 %v1582, 124
        %v1584 = vpop.permute.xlu0 %1583
        %vm1586 = vcmask 1040384
        %v1587 = vsel %vm1586, %v1532, %v1541
        %vm1588 = vcmask 1041408
        %v1589 = vsel %vm1588, %v1587, %v1545
        %vm1590 = vcmask 1042432
        %v1591 = vsel %vm1590, %v1589, %v1549
        %v1592 = vsel %vm749, %v1591, %v1553
        %vm1593 = vcmask 1044480
        %v1594 = vsel %vm1593, %v1592, %v1557
        %vm1595 = vcmask 1045504
        %v1596 = vsel %vm1595, %v1594, %v1561
        %vm1597 = vcmask 1046528
        %v1598 = vsel %vm1597, %v1596, %v1565
        %v1599 = vsel %vm1586, %v1568, %v1571
        %v1600 = vsel %vm1588, %v1599, %v1580
        %v1601 = vsel %vm1590, %v1600, %v1584
        %v1602 = vld [vmem:[%s12] sm:$0xf]
        %v1603 = vld [vmem:[%s12 + $0x4] sm:$0xf]
        %v1604 = vld [vmem:[%s12 + $0x8] sm:$0xf]
        %v1605 = vld [vmem:[%s12 + $0xc] sm:$0xf]
        %v1606 = vld [vmem:[%s12 + $0x10] sm:$0xf]
        %v1607 = vld [vmem:[%s12 + $0x14] sm:$0xf]
        %v1608 = vld [vmem:[%s12 + $0x18] sm:$0xf]
        %v1609 = vld [vmem:[%s12 + $0x1c] sm:$0xf]
        %v1610 = vpack.c.bf16 %v1601, %v1598
        %v1619 = vunpack.c.l.b16 %v1602
        %v1620 = vunpack.c.l.b16 %v1603
        %v1621 = vunpack.c.l.b16 %v1604
        %v1622 = vunpack.c.l.b16 %v1605
        %v1623 = vunpack.c.l.b16 %v1606
        %v1624 = vunpack.c.l.b16 %v1607
        %v1625 = vunpack.c.l.b16 %v1608
        %v1626 = vunpack.c.l.b16 %v1609
        %v1627 = vpack.c.b16 %v1620, %v1619
        %v1628 = vpack.c.b16 %v1622, %v1621
        %v1629 = vpack.c.b16 %v1624, %v1623
        %v1630 = vpack.c.b16 %v1626, %v1625
        %vm1631 = vcmask 97280
        %v1633 = vsel %vm1631, %v1627, 0
        %v1636 = vsel %vm1631, %v1628, 0
        %v1639 = vsel %vm1631, %v1629, 0
        %v1642 = vsel %vm1631, %v1630, 0
        %v1645 = vsel %vm1595, %v1610, 0
        %1647 = vmatprep.subr.bf16.mxu0 0
        %1648 = vmatpush1.bf16.msra.mxu0 %v1645
        %1649 = vmatprep.subr.bf16.mxu0 0
        %1650 = vmatpush1.bf16.msra.mxu0 0
        %1651 = vmatprep.subr.bf16.mxu0 0
        %1652 = vmatpush1.bf16.msra.mxu0 0
        %1653 = vmatprep.subr.bf16.mxu0 0
        %1654 = vmatpush1.bf16.msra.mxu0 0
        %1655 = vmatprep.subr.bf16.mxu0 0
        %1656 = vmatpush1.bf16.msra.mxu0 0
        %1657 = vmatprep.subr.bf16.mxu0 0
        %1658 = vmatpush1.bf16.msra.mxu0 0
        %1659 = vmatprep.subr.bf16.mxu0 0
        %1660 = vmatpush1.bf16.msra.mxu0 0
        %1661 = vmatprep.subr.bf16.mxu0 0
        %1662 = vmatpush1.bf16.msra.mxu0 0
        %1663 = vmatprep.subr.bf16.mxu0 0
        %1664 = vmatpush1.bf16.msra.mxu0 0
        %1665 = vmatprep.subr.bf16.mxu0 0
        %1666 = vmatpush1.bf16.msra.mxu0 0
        %1667 = vmatprep.subr.bf16.mxu0 0
        %1668 = vmatpush1.bf16.msra.mxu0 0
        %1669 = vmatprep.subr.bf16.mxu0 0
        %1670 = vmatpush1.bf16.msra.mxu0 0
        %1671 = vmatprep.subr.bf16.mxu0 0
        %1672 = vmatpush1.bf16.msra.mxu0 0
        %1673 = vmatprep.subr.bf16.mxu0 0
        %1674 = vmatpush1.bf16.msra.mxu0 0
        %1675 = vmatprep.subr.bf16.mxu0 0
        %1676 = vmatpush1.bf16.msra.mxu0 0
        %1677 = vmatprep.subr.bf16.mxu0 0
        %1678 = vmatpush1.bf16.msra.mxu0 0
        %1679 = vmatprep.mubr.bf16.mxu0 0
        %1680 = vmatmul.mubr.bf16.gmra.mrb[0].mxu0 %v1633
        %v1681 = vpop.f32.mrb[0].mxu0
        %v1682 = vadd.f32 0.0, %v1681
        %v1683 = vpop.f32.mrb[0].mxu0
        %v1684 = vpop.f32.mrb[0].mxu0
        %v1685 = vadd.f32 0.0, %v1684
        %v1686 = vpop.f32.mrb[0].mxu0
        %1687 = vmatprep.mubr.bf16.mxu0 0
        %1688 = vmatmul.mubr.bf16.gmra.mrb[0].mxu0 %v1636
        %v1689 = vpop.f32.mrb[0].mxu0
        %v1690 = vadd.f32 0.0, %v1689
        %v1691 = vpop.f32.mrb[0].mxu0
        %v1692 = vpop.f32.mrb[0].mxu0
        %v1693 = vadd.f32 0.0, %v1692
        %v1694 = vpop.f32.mrb[0].mxu0
        %1695 = vmatprep.mubr.bf16.mxu0 0
        %1696 = vmatmul.mubr.bf16.gmra.mrb[0].mxu0 %v1639
        %v1697 = vpop.f32.mrb[0].mxu0
        %v1698 = vadd.f32 0.0, %v1697
        %v1699 = vpop.f32.mrb[0].mxu0
        %v1700 = vpop.f32.mrb[0].mxu0
        %v1701 = vadd.f32 0.0, %v1700
        %v1702 = vpop.f32.mrb[0].mxu0
        %1703 = vmatprep.mubr.bf16.mxu0 0
        %1704 = vmatmul.mubr.bf16.gmra.mrb[0].mxu0 %v1642
        %v1705 = vpop.f32.mrb[0].mxu0
        %v1706 = vadd.f32 0.0, %v1705
        %v1707 = vpop.f32.mrb[0].mxu0
        %v1708 = vpop.f32.mrb[0].mxu0
        %v1709 = vadd.f32 0.0, %v1708
        %v1710 = vpop.f32.mrb[0].mxu0
        %1711 = vdwg.mxu0
        %v1712 = vpack.c.bf16 %v1685, %v1682
        %v1713 = vpack.c.bf16 %v1693, %v1690
        %v1714 = vpack.c.bf16 %v1701, %v1698
        %v1715 = vpack.c.bf16 %v1709, %v1706
        %v1716 = vld [vmem:[%s13] sm:$0xf]
        %v1717 = vld [vmem:[%s13 + $0x4] sm:$0x3]
        %v1720 = vunpack.c.l.b16 %v1716
        %v1721 = vunpack.c.l.b16 %v1717
        %v1722 = vpack.c.b16 %v1721, %v1720
        %v1724 = vsel %vm1631, %v1712, 0
        %v1727 = vsel %vm1631, %v1713, 0
        %v1730 = vsel %vm1631, %v1714, 0
        %v1733 = vsel %vm1631, %v1715, 0
        %v1736 = vsel %vm1595, %v1722, 0
        %1738 = vmatprep.subr.bf16.mxu0 0
        %1739 = vmatpush1.bf16.msra.mxu0 %v1736
        %1740 = vmatprep.subr.bf16.mxu0 0
        %1741 = vmatpush1.bf16.msra.mxu0 0
        %1742 = vmatprep.subr.bf16.mxu0 0
        %1743 = vmatpush1.bf16.msra.mxu0 0
        %1744 = vmatprep.subr.bf16.mxu0 0
        %1745 = vmatpush1.bf16.msra.mxu0 0
        %1746 = vmatprep.subr.bf16.mxu0 0
        %1747 = vmatpush1.bf16.msra.mxu0 0
        %1748 = vmatprep.subr.bf16.mxu0 0
        %1749 = vmatpush1.bf16.msra.mxu0 0
        %1750 = vmatprep.subr.bf16.mxu0 0
        %1751 = vmatpush1.bf16.msra.mxu0 0
        %1752 = vmatprep.subr.bf16.mxu0 0
        %1753 = vmatpush1.bf16.msra.mxu0 0
        %1754 = vmatprep.subr.bf16.mxu0 0
        %1755 = vmatpush1.bf16.msra.mxu0 0
        %1756 = vmatprep.subr.bf16.mxu0 0
        %1757 = vmatpush1.bf16.msra.mxu0 0
        %1758 = vmatprep.subr.bf16.mxu0 0
        %1759 = vmatpush1.bf16.msra.mxu0 0
        %1760 = vmatprep.subr.bf16.mxu0 0
        %1761 = vmatpush1.bf16.msra.mxu0 0
        %1762 = vmatprep.subr.bf16.mxu0 0
        %1763 = vmatpush1.bf16.msra.mxu0 0
        %1764 = vmatprep.subr.bf16.mxu0 0
        %1765 = vmatpush1.bf16.msra.mxu0 0
        %1766 = vmatprep.subr.bf16.mxu0 0
        %1767 = vmatpush1.bf16.msra.mxu0 0
        %1768 = vmatprep.subr.bf16.mxu0 0
        %1769 = vmatpush1.bf16.msra.mxu0 0
        %1770 = vmatprep.mubr.bf16.mxu0 0
        %1771 = vmatmul.mubr.bf16.gmra.mrb[0].mxu0 %v1724
        %v1772 = vpop.f32.mrb[0].mxu0
        %v1773 = vadd.f32 0.0, %v1772
        %v1774 = vpop.f32.mrb[0].mxu0
        %v1775 = vpop.f32.mrb[0].mxu0
        %v1776 = vadd.f32 0.0, %v1775
        %v1777 = vpop.f32.mrb[0].mxu0
        %1778 = vmatprep.mubr.bf16.mxu0 0
        %1779 = vmatmul.mubr.bf16.gmra.mrb[0].mxu0 %v1727
        %v1780 = vpop.f32.mrb[0].mxu0
        %v1781 = vadd.f32 0.0, %v1780
        %v1782 = vpop.f32.mrb[0].mxu0
        %v1783 = vpop.f32.mrb[0].mxu0
        %v1784 = vadd.f32 0.0, %v1783
        %v1785 = vpop.f32.mrb[0].mxu0
        %1786 = vmatprep.mubr.bf16.mxu0 0
        %1787 = vmatmul.mubr.bf16.gmra.mrb[0].mxu0 %v1730
        %v1788 = vpop.f32.mrb[0].mxu0
        %v1789 = vadd.f32 0.0, %v1788
        %v1790 = vpop.f32.mrb[0].mxu0
        %v1791 = vpop.f32.mrb[0].mxu0
        %v1792 = vadd.f32 0.0, %v1791
        %v1793 = vpop.f32.mrb[0].mxu0
        %1794 = vmatprep.mubr.bf16.mxu0 0
        %1795 = vmatmul.mubr.bf16.gmra.mrb[0].mxu0 %v1733
        %v1796 = vpop.f32.mrb[0].mxu0
        %v1797 = vadd.f32 0.0, %v1796
        %v1798 = vpop.f32.mrb[0].mxu0
        %v1799 = vpop.f32.mrb[0].mxu0
        %v1800 = vadd.f32 0.0, %v1799
        %v1801 = vpop.f32.mrb[0].mxu0
        %1802 = vdwg.mxu0
        %v1803 = vxor.u32 %v1773, 2147483648
        %v1804 = vxor.u32 %v1776, 2147483648
        %v1805 = vxor.u32 %v1781, 2147483648
        %v1806 = vxor.u32 %v1784, 2147483648
        %v1807 = vxor.u32 %v1789, 2147483648
        %v1808 = vxor.u32 %v1792, 2147483648
        %v1809 = vxor.u32 %v1797, 2147483648
        %v1810 = vxor.u32 %v1800, 2147483648
        %v1811 = vmul.f32 %v1803, 1.442695
        %v1812 = vpow.pop %v1811
        %v1813 = vmul.f32 %v1804, 1.442695
        %v1814 = vpow.pop %v1813
        %v1815 = vmul.f32 %v1805, 1.442695
        %v1816 = vpow.pop %v1815
        %v1817 = vmul.f32 %v1806, 1.442695
        %v1818 = vpow.pop %v1817
        %v1819 = vmul.f32 %v1807, 1.442695
        %v1820 = vpow.pop %v1819
        %v1821 = vmul.f32 %v1808, 1.442695
        %v1822 = vpow.pop %v1821
        %v1823 = vmul.f32 %v1809, 1.442695
        %v1824 = vpow.pop %v1823
        %v1825 = vmul.f32 %v1810, 1.442695
        %v1826 = vpow.pop %v1825
        %v1827 = vadd.f32 %v1812, 1.0
        %v1828 = vadd.f32 %v1814, 1.0
        %v1829 = vadd.f32 %v1816, 1.0
        %v1830 = vadd.f32 %v1818, 1.0
        %v1831 = vadd.f32 %v1820, 1.0
        %v1832 = vadd.f32 %v1822, 1.0
        %v1833 = vadd.f32 %v1824, 1.0
        %v1834 = vadd.f32 %v1826, 1.0
        %v1835 = vrcp.pop %v1827
        %v1836 = vmul.f32 1.0, %v1835
        %v1837 = vrcp.pop %v1828
        %v1838 = vmul.f32 1.0, %v1837
        %v1839 = vrcp.pop %v1829
        %v1840 = vmul.f32 1.0, %v1839
        %v1841 = vrcp.pop %v1830
        %v1842 = vmul.f32 1.0, %v1841
        %v1843 = vrcp.pop %v1831
        %v1844 = vmul.f32 1.0, %v1843
        %v1845 = vrcp.pop %v1832
        %v1846 = vmul.f32 1.0, %v1845
        %v1847 = vrcp.pop %v1833
        %v1848 = vmul.f32 1.0, %v1847
        %v1849 = vrcp.pop %v1834
        %v1850 = vmul.f32 1.0, %v1849
        %1851 = vst [vmem:[%s477] sm:$0xff] %v1836
        %1852 = vst [vmem:[%s477 + $0x8] sm:$0xff] %v1838
        %1853 = vst [vmem:[%s477 + $0x10] sm:$0xff] %v1840
        %1854 = vst [vmem:[%s477 + $0x18] sm:$0xff] %v1842
        %1855 = vst [vmem:[%s477 + $0x20] sm:$0xff] %v1844
        %1856 = vst [vmem:[%s477 + $0x28] sm:$0xff] %v1846
        %1857 = vst [vmem:[%s477 + $0x30] sm:$0xff] %v1848
        %1858 = vst [vmem:[%s477 + $0x38] sm:$0xff] %v1850
        %s1859 = sand.u32 %s342, 1
        %s1860 = scalar_lea.sflag [#allocation5], %s1859
        %s1861 = sand.u32 %s342, 1
        %s1862 = smul.addr %s1861, 64
        %s1863 = scalar_lea.vmem [#allocation4], %s1862
        // Predicated region
        $region77: #{tpu_custom_call.1} parent=75 // pred_check
          %p1864 = pneg %p352
        $region78: #{tpu_custom_call.1} parent=75 // pred_check_branch
          %1866 = sbr.rel (%p1864) target = $region80
        $region79: #{tpu_custom_call.1} parent=75 // pred_region
          %s1868 = ssub.s32 1024, 1024
          %1869 = vsyncadd %s1860, %s1868
          %s1870 = smul.addr %s30, 8
          %s1871 = smul.addr %s1870, 128
          %s1872 = scalar_lea.hbm %s14, %s1871
          %s1873 = sshll.u32 %s1863, 4
          %s1874 = int_to_ptr.vmem [resolvable:$true] %s1873
          %1879 = dma.vmem_to_hbm [thread:$0]  %s1874, 1024, %s1872, %s1860, 128, 128, 8
        $region80: #{tpu_custom_call.1} parent=75 // pred_fallthru
          _
      $region76: #{tpu_custom_call.1} parent=5 // pred_fallthru
        _
      %p1880 = scmp.le.s32.totalorder 2, %s25
      // Predicated region
      $region81: #{tpu_custom_call.1} parent=5 // pred_check
        %p1881 = pneg %p1880
      $region82: #{tpu_custom_call.1} parent=5 // pred_check_branch
        %1883 = sbr.rel (%p1881) target = $region84
      $region83: #{tpu_custom_call.1} parent=5 // pred_region
        %s1884 = ssub.s32 %s25, 2
        // Predicated region
        $region85: #{tpu_custom_call.1} parent=83 // pred_check
          %p1885 = pneg %p358
        $region86: #{tpu_custom_call.1} parent=83 // pred_check_branch
          %1887 = sbr.rel (%p1885) target = $region88
        $region87: #{tpu_custom_call.1} parent=83 // pred_region
          %s1888 = sand.u32 %s343, 1
          %s1889 = scalar_lea.sflag [#allocation5], %s1888
          %s1890 = sand.u32 %s343, 1
          %s1891 = smul.addr %s1890, 64
          %s1892 = scalar_lea.vmem [#allocation4], %s1891
          %1893 = dma.done %s1889, 1024
        $region88: #{tpu_custom_call.1} parent=83 // pred_fallthru
          _
      $region84: #{tpu_custom_call.1} parent=5 // pred_fallthru
        _
    $region6: #{tpu_custom_call.1} parent=1 // loop_footer
      %s29 = sadd.s32 1, %s25
    $region7: #{tpu_custom_call.1} parent=1 // loop_footer_branch
      %24 = sbr.rel target = $region3
    $region8: #{tpu_custom_call.1} parent=1 // loop_exit
      _
    %1894 = vsyncpa [#allocation5], 1
    %s1895 = scalar_lea.sflag [#allocation5], 1
    %1896 = vsyncpa %s1895, 1

// kernel: tpu_custom_call.1
$region0: #{tpu_custom_call.1}
  #allocation0 [shape = 'u32[]', space=smem, size = 0x4, offset = 0x4, fixed_abs, tag = 'smem constant byte address 0x4 - core index']
  #allocation1 [shape = 'u32[144,128]{1,0:T(1,128)}', space=vmem, size = 0x12000, scoped, tag = 'internal scratch']
  #allocation2 [shape = 'bf16[16,384]{1,0:T(16,128)(2,1)}', space=vmem, size = 0x3000, scoped, tag = 'scratch operand']
  #allocation3 [shape = 'f32[1,1]{1,0:T(1,128)S(1)}', space=vmem, size = 0x200, scoped, tag = 'scoped memory for tpu_custom_call.1']
  %s0 = inlined_call_operand.vmem [shape: bf16[2,32,16], index: 0, kind: input, shape index: {}]
  %s1 = inlined_call_operand.vmem [shape: bf16[2,32,64], index: 1, kind: input, shape index: {}]
  %s2 = inlined_call_operand.vmem [shape: bf16[16,32], index: 2, kind: input, shape index: {}]
  %s3 = inlined_call_operand.vmem [shape: bf16[16,144], index: 3, kind: input, shape index: {}]
  %s4 = inlined_call_operand.vmem [shape: bf16[16,144], index: 4, kind: input, shape index: {}]
  %s5 = inlined_call_operand.vmem [shape: bf16[16,32], index: 5, kind: input, shape index: {}]
  %s6 = inlined_call_operand.vmem [shape: f32[16,1], index: 6, kind: input, shape index: {}]
  %s7 = inlined_call_operand.vmem [shape: f32[16,1], index: 7, kind: input, shape index: {}]
  %s8 = inlined_call_operand.vmem [shape: bf16[16,144], index: 8, kind: input, shape index: {}]
  %s9 = inlined_call_operand.vmem [shape: f32[16,1], index: 9, kind: input, shape index: {}]
  %s10 = inlined_call_operand.<no memory space> [shape: f32[1,1], index: 10, kind: input, shape index: {}]
  %s11 = inlined_call_operand.vmem [shape: bf16[1,16], index: 11, kind: input, shape index: {}]
  %s12 = inlined_call_operand.vmem [shape: bf16[64,12], index: 12, kind: input, shape index: {}]
  %s13 = inlined_call_operand.vmem [shape: bf16[12,128], index: 13, kind: input, shape index: {}]
  %s14 = inlined_call_operand.hbm [shape: f32[2,64,128], index: 14, kind: output, shape index: {}]
  %s15 = sld [smem:[#allocation0]]
  $region89: #{tpu_custom_call.1} parent=0
    _
  %s17 = ssub.s32 1, %s15
  %s18 = scalar_select 0, %s17, %s15
  %v19 = vstv %s10
  %20 = vst [vmem:[#allocation3] sm:$0x1] %v19
  $region1: #{tpu_custom_call.1} parent=0
    #allocation4 [shape = 'u8[65536]{0}', space=vmem, size = 0x10000, scoped, tag = 'output window, operand 0']
    #allocation5 [shape = 's32[2]{0}', space=sflag, size = 0x8, scoped, tag = 'scoped memory for tpu_custom_call.1']
    %21 = vsyncpa [#allocation5], 0
    %s22 = scalar_lea.sflag [#allocation5], 1
    %23 = vsyncpa %s22, 0
    loop: start=0, step=1, limit=4
    $region2: #{tpu_custom_call.1} parent=1 // loop_pre_header
      _
    $region3: #{tpu_custom_call.1} parent=1 // loop_header
      %s25 = sphi 0, %s29
      %p26 = scmp.ge.s32.totalorder %s25, 4
      %s35 = sphi 0, %s37
      %s38 = sphi 0, %s35
      %s39 = sphi 0, %s38
      %s55 = sphi 0, %s39
      %s61 = sphi 0, %s63
      %s64 = sphi 0, %s61
      %s65 = sphi 0, %s64
      %s81 = sphi 0, %s65
      %s85 = sphi 0, %s85
      %s87 = sphi 0, %s85
      %s88 = sphi 0, %s87
      %s102 = sphi 0, %s88
      %s106 = sphi 0, %s106
      %s108 = sphi 0, %s106
      %s109 = sphi 0, %s108
      %s123 = sphi 0, %s109
      %s127 = sphi 0, %s127
      %s129 = sphi 0, %s127
      %s130 = sphi 0, %s129
      %s144 = sphi 0, %s130
      %s148 = sphi 0, %s148
      %s150 = sphi 0, %s148
      %s151 = sphi 0, %s150
      %s165 = sphi 0, %s151
      %s169 = sphi 0, %s169
      %s171 = sphi 0, %s169
      %s172 = sphi 0, %s171
      %s186 = sphi 0, %s172
      %s190 = sphi 0, %s190
      %s192 = sphi 0, %s190
      %s193 = sphi 0, %s192
      %s207 = sphi 0, %s193
      %s211 = sphi 0, %s211
      %s213 = sphi 0, %s211
      %s214 = sphi 0, %s213
      %s228 = sphi 0, %s214
      %s232 = sphi 0, %s232
      %s234 = sphi 0, %s232
      %s235 = sphi 0, %s234
      %s249 = sphi 0, %s235
      %s253 = sphi 0, %s253
      %s255 = sphi 0, %s253
      %s256 = sphi 0, %s255
      %s270 = sphi 0, %s256
      %s274 = sphi 0, %s274
      %s276 = sphi 0, %s274
      %s277 = sphi 0, %s276
      %s291 = sphi 0, %s277
      %s295 = sphi 0, %s295
      %s297 = sphi 0, %s295
      %s298 = sphi 0, %s297
      %s312 = sphi 0, %s298
      %s316 = sphi 0, %s316
      %s318 = sphi 0, %s316
      %s319 = sphi 0, %s318
      %s333 = sphi 0, %s319
      %s339 = sphi 0, %s341
      %s342 = sphi 0, %s339
      %s343 = sphi 0, %s342
      %s359 = sphi 0, %s343
    $region4: #{tpu_custom_call.1} parent=1 // loop_header_branch
      %28 = sbr.rel (%p26) target = $region8
    $region5: #{tpu_custom_call.1} parent=1 // loop_body
      %s30 = ssub.s32 %s25, 1
      %s31 = ssub.s32 %s25, 2
      %s32 = sadd.s32 %s25, 1
      %s33 = ssub.s32 %s25, %s32
      %p34 = scmp.eq.s32.totalorder %s33, 0
      %s36 = sadd.s32 %s35, 1
      %s37 = scalar_select %p34, %s35, %s36
      %p40 = pneg %p34
      %p41 = scmp.eq.s32.totalorder %s25, 1
      %p42 = por %p40, %p41
      %p43 = scmp.ne.s32.totalorder %s35, %s38
      %p44 = scmp.eq.s32.totalorder %s25, 0
      %p45 = por %p43, %p44
      %p46 = scmp.ne.s32.totalorder %s35, %s38
      %p47 = scmp.eq.s32.totalorder %s30, 1
      %p48 = por %p46, %p47
      %p49 = scmp.ne.s32.totalorder %s38, %s39
      %p50 = scmp.eq.s32.totalorder %s30, 0
      %p51 = por %p49, %p50
      %p52 = scmp.ne.s32.totalorder %s38, %s39
      %p53 = scmp.eq.s32.totalorder %s31, 1
      %p54 = por %p52, %p53
      %p56 = scmp.ne.s32.totalorder %s39, %s55
      %p57 = scmp.eq.s32.totalorder %s31, 0
      %p58 = por %p56, %p57
      %s59 = ssub.s32 %s25, %s32
      %p60 = scmp.eq.s32.totalorder %s59, 0
      %s62 = sadd.s32 %s61, 1
      %s63 = scalar_select %p60, %s61, %s62
      %p66 = pneg %p60
      %p67 = scmp.eq.s32.totalorder %s25, 1
      %p68 = por %p66, %p67
      %p69 = scmp.ne.s32.totalorder %s61, %s64
      %p70 = scmp.eq.s32.totalorder %s25, 0
      %p71 = por %p69, %p70
      %p72 = scmp.ne.s32.totalorder %s61, %s64
      %p73 = scmp.eq.s32.totalorder %s30, 1
      %p74 = por %p72, %p73
      %p75 = scmp.ne.s32.totalorder %s64, %s65
      %p76 = scmp.eq.s32.totalorder %s30, 0
      %p77 = por %p75, %p76
      %p78 = scmp.ne.s32.totalorder %s64, %s65
      %p79 = scmp.eq.s32.totalorder %s31, 1
      %p80 = por %p78, %p79
      %p82 = scmp.ne.s32.totalorder %s65, %s81
      %p83 = scmp.eq.s32.totalorder %s31, 0
      %p84 = por %p82, %p83
      %s86 = sadd.s32 %s85, 1
      %p89 = scmp.eq.s32.totalorder %s25, 1
      %p90 = scmp.ne.s32.totalorder %s85, %s87
      %p91 = scmp.eq.s32.totalorder %s25, 0
      %p92 = por %p90, %p91
      %p93 = scmp.ne.s32.totalorder %s85, %s87
      %p94 = scmp.eq.s32.totalorder %s30, 1
      %p95 = por %p93, %p94
      %p96 = scmp.ne.s32.totalorder %s87, %s88
      %p97 = scmp.eq.s32.totalorder %s30, 0
      %p98 = por %p96, %p97
      %p99 = scmp.ne.s32.totalorder %s87, %s88
      %p100 = scmp.eq.s32.totalorder %s31, 1
      %p101 = por %p99, %p100
      %p103 = scmp.ne.s32.totalorder %s88, %s102
      %p104 = scmp.eq.s32.totalorder %s31, 0
      %p105 = por %p103, %p104
      %s107 = sadd.s32 %s106, 1
      %p110 = scmp.eq.s32.totalorder %s25, 1
      %p111 = scmp.ne.s32.totalorder %s106, %s108
      %p112 = scmp.eq.s32.totalorder %s25, 0
      %p113 = por %p111, %p112
      %p114 = scmp.ne.s32.totalorder %s106, %s108
      %p115 = scmp.eq.s32.totalorder %s30, 1
      %p116 = por %p114, %p115
      %p117 = scmp.ne.s32.totalorder %s108, %s109
      %p118 = scmp.eq.s32.totalorder %s30, 0
      %p119 = por %p117, %p118
      %p120 = scmp.ne.s32.totalorder %s108, %s109
      %p121 = scmp.eq.s32.totalorder %s31, 1
      %p122 = por %p120, %p121
      %p124 = scmp.ne.s32.totalorder %s109, %s123
      %p125 = scmp.eq.s32.totalorder %s31, 0
      %p126 = por %p124, %p125
      %s128 = sadd.s32 %s127, 1
      %p131 = scmp.eq.s32.totalorder %s25, 1
      %p132 = scmp.ne.s32.totalorder %s127, %s129
      %p133 = scmp.eq.s32.totalorder %s25, 0
      %p134 = por %p132, %p133
      %p135 = scmp.ne.s32.totalorder %s127, %s129
      %p136 = scmp.eq.s32.totalorder %s30, 1
      %p137 = por %p135, %p136
      %p138 = scmp.ne.s32.totalorder %s129, %s130
      %p139 = scmp.eq.s32.totalorder %s30, 0
      %p140 = por %p138, %p139
      %p141 = scmp.ne.s32.totalorder %s129, %s130
      %p142 = scmp.eq.s32.totalorder %s31, 1
      %p143 = por %p141, %p142
      %p145 = scmp.ne.s32.totalorder %s130, %s144
      %p146 = scmp.eq.s32.totalorder %s31, 0
      %p147 = por %p145, %p146
      %s149 = sadd.s32 %s148, 1
      %p152 = scmp.eq.s32.totalorder %s25, 1
      %p153 = scmp.ne.s32.totalorder %s148, %s150
      %p154 = scmp.eq.s32.totalorder %s25, 0
      %p155 = por %p153, %p154
      %p156 = scmp.ne.s32.totalorder %s148, %s150
      %p157 = scmp.eq.s32.totalorder %s30, 1
      %p158 = por %p156, %p157
      %p159 = scmp.ne.s32.totalorder %s150, %s151
      %p160 = scmp.eq.s32.totalorder %s30, 0
      %p161 = por %p159, %p160
      %p162 = scmp.ne.s32.totalorder %s150, %s151
      %p163 = scmp.eq.s32.totalorder %s31, 1
      %p164 = por %p162, %p163
      %p166 = scmp.ne.s32.totalorder %s151, %s165
      %p167 = scmp.eq.s32.totalorder %s31, 0
      %p168 = por %p166, %p167
      %s170 = sadd.s32 %s169, 1
      %p173 = scmp.eq.s32.totalorder %s25, 1
      %p174 = scmp.ne.s32.totalorder %s169, %s171
      %p175 = scmp.eq.s32.totalorder %s25, 0
      %p176 = por %p174, %p175
      %p177 = scmp.ne.s32.totalorder %s169, %s171
      %p178 = scmp.eq.s32.totalorder %s30, 1
      %p179 = por %p177, %p178
      %p180 = scmp.ne.s32.totalorder %s171, %s172
      %p181 = scmp.eq.s32.totalorder %s30, 0
      %p182 = por %p180, %p181
      %p183 = scmp.ne.s32.totalorder %s171, %s172
      %p184 = scmp.eq.s32.totalorder %s31, 1
      %p185 = por %p183, %p184
      %p187 = scmp.ne.s32.totalorder %s172, %s186
      %p188 = scmp.eq.s32.totalorder %s31, 0
      %p189 = por %p187, %p188
      %s191 = sadd.s32 %s190, 1
      %p194 = scmp.eq.s32.totalorder %s25, 1
      %p195 = scmp.ne.s32.totalorder %s190, %s192
      %p196 = scmp.eq.s32.totalorder %s25, 0
      %p197 = por %p195, %p196
      %p198 = scmp.ne.s32.totalorder %s190, %s192
      %p199 = scmp.eq.s32.totalorder %s30, 1
      %p200 = por %p198, %p199
      %p201 = scmp.ne.s32.totalorder %s192, %s193
      %p202 = scmp.eq.s32.totalorder %s30, 0
      %p203 = por %p201, %p202
      %p204 = scmp.ne.s32.totalorder %s192, %s193
      %p205 = scmp.eq.s32.totalorder %s31, 1
      %p206 = por %p204, %p205
      %p208 = scmp.ne.s32.totalorder %s193, %s207
      %p209 = scmp.eq.s32.totalorder %s31, 0
      %p210 = por %p208, %p209
      %s212 = sadd.s32 %s211, 1
      %p215 = scmp.eq.s32.totalorder %s25, 1
      %p216 = scmp.ne.s32.totalorder %s211, %s213
      %p217 = scmp.eq.s32.totalorder %s25, 0
      %p218 = por %p216, %p217
      %p219 = scmp.ne.s32.totalorder %s211, %s213
      %p220 = scmp.eq.s32.totalorder %s30, 1
      %p221 = por %p219, %p220
      %p222 = scmp.ne.s32.totalorder %s213, %s214
      %p223 = scmp.eq.s32.totalorder %s30, 0
      %p224 = por %p222, %p223
      %p225 = scmp.ne.s32.totalorder %s213, %s214
      %p226 = scmp.eq.s32.totalorder %s31, 1
      %p227 = por %p225, %p226
      %p229 = scmp.ne.s32.totalorder %s214, %s228
      %p230 = scmp.eq.s32.totalorder %s31, 0
      %p231 = por %p229, %p230
      %s233 = sadd.s32 %s232, 1
      %p236 = scmp.eq.s32.totalorder %s25, 1
      %p237 = scmp.ne.s32.totalorder %s232, %s234
      %p238 = scmp.eq.s32.totalorder %s25, 0
      %p239 = por %p237, %p238
      %p240 = scmp.ne.s32.totalorder %s232, %s234
      %p241 = scmp.eq.s32.totalorder %s30, 1
      %p242 = por %p240, %p241
      %p243 = scmp.ne.s32.totalorder %s234, %s235
      %p244 = scmp.eq.s32.totalorder %s30, 0
      %p245 = por %p243, %p244
      %p246 = scmp.ne.s32.totalorder %s234, %s235
      %p247 = scmp.eq.s32.totalorder %s31, 1
      %p248 = por %p246, %p247
      %p250 = scmp.ne.s32.totalorder %s235, %s249
      %p251 = scmp.eq.s32.totalorder %s31, 0
      %p252 = por %p250, %p251
      %s254 = sadd.s32 %s253, 1
      %p257 = scmp.eq.s32.totalorder %s25, 1
      %p258 = scmp.ne.s32.totalorder %s253, %s255
      %p259 = scmp.eq.s32.totalorder %s25, 0
      %p260 = por %p258, %p259
      %p261 = scmp.ne.s32.totalorder %s253, %s255
      %p262 = scmp.eq.s32.totalorder %s30, 1
      %p263 = por %p261, %p262
      %p264 = scmp.ne.s32.totalorder %s255, %s256
      %p265 = scmp.eq.s32.totalorder %s30, 0
      %p266 = por %p264, %p265
      %p267 = scmp.ne.s32.totalorder %s255, %s256
      %p268 = scmp.eq.s32.totalorder %s31, 1
      %p269 = por %p267, %p268
      %p271 = scmp.ne.s32.totalorder %s256, %s270
      %p272 = scmp.eq.s32.totalorder %s31, 0
      %p273 = por %p271, %p272
      %s275 = sadd.s32 %s274, 1
      %p278 = scmp.eq.s32.totalorder %s25, 1
      %p279 = scmp.ne.s32.totalorder %s274, %s276
      %p280 = scmp.eq.s32.totalorder %s25, 0
      %p281 = por %p279, %p280
      %p282 = scmp.ne.s32.totalorder %s274, %s276
      %p283 = scmp.eq.s32.totalorder %s30, 1
      %p284 = por %p282, %p283
      %p285 = scmp.ne.s32.totalorder %s276, %s277
      %p286 = scmp.eq.s32.totalorder %s30, 0
      %p287 = por %p285, %p286
      %p288 = scmp.ne.s32.totalorder %s276, %s277
      %p289 = scmp.eq.s32.totalorder %s31, 1
      %p290 = por %p288, %p289
      %p292 = scmp.ne.s32.totalorder %s277, %s291
      %p293 = scmp.eq.s32.totalorder %s31, 0
      %p294 = por %p292, %p293
      %s296 = sadd.s32 %s295, 1
      %p299 = scmp.eq.s32.totalorder %s25, 1
      %p300 = scmp.ne.s32.totalorder %s295, %s297
      %p301 = scmp.eq.s32.totalorder %s25, 0
      %p302 = por %p300, %p301
      %p303 = scmp.ne.s32.totalorder %s295, %s297
      %p304 = scmp.eq.s32.totalorder %s30, 1
      %p305 = por %p303, %p304
      %p306 = scmp.ne.s32.totalorder %s297, %s298
      %p307 = scmp.eq.s32.totalorder %s30, 0
      %p308 = por %p306, %p307
      %p309 = scmp.ne.s32.totalorder %s297, %s298
      %p310 = scmp.eq.s32.totalorder %s31, 1
      %p311 = por %p309, %p310
      %p313 = scmp.ne.s32.totalorder %s298, %s312
      %p314 = scmp.eq.s32.totalorder %s31, 0
      %p315 = por %p313, %p314
      %s317 = sadd.s32 %s316, 1
      %p320 = scmp.eq.s32.totalorder %s25, 1
      %p321 = scmp.ne.s32.totalorder %s316, %s318
      %p322 = scmp.eq.s32.totalorder %s25, 0
      %p323 = por %p321, %p322
      %p324 = scmp.ne.s32.totalorder %s316, %s318
      %p325 = scmp.eq.s32.totalorder %s30, 1
      %p326 = por %p324, %p325
      %p327 = scmp.ne.s32.totalorder %s318, %s319
      %p328 = scmp.eq.s32.totalorder %s30, 0
      %p329 = por %p327, %p328
      %p330 = scmp.ne.s32.totalorder %s318, %s319
      %p331 = scmp.eq.s32.totalorder %s31, 1
      %p332 = por %p330, %p331
      %p334 = scmp.ne.s32.totalorder %s319, %s333
      %p335 = scmp.eq.s32.totalorder %s31, 0
      %p336 = por %p334, %p335
      %s337 = ssub.s32 %s25, %s32
      %p338 = scmp.eq.s32.totalorder %s337, 0
      %s340 = sadd.s32 %s339, 1
      %s341 = scalar_select %p338, %s339, %s340
      %p344 = pneg %p338
      %p345 = scmp.eq.s32.totalorder %s25, 1
      %p346 = por %p344, %p345
      %p347 = scmp.ne.s32.totalorder %s339, %s342
      %p348 = scmp.eq.s32.totalorder %s25, 0
      %p349 = por %p347, %p348
      %p350 = scmp.ne.s32.totalorder %s339, %s342
      %p351 = scmp.eq.s32.totalorder %s30, 1
      %p352 = por %p350, %p351
      %p353 = scmp.ne.s32.totalorder %s342, %s343
      %p354 = scmp.eq.s32.totalorder %s30, 0
      %p355 = por %p353, %p354
      %p356 = scmp.ne.s32.totalorder %s342, %s343
      %p357 = scmp.eq.s32.totalorder %s31, 1
      %p358 = por %p356, %p357
      %p360 = scmp.ne.s32.totalorder %s343, %s359
      %p361 = scmp.eq.s32.totalorder %s31, 0
      %p362 = por %p360, %p361
      %p363 = scmp.le.s32.totalorder 1, %s25
      %p364 = scmp.lt.s32.totalorder %s25, 3
      %p365 = pnand %p363, %p364
      %p366 = pneg %p365
      // Predicated region
      $region9: #{tpu_custom_call.1} parent=5 // pred_check
        _
      $region10: #{tpu_custom_call.1} parent=5 // pred_check_branch
        %368 = sbr.rel (%p365) target = $region12
      $region11: #{tpu_custom_call.1} parent=5 // pred_region
        %s369 = ssub.s32 %s25, 1
        // Predicated region
        $region13: #{tpu_custom_call.1} parent=11 // pred_check
          %p370 = pneg %p98
        $region14: #{tpu_custom_call.1} parent=11 // pred_check_branch
          %372 = sbr.rel (%p370) target = $region16
        $region15: #{tpu_custom_call.1} parent=11 // pred_region
          _
        $region16: #{tpu_custom_call.1} parent=11 // pred_fallthru
          _
        // Predicated region
        $region17: #{tpu_custom_call.1} parent=11 // pred_check
          %p373 = pneg %p119
        $region18: #{tpu_custom_call.1} parent=11 // pred_check_branch
          %375 = sbr.rel (%p373) target = $region20
        $region19: #{tpu_custom_call.1} parent=11 // pred_region
          _
        $region20: #{tpu_custom_call.1} parent=11 // pred_fallthru
          _
        // Predicated region
        $region21: #{tpu_custom_call.1} parent=11 // pred_check
          %p376 = pneg %p140
        $region22: #{tpu_custom_call.1} parent=11 // pred_check_branch
          %378 = sbr.rel (%p376) target = $region24
        $region23: #{tpu_custom_call.1} parent=11 // pred_region
          _
        $region24: #{tpu_custom_call.1} parent=11 // pred_fallthru
          _
        // Predicated region
        $region25: #{tpu_custom_call.1} parent=11 // pred_check
          %p379 = pneg %p161
        $region26: #{tpu_custom_call.1} parent=11 // pred_check_branch
          %381 = sbr.rel (%p379) target = $region28
        $region27: #{tpu_custom_call.1} parent=11 // pred_region
          _
        $region28: #{tpu_custom_call.1} parent=11 // pred_fallthru
          _
        // Predicated region
        $region29: #{tpu_custom_call.1} parent=11 // pred_check
          %p382 = pneg %p182
        $region30: #{tpu_custom_call.1} parent=11 // pred_check_branch
          %384 = sbr.rel (%p382) target = $region32
        $region31: #{tpu_custom_call.1} parent=11 // pred_region
          _
        $region32: #{tpu_custom_call.1} parent=11 // pred_fallthru
          _
        // Predicated region
        $region33: #{tpu_custom_call.1} parent=11 // pred_check
          %p385 = pneg %p203
        $region34: #{tpu_custom_call.1} parent=11 // pred_check_branch
          %387 = sbr.rel (%p385) target = $region36
        $region35: #{tpu_custom_call.1} parent=11 // pred_region
          _
        $region36: #{tpu_custom_call.1} parent=11 // pred_fallthru
          _
        // Predicated region
        $region37: #{tpu_custom_call.1} parent=11 // pred_check
          %p388 = pneg %p224
        $region38: #{tpu_custom_call.1} parent=11 // pred_check_branch
          %390 = sbr.rel (%p388) target = $region40
        $region39: #{tpu_custom_call.1} parent=11 // pred_region
          _
        $region40: #{tpu_custom_call.1} parent=11 // pred_fallthru
          _
        // Predicated region
        $region41: #{tpu_custom_call.1} parent=11 // pred_check
          %p391 = pneg %p245
        $region42: #{tpu_custom_call.1} parent=11 // pred_check_branch
          %393 = sbr.rel (%p391) target = $region44
        $region43: #{tpu_custom_call.1} parent=11 // pred_region
          _
        $region44: #{tpu_custom_call.1} parent=11 // pred_fallthru
          _
        // Predicated region
        $region45: #{tpu_custom_call.1} parent=11 // pred_check
          %p394 = pneg %p266
        $region46: #{tpu_custom_call.1} parent=11 // pred_check_branch
          %396 = sbr.rel (%p394) target = $region48
        $region47: #{tpu_custom_call.1} parent=11 // pred_region
          _
        $region48: #{tpu_custom_call.1} parent=11 // pred_fallthru
          _
        // Predicated region
        $region49: #{tpu_custom_call.1} parent=11 // pred_check
          %p397 = pneg %p287
        $region50: #{tpu_custom_call.1} parent=11 // pred_check_branch
          %399 = sbr.rel (%p397) target = $region52
        $region51: #{tpu_custom_call.1} parent=11 // pred_region
          _
        $region52: #{tpu_custom_call.1} parent=11 // pred_fallthru
          _
        // Predicated region
        $region53: #{tpu_custom_call.1} parent=11 // pred_check
          %p400 = pneg %p308
        $region54: #{tpu_custom_call.1} parent=11 // pred_check_branch
          %402 = sbr.rel (%p400) target = $region56
        $region55: #{tpu_custom_call.1} parent=11 // pred_region
          _
        $region56: #{tpu_custom_call.1} parent=11 // pred_fallthru
          _
        // Predicated region
        $region57: #{tpu_custom_call.1} parent=11 // pred_check
          %p403 = pneg %p329
        $region58: #{tpu_custom_call.1} parent=11 // pred_check_branch
          %405 = sbr.rel (%p403) target = $region60
        $region59: #{tpu_custom_call.1} parent=11 // pred_region
          _
        $region60: #{tpu_custom_call.1} parent=11 // pred_fallthru
          _
      $region12: #{tpu_custom_call.1} parent=5 // pred_fallthru
        _
      %p406 = scmp.lt.s32.totalorder %s25, 2
      // Predicated region
      $region61: #{tpu_custom_call.1} parent=5 // pred_check
        %p407 = pneg %p406
      $region62: #{tpu_custom_call.1} parent=5 // pred_check_branch
        %409 = sbr.rel (%p407) target = $region64
      $region63: #{tpu_custom_call.1} parent=5 // pred_region
        // Predicated region
        $region65: #{tpu_custom_call.1} parent=63 // pred_check
          %p410 = pneg %p45
        $region66: #{tpu_custom_call.1} parent=63 // pred_check_branch
          %412 = sbr.rel (%p410) target = $region68
        $region67: #{tpu_custom_call.1} parent=63 // pred_region
          %p413 = scmp.lt.s32.totalorder %s25, 1
          %s414 = scalar_select %p413, %s25, 1
          %s415 = smul.addr %s414, 4
          %s416 = smul.addr %s415, 4
          %s417 = scalar_lea.vmem %s0, %s416
        $region68: #{tpu_custom_call.1} parent=63 // pred_fallthru
          _
        // Predicated region
        $region69: #{tpu_custom_call.1} parent=63 // pred_check
          %p418 = pneg %p71
        $region70: #{tpu_custom_call.1} parent=63 // pred_check_branch
          %420 = sbr.rel (%p418) target = $region72
        $region71: #{tpu_custom_call.1} parent=63 // pred_region
          %p421 = scmp.lt.s32.totalorder %s25, 1
          %s422 = scalar_select %p421, %s25, 1
          %s423 = smul.addr %s422, 4
          %s424 = smul.addr %s423, 4
          %s425 = scalar_lea.vmem %s1, %s424
        $region72: #{tpu_custom_call.1} parent=63 // pred_fallthru
          _
      $region64: #{tpu_custom_call.1} parent=5 // pred_fallthru
        _
      %p426 = scmp.le.s32.totalorder 1, %s25
      %p427 = scmp.lt.s32.totalorder %s25, 3
      %p428 = pnand %p426, %p427
      %p429 = pneg %p428
      // Predicated region
      $region73: #{tpu_custom_call.1} parent=5 // pred_check
        _
      $region74: #{tpu_custom_call.1} parent=5 // pred_check_branch
        %431 = sbr.rel (%p428) target = $region76
      $region75: #{tpu_custom_call.1} parent=5 // pred_region
        %s432 = ssub.s32 %s25, 1
        %p433 = scmp.lt.s32.totalorder %s30, 1
        %s434 = scalar_select %p433, %s30, 1
        %s435 = smul.addr %s434, 4
        %s436 = smul.addr %s435, 4
        %s437 = scalar_lea.vmem %s0, %s436
        %p438 = pneg %p51
        %p439 = pneg %p48
        %p440 = scmp.lt.s32.totalorder %s30, 1
        %s441 = scalar_select %p440, %s30, 1
        %s442 = smul.addr %s441, 4
        %s443 = smul.addr %s442, 4
        %s444 = scalar_lea.vmem %s1, %s443
        %p445 = pneg %p77
        %p446 = pneg %p74
        %p447 = pneg %p98
        %p448 = pneg %p95
        %p449 = pneg %p119
        %p450 = pneg %p116
        %p451 = pneg %p140
        %p452 = pneg %p137
        %p453 = pneg %p161
        %p454 = pneg %p158
        %p455 = pneg %p182
        %p456 = pneg %p179
        %p457 = pneg %p203
        %p458 = pneg %p200
        %p459 = pneg %p224
        %p460 = pneg %p221
        %p461 = pneg %p245
        %p462 = pneg %p242
        %p463 = pneg %p266
        %p464 = pneg %p263
        %p465 = pneg %p287
        %p466 = pneg %p284
        %p467 = pneg %p308
        %p468 = pneg %p305
        %p469 = pneg %p329
        %p470 = pneg %p326
        %p471 = pneg %p355
        %p472 = pneg %p352
        %s473 = sand.u32 %s342, 1
        %s474 = scalar_lea.sflag [#allocation5], %s473
        %s475 = sand.u32 %s342, 1
        %s476 = smul.addr %s475, 64
        %s477 = scalar_lea.vmem [#allocation4], %s476
        %p478 = scmp.lt.s32.totalorder %s30, 1
        %s479 = scalar_select %p478, %s30, 1
        %s480 = smul.addr %s479, 4
        %s481 = smul.addr %s480, 4
        %s482 = scalar_lea.vmem %s0, %s481
        %p483 = scmp.lt.s32.totalorder %s30, 1
        %s484 = scalar_select %p483, %s30, 1
        %s485 = smul.addr %s484, 4
        %s486 = smul.addr %s485, 4
        %s487 = scalar_lea.vmem %s1, %s486
        %489 = vst [vmem:[#allocation2] sm:$0xff] 0
        %vm490 = vcmask 1047680
        %491 = vst.msk [vmem:[#allocation2 + $0x10] sm:$0xff] %vm490, 0
        %v492 = vld [vmem:[%s2] sm:$0xf]
        %v493 = vld [vmem:[%s2 + $0x4] sm:$0xf]
        %v494 = vld [vmem:[%s482] sm:$0xf]
        %v495 = vld [vmem:[%s482 + $0x4] sm:$0xf]
        %v496 = vld [vmem:[%s482 + $0x8] sm:$0xf]
        %v497 = vld [vmem:[%s482 + $0xc] sm:$0xf]
        %v500 = vunpack.c.l.b16 %v492
        %v501 = vunpack.c.l.b16 %v493
        %v502 = vpack.c.b16 %v501, %v500
        %v507 = vunpack.c.l.b16 %v494
        %v508 = vunpack.c.l.b16 %v495
        %v509 = vunpack.c.l.b16 %v496
        %v510 = vunpack.c.l.b16 %v497
        %v511 = vpack.c.b16 %v508, %v507
        %v512 = vpack.c.b16 %v510, %v509
        %vm515 = vcmask 261120
        %v517 = vsel %vm515, %v502, 0
        %519 = vmatprep.subr.bf16.mxu0 0
        %520 = vmatpush1.bf16.msra.mxu0 %v511
        %521 = vmatprep.subr.bf16.mxu0 0
        %522 = vmatpush1.bf16.msra.mxu0 %v512
        %523 = vmatprep.subr.bf16.mxu0 0
        %524 = vmatpush1.bf16.msra.mxu0 0
        %525 = vmatprep.subr.bf16.mxu0 0
        %526 = vmatpush1.bf16.msra.mxu0 0
        %527 = vmatprep.subr.bf16.mxu0 0
        %528 = vmatpush1.bf16.msra.mxu0 0
        %529 = vmatprep.subr.bf16.mxu0 0
        %530 = vmatpush1.bf16.msra.mxu0 0
        %531 = vmatprep.subr.bf16.mxu0 0
        %532 = vmatpush1.bf16.msra.mxu0 0
        %533 = vmatprep.subr.bf16.mxu0 0
        %534 = vmatpush1.bf16.msra.mxu0 0
        %535 = vmatprep.subr.bf16.mxu0 0
        %536 = vmatpush1.bf16.msra.mxu0 0
        %537 = vmatprep.subr.bf16.mxu0 0
        %538 = vmatpush1.bf16.msra.mxu0 0
        %539 = vmatprep.subr.bf16.mxu0 0
        %540 = vmatpush1.bf16.msra.mxu0 0
        %541 = vmatprep.subr.bf16.mxu0 0
        %542 = vmatpush1.bf16.msra.mxu0 0
        %543 = vmatprep.subr.bf16.mxu0 0
        %544 = vmatpush1.bf16.msra.mxu0 0
        %545 = vmatprep.subr.bf16.mxu0 0
        %546 = vmatpush1.bf16.msra.mxu0 0
        %547 = vmatprep.subr.bf16.mxu0 0
        %548 = vmatpush1.bf16.msra.mxu0 0
        %549 = vmatprep.subr.bf16.mxu0 0
        %550 = vmatpush1.bf16.msra.mxu0 0
        %551 = vmatprep.mubr.bf16.mxu0 0
        %552 = vmatmul.mubr.bf16.gmra.mrb[0].mxu0 %v517
        %v553 = vpop.f32.mrb[0].mxu0
        %v554 = vadd.f32 0.0, %v553
        %v555 = vpop.f32.mrb[0].mxu0
        %v556 = vpop.f32.mrb[0].mxu0
        %v557 = vadd.f32 0.0, %v556
        %v558 = vpop.f32.mrb[0].mxu0
        %559 = vdwg.mxu0
        %v560 = vpack.c.bf16 %v557, %v554
        %v561 = vld [vmem:[%s3] sm:$0xff]
        %v562 = vld [vmem:[%s3 + $0x8] sm:$0xff]
        %v565 = vunpack.c.l.b16 %v561
        %v566 = vunpack.c.h.b16 %v561
        %v567 = vunpack.c.l.b16 %v562
        %v568 = vunpack.c.h.b16 %v562
        %v569 = vpack.c.b16 %v567, %v565
        %v570 = vpack.c.b16 %v568, %v566
        %vm573 = vcmask 130048
        %v575 = vsel %vm573, %v560, 0
        %577 = vmatprep.subr.bf16.mxu0 %v570
        %578 = vmatpush1.bf16.msra.mxu0 %v569
        %579 = vmatprep.subr.bf16.mxu0 0
        %580 = vmatpush1.bf16.msra.mxu0 0
        %581 = vmatprep.subr.bf16.mxu0 0
        %582 = vmatpush1.bf16.msra.mxu0 0
        %583 = vmatprep.subr.bf16.mxu0 0
        %584 = vmatpush1.bf16.msra.mxu0 0
        %585 = vmatprep.subr.bf16.mxu0 0
        %586 = vmatpush1.bf16.msra.mxu0 0
        %587 = vmatprep.subr.bf16.mxu0 0
        %588 = vmatpush1.bf16.msra.mxu0 0
        %589 = vmatprep.subr.bf16.mxu0 0
        %590 = vmatpush1.bf16.msra.mxu0 0
        %591 = vmatprep.subr.bf16.mxu0 0
        %592 = vmatpush1.bf16.msra.mxu0 0
        %593 = vmatprep.subr.bf16.mxu0 0
        %594 = vmatpush1.bf16.msra.mxu0 0
        %595 = vmatprep.subr.bf16.mxu0 0
        %596 = vmatpush1.bf16.msra.mxu0 0
        %597 = vmatprep.subr.bf16.mxu0 0
        %598 = vmatpush1.bf16.msra.mxu0 0
        %599 = vmatprep.subr.bf16.mxu0 0
        %600 = vmatpush1.bf16.msra.mxu0 0
        %601 = vmatprep.subr.bf16.mxu0 0
        %602 = vmatpush1.bf16.msra.mxu0 0
        %603 = vmatprep.subr.bf16.mxu0 0
        %604 = vmatpush1.bf16.msra.mxu0 0
        %605 = vmatprep.subr.bf16.mxu0 0
        %606 = vmatpush1.bf16.msra.mxu0 0
        %607 = vmatprep.subr.bf16.mxu0 0
        %608 = vmatpush1.bf16.msra.mxu0 0
        %609 = vmatprep.mubr.bf16.mxu0 0
        %610 = vmatmul.mubr.bf16.gmra.mrb[0].mxu0 %v575
        %v611 = vpop.f32.mrb[0].mxu0
        %v612 = vadd.f32 0.0, %v611
        %v613 = vpop.f32.mrb[0].mxu0
        %v614 = vadd.f32 0.0, %v613
        %v615 = vpop.f32.mrb[0].mxu0
        %v616 = vadd.f32 0.0, %v615
        %v617 = vpop.f32.mrb[0].mxu0
        %v618 = vadd.f32 0.0, %v617
        %619 = vdwg.mxu0
        %v620 = vpack.c.bf16 %v616, %v612
        %v621 = vpack.c.bf16 %v618, %v614
        %622 = vst [vmem:[#allocation2 + $0x8] sm:$0xff] %v620
        %623 = vst.msk [vmem:[#allocation2 + $0x10] sm:$0xff] %vm573, %v621
        %v624 = vld [vmem:[#allocation2] sm:$0xf]
        %v625 = vld [vmem:[#allocation2 + $0x8] sm:$0xf]
        %v626 = vld [vmem:[#allocation2 + $0x10] sm:$0xf]
        %v627 = vld [vmem:[#allocation2] sm:$0xf0]
        %v628 = vld [vmem:[#allocation2 + $0x8] sm:$0xf0]
        %v629 = vld [vmem:[#allocation2] sm:$0xf0]
        %v630 = vld [vmem:[#allocation2 + $0x8] sm:$0xf0]
        %v631 = vld [vmem:[#allocation2 + $0x10] sm:$0xf0]
        %v635 = vrot.slane %v624, 4
        %v636 = vrot.slane %v625, 4
        %v637 = vrot.slane %v626, 4
        %638 = vrot.lane.b32.xlu0 %v635, 127
        %v639 = vpop.permute.xlu0 %638
        %640 = vrot.lane.b32.xlu0 %v636, 127
        %v641 = vpop.permute.xlu0 %640
        %642 = vrot.lane.b32.xlu0 %v637, 127
        %v643 = vpop.permute.xlu0 %642
        %vm644 = vcmask 1039360
        %v645 = vsel %vm644, %v639, %v641
        %v646 = vsel %vm644, %v641, %v643
        %647 = vrot.lane.b32.xlu0 %v624, 126
        %v648 = vpop.permute.xlu0 %647
        %649 = vrot.lane.b32.xlu0 %v625, 126
        %v650 = vpop.permute.xlu0 %649
        %651 = vrot.lane.b32.xlu0 %v626, 126
        %v652 = vpop.permute.xlu0 %651
        %vm653 = vcmask 1031168
        %v654 = vsel %vm653, %v648, %v650
        %v655 = vsel %vm653, %v650, %v652
        %656 = vrot.lane.b32.xlu0 %v635, 116
        %v657 = vpop.permute.xlu0 %656
        %658 = vrot.lane.b32.xlu0 %v636, 116
        %v659 = vpop.permute.xlu0 %658
        %660 = vrot.lane.b32.xlu0 %v637, 116
        %v661 = vpop.permute.xlu0 %660
        %vm662 = vcmask 949248
        %v663 = vsel %vm662, %v657, %v659
        %v664 = vsel %vm662, %v659, %v661
        %665 = vrot.lane.b32.xlu0 %v625, 115
        %v666 = vpop.permute.xlu0 %665
        %667 = vrot.lane.b32.xlu0 %v626, 115
        %v668 = vpop.permute.xlu0 %667
        %vm669 = vcmask 941056
        %v670 = vsel %vm669, %v666, %v668
        %671 = vrot.lane.b32.xlu0 %v636, 114
        %v672 = vpop.permute.xlu0 %671
        %673 = vrot.lane.b32.xlu0 %v637, 114
        %v674 = vpop.permute.xlu0 %673
        %vm675 = vcmask 932864
        %v676 = vsel %vm675, %v672, %v674
        %677 = vrot.lane.b32.xlu0 %v625, 104
        %v678 = vpop.permute.xlu0 %677
        %679 = vrot.lane.b32.xlu0 %v626, 104
        %v680 = vpop.permute.xlu0 %679
        %vm681 = vcmask 850944
        %v682 = vsel %vm681, %v678, %v680
        %683 = vrot.lane.b32.xlu0 %v636, 103
        %v684 = vpop.permute.xlu0 %683
        %685 = vrot.lane.b32.xlu0 %v637, 103
        %v686 = vpop.permute.xlu0 %685
        %vm687 = vcmask 842752
        %v688 = vsel %vm687, %v684, %v686
        %689 = vrot.lane.b32.xlu0 %v625, 102
        %v690 = vpop.permute.xlu0 %689
        %691 = vrot.lane.b32.xlu0 %v626, 102
        %v692 = vpop.permute.xlu0 %691
        %vm693 = vcmask 834560
        %v694 = vsel %vm693, %v690, %v692
        %697 = vrot.lane.b32.xlu0 %v627, 13
        %v698 = vpop.permute.xlu0 %697
        %699 = vrot.lane.b32.xlu0 %v628, 13
        %v700 = vpop.permute.xlu0 %699
        %vm701 = vcmask 105472
        %v702 = vsel %vm701, %v698, %v700
        %v703 = vrot.slane %v627, 4
        %v704 = vrot.slane %v628, 4
        %705 = vrot.lane.b32.xlu0 %v703, 11
        %v706 = vpop.permute.xlu0 %705
        %707 = vrot.lane.b32.xlu0 %v704, 11
        %v708 = vpop.permute.xlu0 %707
        %vm709 = vcmask 89088
        %v710 = vsel %vm709, %v706, %v708
        %711 = vrot.lane.b32.xlu0 %v627, 9
        %v712 = vpop.permute.xlu0 %711
        %713 = vrot.lane.b32.xlu0 %v628, 9
        %v714 = vpop.permute.xlu0 %713
        %vm715 = vcmask 72704
        %v716 = vsel %vm715, %v712, %v714
        %v720 = vrot.slane %v629, 4
        %v721 = vrot.slane %v630, 4
        %v722 = vrot.slane %v631, 4
        %723 = vrot.lane.b32.xlu0 %v720, 117
        %v724 = vpop.permute.xlu0 %723
        %725 = vrot.lane.b32.xlu0 %v721, 117
        %v726 = vpop.permute.xlu0 %725
        %727 = vrot.lane.b32.xlu0 %v722, 117
        %v728 = vpop.permute.xlu0 %727
        %vm729 = vcmask 957440
        %v730 = vsel %vm729, %v724, %v726
        %v731 = vsel %vm729, %v726, %v728
        %732 = vrot.lane.b32.xlu0 %v630, 115
        %v733 = vpop.permute.xlu0 %732
        %734 = vrot.lane.b32.xlu0 %v631, 115
        %v735 = vpop.permute.xlu0 %734
        %v736 = vsel %vm669, %v733, %v735
        %737 = vrot.lane.b32.xlu0 %v721, 113
        %v738 = vpop.permute.xlu0 %737
        %739 = vrot.lane.b32.xlu0 %v722, 113
        %v740 = vpop.permute.xlu0 %739
        %vm741 = vcmask 924672
        %v742 = vsel %vm741, %v738, %v740
        %743 = vrot.lane.b32.xlu0 %v630, 93
        %v744 = vpop.permute.xlu0 %743
        %745 = vrot.lane.b32.xlu0 %v631, 93
        %v746 = vpop.permute.xlu0 %745
        %vm747 = vcmask 760832
        %v748 = vsel %vm747, %v744, %v746
        %vm749 = vcmask 1043456
        %v752 = vsel %vm749, %v624, %v645
        %v755 = vsel %vm749, %v625, %v646
        %v758 = vsel %vm749, %v626, %v643
        %v761 = vsel %vm749, %v654, %v663
        %v764 = vsel %vm749, %v655, %v664
        %v767 = vsel %vm749, %v652, %v661
        %v770 = vsel %vm749, %v666, %v672
        %v773 = vsel %vm749, %v670, %v676
        %v776 = vsel %vm749, %v668, %v674
        %v779 = vsel %vm749, %v678, %v684
        %v782 = vsel %vm749, %v682, %v688
        %v785 = vsel %vm749, %v680, %v686
        %v788 = vsel %vm749, %v690, %v698
        %v791 = vsel %vm749, %v694, %v702
        %v794 = vsel %vm749, %v692, %v700
        %v797 = vsel %vm749, %v706, %v712
        %v800 = vsel %vm749, %v710, %v716
        %v803 = vsel %vm749, %v708, %v714
        %v806 = vsel %vm749, %v730, %v733
        %v809 = vsel %vm749, %v731, %v736
        %v812 = vsel %vm749, %v728, %v735
        %v815 = vsel %vm749, %v738, %v744
        %v818 = vsel %vm749, %v742, %v748
        %v821 = vsel %vm749, %v740, %v746
        %822 = vrot.lane.b32.xlu0 %v630, 126
        %v823 = vpop.permute.xlu0 %822
        %824 = vrot.lane.b32.xlu0 %v631, 126
        %v825 = vpop.permute.xlu0 %824
        %v826 = vsel %vm653, %v823, %v825
        %v829 = vsel %vm749, %v721, %v826
        %v832 = vsel %vm749, %v722, %v825
        %835 = vrot.lane.b32.xlu0 %v829, 91
        %v836 = vpop.permute.xlu0 %835
        %837 = vrot.lane.b32.xlu0 %v832, 91
        %v838 = vpop.permute.xlu0 %837
        %vm839 = vcmask 744448
        %v840 = vsel %vm839, %v836, %v838
        %v841 = vld [vmem:[%s4] sm:$0xff]
        %v842 = vld [vmem:[%s4 + $0x8] sm:$0xff]
        %v845 = vunpack.c.l.b16 %v841
        %v846 = vunpack.c.h.b16 %v841
        %v847 = vunpack.c.l.b16 %v842
        %v848 = vunpack.c.h.b16 %v842
        %v849 = vpack.c.b16 %v847, %v845
        %v850 = vpack.c.b16 %v848, %v846
        %876 = vrot.lane.b32.xlu0 %v752, 13
        %v877 = vpop.permute.xlu0 %876
        %878 = vrot.lane.b32.xlu0 %v755, 13
        %v879 = vpop.permute.xlu0 %878
        %880 = vrot.lane.b32.xlu0 %v758, 13
        %v881 = vpop.permute.xlu0 %880
        %882 = vrot.lane.b32.xlu0 %v761, 13
        %v883 = vpop.permute.xlu0 %882
        %884 = vrot.lane.b32.xlu0 %v764, 13
        %v885 = vpop.permute.xlu0 %884
        %886 = vrot.lane.b32.xlu0 %v767, 13
        %v887 = vpop.permute.xlu0 %886
        %888 = vrot.lane.b32.xlu0 %v770, 13
        %v889 = vpop.permute.xlu0 %888
        %890 = vrot.lane.b32.xlu0 %v773, 13
        %v891 = vpop.permute.xlu0 %890
        %892 = vrot.lane.b32.xlu0 %v776, 13
        %v893 = vpop.permute.xlu0 %892
        %894 = vrot.lane.b32.xlu0 %v779, 13
        %v895 = vpop.permute.xlu0 %894
        %896 = vrot.lane.b32.xlu0 %v782, 13
        %v897 = vpop.permute.xlu0 %896
        %898 = vrot.lane.b32.xlu0 %v785, 13
        %v899 = vpop.permute.xlu0 %898
        %900 = vrot.lane.b32.xlu0 %v788, 13
        %v901 = vpop.permute.xlu0 %900
        %902 = vrot.lane.b32.xlu0 %v791, 13
        %v903 = vpop.permute.xlu0 %902
        %904 = vrot.lane.b32.xlu0 %v794, 13
        %v905 = vpop.permute.xlu0 %904
        %906 = vrot.lane.b32.xlu0 %v797, 13
        %v907 = vpop.permute.xlu0 %906
        %908 = vrot.lane.b32.xlu0 %v800, 13
        %v909 = vpop.permute.xlu0 %908
        %910 = vrot.lane.b32.xlu0 %v803, 13
        %v911 = vpop.permute.xlu0 %910
        %912 = vrot.lane.b32.xlu0 %v806, 13
        %v913 = vpop.permute.xlu0 %912
        %914 = vrot.lane.b32.xlu0 %v809, 13
        %v915 = vpop.permute.xlu0 %914
        %916 = vrot.lane.b32.xlu0 %v812, 13
        %v917 = vpop.permute.xlu0 %916
        %918 = vrot.lane.b32.xlu0 %v815, 13
        %v919 = vpop.permute.xlu0 %918
        %920 = vrot.lane.b32.xlu0 %v818, 13
        %v921 = vpop.permute.xlu0 %920
        %922 = vrot.lane.b32.xlu0 %v821, 13
        %v923 = vpop.permute.xlu0 %922
        %924 = vrot.lane.b32.xlu0 %v836, 13
        %v925 = vpop.permute.xlu0 %924
        %926 = vrot.lane.b32.xlu0 %v840, 13
        %v927 = vpop.permute.xlu0 %926
        %928 = vrot.lane.b32.xlu0 %v838, 13
        %v929 = vpop.permute.xlu0 %928
        %v930 = vsel %vm701, %v877, %v879
        %v931 = vsel %vm701, %v879, %v881
        %v932 = vsel %vm701, %v883, %v885
        %v933 = vsel %vm701, %v885, %v887
        %v934 = vsel %vm701, %v889, %v891
        %v935 = vsel %vm701, %v891, %v893
        %v936 = vsel %vm701, %v895, %v897
        %v937 = vsel %vm701, %v897, %v899
        %v938 = vsel %vm701, %v901, %v903
        %v939 = vsel %vm701, %v903, %v905
        %v940 = vsel %vm701, %v907, %v909
        %v941 = vsel %vm701, %v909, %v911
        %v942 = vsel %vm701, %v913, %v915
        %v943 = vsel %vm701, %v915, %v917
        %v944 = vsel %vm701, %v919, %v921
        %v945 = vsel %vm701, %v921, %v923
        %v946 = vsel %vm701, %v925, %v927
        %v947 = vsel %vm701, %v927, %v929
        %v967 = vsel %vm573, %v850, 0
        %969 = vmatprep.subr.bf16.mxu0 %v931
        %970 = vmatpush1.bf16.msra.mxu0 %v930
        %971 = vmatprep.subr.bf16.mxu0 %v933
        %972 = vmatpush1.bf16.msra.mxu0 %v932
        %973 = vmatprep.subr.bf16.mxu0 %v935
        %974 = vmatpush1.bf16.msra.mxu0 %v934
        %975 = vmatprep.subr.bf16.mxu0 %v937
        %976 = vmatpush1.bf16.msra.mxu0 %v936
        %977 = vmatprep.subr.bf16.mxu0 %v939
        %978 = vmatpush1.bf16.msra.mxu0 %v938
        %979 = vmatprep.subr.bf16.mxu0 %v941
        %980 = vmatpush1.bf16.msra.mxu0 %v940
        %981 = vmatprep.subr.bf16.mxu0 %v943
        %982 = vmatpush1.bf16.msra.mxu0 %v942
        %983 = vmatprep.subr.bf16.mxu0 %v945
        %984 = vmatpush1.bf16.msra.mxu0 %v944
        %985 = vmatprep.subr.bf16.mxu0 %v947
        %986 = vmatpush1.bf16.msra.mxu0 %v946
        %987 = vmatprep.subr.bf16.mxu0 0
        %988 = vmatpush1.bf16.msra.mxu0 0
        %989 = vmatprep.subr.bf16.mxu0 0
        %990 = vmatpush1.bf16.msra.mxu0 0
        %991 = vmatprep.subr.bf16.mxu0 0
        %992 = vmatpush1.bf16.msra.mxu0 0
        %993 = vmatprep.subr.bf16.mxu0 0
        %994 = vmatpush1.bf16.msra.mxu0 0
        %995 = vmatprep.subr.bf16.mxu0 0
        %996 = vmatpush1.bf16.msra.mxu0 0
        %997 = vmatprep.subr.bf16.mxu0 0
        %998 = vmatpush1.bf16.msra.mxu0 0
        %999 = vmatprep.subr.bf16.mxu0 0
        %1000 = vmatpush1.bf16.msra.mxu0 0
        %1001 = vmatprep.mubr.bf16.mxu0 %v967
        %1002 = vmatmul.mubr.bf16.gmra.mrb[0].mxu0 %v849
        %v1003 = vpop.f32.mrb[0].mxu0
        %v1004 = vadd.f32 0.0, %v1003
        %v1005 = vpop.f32.mrb[0].mxu0
        %v1006 = vpop.f32.mrb[0].mxu0
        %v1007 = vadd.f32 0.0, %v1006
        %v1008 = vpop.f32.mrb[0].mxu0
        %1009 = vdwg.mxu0
        %v1010 = vld [vmem:[%s5] sm:$0xf]
        %v1011 = vld [vmem:[%s5 + $0x4] sm:$0xf]
        %v1012 = vld [vmem:[%s487] sm:$0xf]
        %v1013 = vld [vmem:[%s487 + $0x4] sm:$0xf]
        %v1014 = vld [vmem:[%s487 + $0x8] sm:$0xf]
        %v1015 = vld [vmem:[%s487 + $0xc] sm:$0xf]
        %v1018 = vunpack.c.l.b16 %v1010
        %v1019 = vunpack.c.l.b16 %v1011
        %v1020 = vpack.c.b16 %v1019, %v1018
        %v1025 = vunpack.c.l.b16 %v1012
        %v1026 = vunpack.c.l.b16 %v1013
        %v1027 = vunpack.c.l.b16 %v1014
        %v1028 = vunpack.c.l.b16 %v1015
        %v1029 = vpack.c.b16 %v1026, %v1025
        %v1030 = vpack.c.b16 %v1028, %v1027
        %v1034 = vsel %vm515, %v1020, 0
        %1036 = vmatprep.subr.bf16.mxu0 0
        %1037 = vmatpush1.bf16.msra.mxu0 %v1029
        %1038 = vmatprep.subr.bf16.mxu0 0
        %1039 = vmatpush1.bf16.msra.mxu0 %v1030
        %1040 = vmatprep.subr.bf16.mxu0 0
        %1041 = vmatpush1.bf16.msra.mxu0 0
        %1042 = vmatprep.subr.bf16.mxu0 0
        %1043 = vmatpush1.bf16.msra.mxu0 0
        %1044 = vmatprep.subr.bf16.mxu0 0
        %1045 = vmatpush1.bf16.msra.mxu0 0
        %1046 = vmatprep.subr.bf16.mxu0 0
        %1047 = vmatpush1.bf16.msra.mxu0 0
        %1048 = vmatprep.subr.bf16.mxu0 0
        %1049 = vmatpush1.bf16.msra.mxu0 0
        %1050 = vmatprep.subr.bf16.mxu0 0
        %1051 = vmatpush1.bf16.msra.mxu0 0
        %1052 = vmatprep.subr.bf16.mxu0 0
        %1053 = vmatpush1.bf16.msra.mxu0 0
        %1054 = vmatprep.subr.bf16.mxu0 0
        %1055 = vmatpush1.bf16.msra.mxu0 0
        %1056 = vmatprep.subr.bf16.mxu0 0
        %1057 = vmatpush1.bf16.msra.mxu0 0
        %1058 = vmatprep.subr.bf16.mxu0 0
        %1059 = vmatpush1.bf16.msra.mxu0 0
        %1060 = vmatprep.subr.bf16.mxu0 0
        %1061 = vmatpush1.bf16.msra.mxu0 0
        %1062 = vmatprep.subr.bf16.mxu0 0
        %1063 = vmatpush1.bf16.msra.mxu0 0
        %1064 = vmatprep.subr.bf16.mxu0 0
        %1065 = vmatpush1.bf16.msra.mxu0 0
        %1066 = vmatprep.subr.bf16.mxu0 0
        %1067 = vmatpush1.bf16.msra.mxu0 0
        %1068 = vmatprep.mubr.bf16.mxu0 0
        %1069 = vmatmul.mubr.bf16.gmra.mrb[0].mxu0 %v1034
        %v1070 = vpop.f32.mrb[0].mxu0
        %v1071 = vadd.f32 0.0, %v1070
        %v1072 = vpop.f32.mrb[0].mxu0
        %v1073 = vpop.f32.mrb[0].mxu0
        %v1074 = vadd.f32 0.0, %v1073
        %v1075 = vpop.f32.mrb[0].mxu0
        %1076 = vdwg.mxu0
        %v1077 = vld [vmem:[%s6] sm:$0xff]
        %v1078 = vld [vmem:[%s6 + $0x8] sm:$0xff]
        %v1079 = vld [vmem:[%s7] sm:$0xff]
        %v1080 = vld [vmem:[%s7 + $0x8] sm:$0xff]
        %1083 = vrot.lane.b32.xlu0 %v1071, 26
        %v1084 = vpop.permute.xlu0 %1083
        %1085 = vrot.lane.b32.xlu0 %v1074, 26
        %v1086 = vpop.permute.xlu0 %1085
        %v1089 = vadd.f32 %v1004, %v1084
        %v1090 = vadd.f32 %v1007, %v1086
        %1092 = vset.pattern.permute.xlu0 0
        %1093 = vperm.xlu0 %1092, %v1077
        %v1094 = vpop.permute.xlu0 %1093
        %1097 = vset.pattern.permute.xlu0 0
        %1098 = vperm.xlu0 %1097, %v1078
        %v1099 = vpop.permute.xlu0 %1098
        %v1101 = vadd.f32 %v1089, %v1094
        %v1102 = vadd.f32 %v1090, %v1099
        %vm1103 = vcmp.ge.f32.partialorder %v1101, 0.0
        %vm1104 = vcmp.ge.f32.partialorder %v1102, 0.0
        %1106 = vset.pattern.permute.xlu0 0
        %1107 = vperm.xlu0 %1106, %v1079
        %v1108 = vpop.permute.xlu0 %1107
        %1111 = vset.pattern.permute.xlu0 0
        %1112 = vperm.xlu0 %1111, %v1080
        %v1113 = vpop.permute.xlu0 %1112
        %v1115 = vmul.f32 %v1108, %v1101
        %v1116 = vmul.f32 %v1113, %v1102
        %v1117 = vsel %vm1103, %v1101, %v1115
        %v1118 = vsel %vm1104, %v1102, %v1116
        %v1119 = vpack.c.bf16 %v1118, %v1117
        %vm1120 = vcmask 277712
        %1121 = vst.msk [vmem:[#allocation2 + $0x8] sm:$0xff] %vm1120, %v1119
        %1122 = vrot.lane.b32.xlu0 %v1071, 30
        %v1123 = vpop.permute.xlu0 %1122
        %1124 = vrot.lane.b32.xlu0 %v1074, 30
        %v1125 = vpop.permute.xlu0 %1124
        %v1128 = vadd.f32 %v1004, %v1123
        %v1129 = vadd.f32 %v1007, %v1125
        %v1130 = vadd.f32 %v1128, %v1094
        %v1131 = vadd.f32 %v1129, %v1099
        %vm1132 = vcmp.ge.f32.partialorder %v1130, 0.0
        %vm1133 = vcmp.ge.f32.partialorder %v1131, 0.0
        %v1134 = vmul.f32 %v1108, %v1130
        %v1135 = vmul.f32 %v1113, %v1131
        %v1136 = vsel %vm1132, %v1130, %v1134
        %v1137 = vsel %vm1133, %v1131, %v1135
        %v1138 = vpack.c.bf16 %v1137, %v1136
        %vm1139 = vcmask 376112
        %1140 = vst.msk [vmem:[#allocation2 + $0x8] sm:$0xff] %vm1139, %v1138
        %1141 = vrot.lane.b32.xlu0 %v1071, 34
        %v1142 = vpop.permute.xlu0 %1141
        %1143 = vrot.lane.b32.xlu0 %v1074, 34
        %v1144 = vpop.permute.xlu0 %1143
        %v1147 = vadd.f32 %v1004, %v1142
        %v1148 = vadd.f32 %v1007, %v1144
        %v1149 = vadd.f32 %v1147, %v1094
        %v1150 = vadd.f32 %v1148, %v1099
        %vm1151 = vcmp.ge.f32.partialorder %v1149, 0.0
        %vm1152 = vcmp.ge.f32.partialorder %v1150, 0.0
        %v1153 = vmul.f32 %v1108, %v1149
        %v1154 = vmul.f32 %v1113, %v1150
        %v1155 = vsel %vm1151, %v1149, %v1153
        %v1156 = vsel %vm1152, %v1150, %v1154
        %v1157 = vpack.c.bf16 %v1156, %v1155
        %vm1158 = vcmask 474512
        %1159 = vst.msk [vmem:[#allocation2 + $0x8] sm:$0xff] %vm1158, %v1157
        %1160 = vrot.lane.b32.xlu0 %v1071, 38
        %v1161 = vpop.permute.xlu0 %1160
        %1162 = vrot.lane.b32.xlu0 %v1074, 38
        %v1163 = vpop.permute.xlu0 %1162
        %v1166 = vadd.f32 %v1004, %v1161
        %v1167 = vadd.f32 %v1007, %v1163
        %v1168 = vadd.f32 %v1166, %v1094
        %v1169 = vadd.f32 %v1167, %v1099
        %vm1170 = vcmp.ge.f32.partialorder %v1168, 0.0
        %vm1171 = vcmp.ge.f32.partialorder %v1169, 0.0
        %v1172 = vmul.f32 %v1108, %v1168
        %v1173 = vmul.f32 %v1113, %v1169
        %v1174 = vsel %vm1170, %v1168, %v1172
        %v1175 = vsel %vm1171, %v1169, %v1173
        %v1176 = vpack.c.bf16 %v1175, %v1174
        %vm1177 = vcmask 572912
        %1178 = vst.msk [vmem:[#allocation2 + $0x8] sm:$0xff] %vm1177, %v1176
        %1179 = vrot.lane.b32.xlu0 %v1071, 42
        %v1180 = vpop.permute.xlu0 %1179
        %1181 = vrot.lane.b32.xlu0 %v1074, 42
        %v1182 = vpop.permute.xlu0 %1181
        %v1185 = vadd.f32 %v1004, %v1180
        %v1186 = vadd.f32 %v1007, %v1182
        %v1187 = vadd.f32 %v1185, %v1094
        %v1188 = vadd.f32 %v1186, %v1099
        %vm1189 = vcmp.ge.f32.partialorder %v1187, 0.0
        %vm1190 = vcmp.ge.f32.partialorder %v1188, 0.0
        %v1191 = vmul.f32 %v1108, %v1187
        %v1192 = vmul.f32 %v1113, %v1188
        %v1193 = vsel %vm1189, %v1187, %v1191
        %v1194 = vsel %vm1190, %v1188, %v1192
        %v1195 = vpack.c.bf16 %v1194, %v1193
        %vm1196 = vcmask 671312
        %1197 = vst.msk [vmem:[#allocation2 + $0x8] sm:$0xff] %vm1196, %v1195
        %1198 = vrot.lane.b32.xlu0 %v1071, 46
        %v1199 = vpop.permute.xlu0 %1198
        %1200 = vrot.lane.b32.xlu0 %v1074, 46
        %v1201 = vpop.permute.xlu0 %1200
        %v1204 = vadd.f32 %v1004, %v1199
        %v1205 = vadd.f32 %v1007, %v1201
        %v1206 = vadd.f32 %v1204, %v1094
        %v1207 = vadd.f32 %v1205, %v1099
        %vm1208 = vcmp.ge.f32.partialorder %v1206, 0.0
        %vm1209 = vcmp.ge.f32.partialorder %v1207, 0.0
        %v1210 = vmul.f32 %v1108, %v1206
        %v1211 = vmul.f32 %v1113, %v1207
        %v1212 = vsel %vm1208, %v1206, %v1210
        %v1213 = vsel %vm1209, %v1207, %v1211
        %v1214 = vpack.c.bf16 %v1213, %v1212
        %vm1215 = vcmask 769712
        %1216 = vst.msk [vmem:[#allocation2 + $0x8] sm:$0xff] %vm1215, %v1214
        %1217 = vrot.lane.b32.xlu0 %v1071, 50
        %v1218 = vpop.permute.xlu0 %1217
        %1219 = vrot.lane.b32.xlu0 %v1074, 50
        %v1220 = vpop.permute.xlu0 %1219
        %v1223 = vadd.f32 %v1004, %v1218
        %v1224 = vadd.f32 %v1007, %v1220
        %v1225 = vadd.f32 %v1223, %v1094
        %v1226 = vadd.f32 %v1224, %v1099
        %vm1227 = vcmp.ge.f32.partialorder %v1225, 0.0
        %vm1228 = vcmp.ge.f32.partialorder %v1226, 0.0
        %v1229 = vmul.f32 %v1108, %v1225
        %v1230 = vmul.f32 %v1113, %v1226
        %v1231 = vsel %vm1227, %v1225, %v1229
        %v1232 = vsel %vm1228, %v1226, %v1230
        %v1233 = vpack.c.bf16 %v1232, %v1231
        %vm1234 = vcmask 868112
        %1235 = vst.msk [vmem:[#allocation2 + $0x8] sm:$0xff] %vm1234, %v1233
        %1236 = vrot.lane.b32.xlu0 %v1071, 54
        %v1237 = vpop.permute.xlu0 %1236
        %1238 = vrot.lane.b32.xlu0 %v1074, 54
        %v1239 = vpop.permute.xlu0 %1238
        %v1242 = vadd.f32 %v1004, %v1237
        %v1243 = vadd.f32 %v1007, %v1239
        %v1244 = vadd.f32 %v1242, %v1094
        %v1245 = vadd.f32 %v1243, %v1099
        %vm1246 = vcmp.ge.f32.partialorder %v1244, 0.0
        %vm1247 = vcmp.ge.f32.partialorder %v1245, 0.0
        %v1248 = vmul.f32 %v1108, %v1244
        %v1249 = vmul.f32 %v1113, %v1245
        %v1250 = vsel %vm1246, %v1244, %v1248
        %v1251 = vsel %vm1247, %v1245, %v1249
        %v1252 = vpack.c.bf16 %v1251, %v1250
        %vm1253 = vcmask 966512
        %1254 = vst.msk [vmem:[#allocation2 + $0x8] sm:$0xff] %vm1253, %v1252
        %v1255 = vld [vmem:[#allocation2] sm:$0xff]
        %v1256 = vld [vmem:[#allocation2 + $0x8] sm:$0xff]
        %v1257 = vld [vmem:[#allocation2 + $0x10] sm:$0xff]
        %1261 = vrot.lane.b32.xlu0 %v1255, 127
        %v1262 = vpop.permute.xlu0 %1261
        %1263 = vrot.lane.b32.xlu0 %v1256, 127
        %v1264 = vpop.permute.xlu0 %1263
        %1265 = vrot.lane.b32.xlu0 %v1257, 127
        %v1266 = vpop.permute.xlu0 %1265
        %v1267 = vsel %vm644, %v1262, %v1264
        %v1268 = vsel %vm644, %v1264, %v1266
        %1269 = vrot.lane.b32.xlu0 %v1255, 126
        %v1270 = vpop.permute.xlu0 %1269
        %1271 = vrot.lane.b32.xlu0 %v1256, 126
        %v1272 = vpop.permute.xlu0 %1271
        %1273 = vrot.lane.b32.xlu0 %v1257, 126
        %v1274 = vpop.permute.xlu0 %1273
        %v1275 = vsel %vm653, %v1270, %v1272
        %v1276 = vsel %vm653, %v1272, %v1274
        %1277 = vrot.lane.b32.xlu0 %v1255, 116
        %v1278 = vpop.permute.xlu0 %1277
        %1279 = vrot.lane.b32.xlu0 %v1256, 116
        %v1280 = vpop.permute.xlu0 %1279
        %1281 = vrot.lane.b32.xlu0 %v1257, 116
        %v1282 = vpop.permute.xlu0 %1281
        %v1283 = vsel %vm662, %v1278, %v1280
        %v1284 = vsel %vm662, %v1280, %v1282
        %1285 = vrot.lane.b32.xlu0 %v1256, 115
        %v1286 = vpop.permute.xlu0 %1285
        %1287 = vrot.lane.b32.xlu0 %v1257, 115
        %v1288 = vpop.permute.xlu0 %1287
        %v1289 = vsel %vm669, %v1286, %v1288
        %1290 = vrot.lane.b32.xlu0 %v1256, 114
        %v1291 = vpop.permute.xlu0 %1290
        %1292 = vrot.lane.b32.xlu0 %v1257, 114
        %v1293 = vpop.permute.xlu0 %1292
        %v1294 = vsel %vm675, %v1291, %v1293
        %1295 = vrot.lane.b32.xlu0 %v1256, 104
        %v1296 = vpop.permute.xlu0 %1295
        %1297 = vrot.lane.b32.xlu0 %v1257, 104
        %v1298 = vpop.permute.xlu0 %1297
        %v1299 = vsel %vm681, %v1296, %v1298
        %1300 = vrot.lane.b32.xlu0 %v1256, 103
        %v1301 = vpop.permute.xlu0 %1300
        %1302 = vrot.lane.b32.xlu0 %v1257, 103
        %v1303 = vpop.permute.xlu0 %1302
        %v1304 = vsel %vm687, %v1301, %v1303
        %1305 = vrot.lane.b32.xlu0 %v1256, 102
        %v1306 = vpop.permute.xlu0 %1305
        %1307 = vrot.lane.b32.xlu0 %v1257, 102
        %v1308 = vpop.permute.xlu0 %1307
        %v1309 = vsel %vm693, %v1306, %v1308
        %v1310 = vld [vmem:[%s8] sm:$0xff]
        %v1311 = vld [vmem:[%s8 + $0x8] sm:$0xff]
        %v1312 = vld [vmem:[%s9] sm:$0xff]
        %v1313 = vld [vmem:[%s9 + $0x8] sm:$0xff]
        %1315 = vset.pattern.permute.xlu0 0
        %1316 = vperm.xlu0 %1315, %v1312
        %v1317 = vpop.permute.xlu0 %1316
        %1320 = vset.pattern.permute.xlu0 0
        %1321 = vperm.xlu0 %1320, %v1313
        %v1322 = vpop.permute.xlu0 %1321
        %v1326 = vunpack.c.l.b16 %v1310
        %v1327 = vunpack.c.h.b16 %v1310
        %v1328 = vunpack.c.l.b16 %v1311
        %v1329 = vunpack.c.h.b16 %v1311
        %v1330 = vpack.c.b16 %v1328, %v1326
        %v1331 = vpack.c.b16 %v1329, %v1327
        %1333 = vrot.lane.b32.xlu0 %v1255, 13
        %v1334 = vpop.permute.xlu0 %1333
        %1335 = vrot.lane.b32.xlu0 %v1256, 13
        %v1336 = vpop.permute.xlu0 %1335
        %1337 = vrot.lane.b32.xlu0 %v1257, 13
        %v1338 = vpop.permute.xlu0 %1337
        %1339 = vrot.lane.b32.xlu0 %v1267, 13
        %v1340 = vpop.permute.xlu0 %1339
        %1341 = vrot.lane.b32.xlu0 %v1268, 13
        %v1342 = vpop.permute.xlu0 %1341
        %1343 = vrot.lane.b32.xlu0 %v1266, 13
        %v1344 = vpop.permute.xlu0 %1343
        %1345 = vrot.lane.b32.xlu0 %v1275, 13
        %v1346 = vpop.permute.xlu0 %1345
        %1347 = vrot.lane.b32.xlu0 %v1276, 13
        %v1348 = vpop.permute.xlu0 %1347
        %1349 = vrot.lane.b32.xlu0 %v1274, 13
        %v1350 = vpop.permute.xlu0 %1349
        %1351 = vrot.lane.b32.xlu0 %v1283, 13
        %v1352 = vpop.permute.xlu0 %1351
        %1353 = vrot.lane.b32.xlu0 %v1284, 13
        %v1354 = vpop.permute.xlu0 %1353
        %1355 = vrot.lane.b32.xlu0 %v1282, 13
        %v1356 = vpop.permute.xlu0 %1355
        %1357 = vrot.lane.b32.xlu0 %v1286, 13
        %v1358 = vpop.permute.xlu0 %1357
        %1359 = vrot.lane.b32.xlu0 %v1289, 13
        %v1360 = vpop.permute.xlu0 %1359
        %1361 = vrot.lane.b32.xlu0 %v1288, 13
        %v1362 = vpop.permute.xlu0 %1361
        %1363 = vrot.lane.b32.xlu0 %v1291, 13
        %v1364 = vpop.permute.xlu0 %1363
        %1365 = vrot.lane.b32.xlu0 %v1294, 13
        %v1366 = vpop.permute.xlu0 %1365
        %1367 = vrot.lane.b32.xlu0 %v1293, 13
        %v1368 = vpop.permute.xlu0 %1367
        %1369 = vrot.lane.b32.xlu0 %v1296, 13
        %v1370 = vpop.permute.xlu0 %1369
        %1371 = vrot.lane.b32.xlu0 %v1299, 13
        %v1372 = vpop.permute.xlu0 %1371
        %1373 = vrot.lane.b32.xlu0 %v1298, 13
        %v1374 = vpop.permute.xlu0 %1373
        %1375 = vrot.lane.b32.xlu0 %v1301, 13
        %v1376 = vpop.permute.xlu0 %1375
        %1377 = vrot.lane.b32.xlu0 %v1304, 13
        %v1378 = vpop.permute.xlu0 %1377
        %1379 = vrot.lane.b32.xlu0 %v1303, 13
        %v1380 = vpop.permute.xlu0 %1379
        %1381 = vrot.lane.b32.xlu0 %v1306, 13
        %v1382 = vpop.permute.xlu0 %1381
        %1383 = vrot.lane.b32.xlu0 %v1309, 13
        %v1384 = vpop.permute.xlu0 %1383
        %1385 = vrot.lane.b32.xlu0 %v1308, 13
        %v1386 = vpop.permute.xlu0 %1385
        %v1387 = vsel %vm701, %v1334, %v1336
        %v1388 = vsel %vm701, %v1336, %v1338
        %v1389 = vsel %vm701, %v1340, %v1342
        %v1390 = vsel %vm701, %v1342, %v1344
        %v1391 = vsel %vm701, %v1346, %v1348
        %v1392 = vsel %vm701, %v1348, %v1350
        %v1393 = vsel %vm701, %v1352, %v1354
        %v1394 = vsel %vm701, %v1354, %v1356
        %v1395 = vsel %vm701, %v1358, %v1360
        %v1396 = vsel %vm701, %v1360, %v1362
        %v1397 = vsel %vm701, %v1364, %v1366
        %v1398 = vsel %vm701, %v1366, %v1368
        %v1399 = vsel %vm701, %v1370, %v1372
        %v1400 = vsel %vm701, %v1372, %v1374
        %v1401 = vsel %vm701, %v1376, %v1378
        %v1402 = vsel %vm701, %v1378, %v1380
        %v1403 = vsel %vm701, %v1382, %v1384
        %v1404 = vsel %vm701, %v1384, %v1386
        %v1424 = vsel %vm573, %v1331, 0
        %1426 = vmatprep.subr.bf16.mxu0 %v1388
        %1427 = vmatpush1.bf16.msra.mxu0 %v1387
        %1428 = vmatprep.subr.bf16.mxu0 %v1390
        %1429 = vmatpush1.bf16.msra.mxu0 %v1389
        %1430 = vmatprep.subr.bf16.mxu0 %v1392
        %1431 = vmatpush1.bf16.msra.mxu0 %v1391
        %1432 = vmatprep.subr.bf16.mxu0 %v1394
        %1433 = vmatpush1.bf16.msra.mxu0 %v1393
        %1434 = vmatprep.subr.bf16.mxu0 %v1396
        %1435 = vmatpush1.bf16.msra.mxu0 %v1395
        %1436 = vmatprep.subr.bf16.mxu0 %v1398
        %1437 = vmatpush1.bf16.msra.mxu0 %v1397
        %1438 = vmatprep.subr.bf16.mxu0 %v1400
        %1439 = vmatpush1.bf16.msra.mxu0 %v1399
        %1440 = vmatprep.subr.bf16.mxu0 %v1402
        %1441 = vmatpush1.bf16.msra.mxu0 %v1401
        %1442 = vmatprep.subr.bf16.mxu0 %v1404
        %1443 = vmatpush1.bf16.msra.mxu0 %v1403
        %1444 = vmatprep.subr.bf16.mxu0 0
        %1445 = vmatpush1.bf16.msra.mxu0 0
        %1446 = vmatprep.subr.bf16.mxu0 0
        %1447 = vmatpush1.bf16.msra.mxu0 0
        %1448 = vmatprep.subr.bf16.mxu0 0
        %1449 = vmatpush1.bf16.msra.mxu0 0
        %1450 = vmatprep.subr.bf16.mxu0 0
        %1451 = vmatpush1.bf16.msra.mxu0 0
        %1452 = vmatprep.subr.bf16.mxu0 0
        %1453 = vmatpush1.bf16.msra.mxu0 0
        %1454 = vmatprep.subr.bf16.mxu0 0
        %1455 = vmatpush1.bf16.msra.mxu0 0
        %1456 = vmatprep.subr.bf16.mxu0 0
        %1457 = vmatpush1.bf16.msra.mxu0 0
        %1458 = vmatprep.mubr.bf16.mxu0 %v1424
        %1459 = vmatmul.mubr.bf16.gmra.mrb[0].mxu0 %v1330
        %v1460 = vpop.f32.mrb[0].mxu0
        %v1461 = vadd.f32 %v1317, %v1460
        %v1462 = vpop.f32.mrb[0].mxu0
        %v1463 = vadd.f32 %v1317, %v1462
        %v1464 = vpop.f32.mrb[0].mxu0
        %v1465 = vadd.f32 %v1322, %v1464
        %v1466 = vpop.f32.mrb[0].mxu0
        %v1467 = vadd.f32 %v1322, %v1466
        %1468 = vdwg.mxu0
        %vm1469 = vcmp.ge.f32.partialorder %v1461, 0.0
        %vm1470 = vcmp.ge.f32.partialorder %v1463, 0.0
        %vm1471 = vcmp.ge.f32.partialorder %v1465, 0.0
        %vm1472 = vcmp.ge.f32.partialorder %v1467, 0.0
        %v1473 = vld [vmem:[#allocation3] sm:$0x1]
        %v1475 = vlaneseq
        %v1476 = vshrl.u32 %v1475, 7
        %v1477 = vsub.s32 0, %v1476
        %v1478 = vrot.slane %v1473, %v1477
        %1479 = vset.pattern.permute.xlu0 0
        %1480 = vperm.xlu0 %1479, %v1478
        %v1481 = vpop.permute.xlu0 %1480
        %v1483 = vmul.f32 %v1481, %v1461
        %v1484 = vmul.f32 %v1481, %v1463
        %v1485 = vmul.f32 %v1481, %v1465
        %v1486 = vmul.f32 %v1481, %v1467
        %v1487 = vsel %vm1469, %v1461, %v1483
        %v1488 = vsel %vm1470, %v1463, %v1484
        %v1489 = vsel %vm1471, %v1465, %v1485
        %v1490 = vsel %vm1472, %v1467, %v1486
        %v1491 = vld [vmem:[%s11] sm:$0x1]
        %v1492 = vpack.c.bf16 %v1489, %v1487
        %v1493 = vpack.c.bf16 %v1490, %v1488
        %v1495 = vsel %vm573, %v1491, 0
        %1497 = vmatprep.subr.bf16.mxu0 %v1493
        %1498 = vmatpush1.bf16.msra.mxu0 %v1492
        %1499 = vmatprep.subr.bf16.mxu0 0
        %1500 = vmatpush1.bf16.msra.mxu0 0
        %1501 = vmatprep.subr.bf16.mxu0 0
        %1502 = vmatpush1.bf16.msra.mxu0 0
        %1503 = vmatprep.subr.bf16.mxu0 0
        %1504 = vmatpush1.bf16.msra.mxu0 0
        %1505 = vmatprep.subr.bf16.mxu0 0
        %1506 = vmatpush1.bf16.msra.mxu0 0
        %1507 = vmatprep.subr.bf16.mxu0 0
        %1508 = vmatpush1.bf16.msra.mxu0 0
        %1509 = vmatprep.subr.bf16.mxu0 0
        %1510 = vmatpush1.bf16.msra.mxu0 0
        %1511 = vmatprep.subr.bf16.mxu0 0
        %1512 = vmatpush1.bf16.msra.mxu0 0
        %1513 = vmatprep.subr.bf16.mxu0 0
        %1514 = vmatpush1.bf16.msra.mxu0 0
        %1515 = vmatprep.subr.bf16.mxu0 0
        %1516 = vmatpush1.bf16.msra.mxu0 0
        %1517 = vmatprep.subr.bf16.mxu0 0
        %1518 = vmatpush1.bf16.msra.mxu0 0
        %1519 = vmatprep.subr.bf16.mxu0 0
        %1520 = vmatpush1.bf16.msra.mxu0 0
        %1521 = vmatprep.subr.bf16.mxu0 0
        %1522 = vmatpush1.bf16.msra.mxu0 0
        %1523 = vmatprep.subr.bf16.mxu0 0
        %1524 = vmatpush1.bf16.msra.mxu0 0
        %1525 = vmatprep.subr.bf16.mxu0 0
        %1526 = vmatpush1.bf16.msra.mxu0 0
        %1527 = vmatprep.subr.bf16.mxu0 0
        %1528 = vmatpush1.bf16.msra.mxu0 0
        %1529 = vmatprep.mubr.bf16.mxu0 0
        %1530 = vmatmul.mubr.bf16.gmra.mrb[0].mxu0 %v1495
        %v1531 = vpop.f32.mrb[0].mxu0
        %v1532 = vadd.f32 0.0, %v1531
        %v1533 = vpop.f32.mrb[0].mxu0
        %v1534 = vadd.f32 0.0, %v1533
        %v1535 = vpop.f32.mrb[0].mxu0
        %v1536 = vpop.f32.mrb[0].mxu0
        %1537 = vdwg.mxu0
        %v1539 = vrot.slane %v1532, 7
        %1540 = vrot.lane.b32.xlu0 %v1539, 116
        %v1541 = vpop.permute.xlu0 %1540
        %v1543 = vrot.slane %v1532, 6
        %1544 = vrot.lane.b32.xlu0 %v1543, 104
        %v1545 = vpop.permute.xlu0 %1544
        %v1547 = vrot.slane %v1532, 5
        %1548 = vrot.lane.b32.xlu0 %v1547, 92
        %v1549 = vpop.permute.xlu0 %1548
        %v1551 = vrot.slane %v1532, 4
        %1552 = vrot.lane.b32.xlu0 %v1551, 80
        %v1553 = vpop.permute.xlu0 %1552
        %v1555 = vrot.slane %v1532, 3
        %1556 = vrot.lane.b32.xlu0 %v1555, 68
        %v1557 = vpop.permute.xlu0 %1556
        %v1559 = vrot.slane %v1532, 2
        %1560 = vrot.lane.b32.xlu0 %v1559, 56
        %v1561 = vpop.permute.xlu0 %1560
        %v1563 = vrot.slane %v1532, 1
        %1564 = vrot.lane.b32.xlu0 %v1563, 44
        %v1565 = vpop.permute.xlu0 %1564
        %1567 = vrot.lane.b32.xlu0 %v1532, 32
        %v1568 = vpop.permute.xlu0 %1567
        %1570 = vrot.lane.b32.xlu0 %v1539, 20
        %v1571 = vpop.permute.xlu0 %1570
        %v1574 = vrot.slane %v1534, 6
        %1575 = vrot.lane.b32.xlu0 %v1543, 8
        %v1576 = vpop.permute.xlu0 %1575
        %1577 = vrot.lane.b32.xlu0 %v1574, 8
        %v1578 = vpop.permute.xlu0 %1577
        %vm1579 = vcmask 64512
        %v1580 = vsel %vm1579, %v1576, %v1578
        %v1582 = vrot.slane %v1534, 5
        %1583 = vrot.lane.b32.xlu0 %v1582, 124
        %v1584 = vpop.permute.xlu0 %1583
        %vm1586 = vcmask 1040384
        %v1587 = vsel %vm1586, %v1532, %v1541
        %vm1588 = vcmask 1041408
        %v1589 = vsel %vm1588, %v1587, %v1545
        %vm1590 = vcmask 1042432
        %v1591 = vsel %vm1590, %v1589, %v1549
        %v1592 = vsel %vm749, %v1591, %v1553
        %vm1593 = vcmask 1044480
        %v1594 = vsel %vm1593, %v1592, %v1557
        %vm1595 = vcmask 1045504
        %v1596 = vsel %vm1595, %v1594, %v1561
        %vm1597 = vcmask 1046528
        %v1598 = vsel %vm1597, %v1596, %v1565
        %v1599 = vsel %vm1586, %v1568, %v1571
        %v1600 = vsel %vm1588, %v1599, %v1580
        %v1601 = vsel %vm1590, %v1600, %v1584
        %v1602 = vld [vmem:[%s12] sm:$0xf]
        %v1603 = vld [vmem:[%s12 + $0x4] sm:$0xf]
        %v1604 = vld [vmem:[%s12 + $0x8] sm:$0xf]
        %v1605 = vld [vmem:[%s12 + $0xc] sm:$0xf]
        %v1606 = vld [vmem:[%s12 + $0x10] sm:$0xf]
        %v1607 = vld [vmem:[%s12 + $0x14] sm:$0xf]
        %v1608 = vld [vmem:[%s12 + $0x18] sm:$0xf]
        %v1609 = vld [vmem:[%s12 + $0x1c] sm:$0xf]
        %v1610 = vpack.c.bf16 %v1601, %v1598
        %v1619 = vunpack.c.l.b16 %v1602
        %v1620 = vunpack.c.l.b16 %v1603
        %v1621 = vunpack.c.l.b16 %v1604
        %v1622 = vunpack.c.l.b16 %v1605
        %v1623 = vunpack.c.l.b16 %v1606
        %v1624 = vunpack.c.l.b16 %v1607
        %v1625 = vunpack.c.l.b16 %v1608
        %v1626 = vunpack.c.l.b16 %v1609
        %v1627 = vpack.c.b16 %v1620, %v1619
        %v1628 = vpack.c.b16 %v1622, %v1621
        %v1629 = vpack.c.b16 %v1624, %v1623
        %v1630 = vpack.c.b16 %v1626, %v1625
        %vm1631 = vcmask 97280
        %v1633 = vsel %vm1631, %v1627, 0
        %v1636 = vsel %vm1631, %v1628, 0
        %v1639 = vsel %vm1631, %v1629, 0
        %v1642 = vsel %vm1631, %v1630, 0
        %v1645 = vsel %vm1595, %v1610, 0
        %1647 = vmatprep.subr.bf16.mxu0 0
        %1648 = vmatpush1.bf16.msra.mxu0 %v1645
        %1649 = vmatprep.subr.bf16.mxu0 0
        %1650 = vmatpush1.bf16.msra.mxu0 0
        %1651 = vmatprep.subr.bf16.mxu0 0
        %1652 = vmatpush1.bf16.msra.mxu0 0
        %1653 = vmatprep.subr.bf16.mxu0 0
        %1654 = vmatpush1.bf16.msra.mxu0 0
        %1655 = vmatprep.subr.bf16.mxu0 0
        %1656 = vmatpush1.bf16.msra.mxu0 0
        %1657 = vmatprep.subr.bf16.mxu0 0
        %1658 = vmatpush1.bf16.msra.mxu0 0
        %1659 = vmatprep.subr.bf16.mxu0 0
        %1660 = vmatpush1.bf16.msra.mxu0 0
        %1661 = vmatprep.subr.bf16.mxu0 0
        %1662 = vmatpush1.bf16.msra.mxu0 0
        %1663 = vmatprep.subr.bf16.mxu0 0
        %1664 = vmatpush1.bf16.msra.mxu0 0
        %1665 = vmatprep.subr.bf16.mxu0 0
        %1666 = vmatpush1.bf16.msra.mxu0 0
        %1667 = vmatprep.subr.bf16.mxu0 0
        %1668 = vmatpush1.bf16.msra.mxu0 0
        %1669 = vmatprep.subr.bf16.mxu0 0
        %1670 = vmatpush1.bf16.msra.mxu0 0
        %1671 = vmatprep.subr.bf16.mxu0 0
        %1672 = vmatpush1.bf16.msra.mxu0 0
        %1673 = vmatprep.subr.bf16.mxu0 0
        %1674 = vmatpush1.bf16.msra.mxu0 0
        %1675 = vmatprep.subr.bf16.mxu0 0
        %1676 = vmatpush1.bf16.msra.mxu0 0
        %1677 = vmatprep.subr.bf16.mxu0 0
        %1678 = vmatpush1.bf16.msra.mxu0 0
        %1679 = vmatprep.mubr.bf16.mxu0 0
        %1680 = vmatmul.mubr.bf16.gmra.mrb[0].mxu0 %v1633
        %v1681 = vpop.f32.mrb[0].mxu0
        %v1682 = vadd.f32 0.0, %v1681
        %v1683 = vpop.f32.mrb[0].mxu0
        %v1684 = vpop.f32.mrb[0].mxu0
        %v1685 = vadd.f32 0.0, %v1684
        %v1686 = vpop.f32.mrb[0].mxu0
        %1687 = vmatprep.mubr.bf16.mxu0 0
        %1688 = vmatmul.mubr.bf16.gmra.mrb[0].mxu0 %v1636
        %v1689 = vpop.f32.mrb[0].mxu0
        %v1690 = vadd.f32 0.0, %v1689
        %v1691 = vpop.f32.mrb[0].mxu0
        %v1692 = vpop.f32.mrb[0].mxu0
        %v1693 = vadd.f32 0.0, %v1692
        %v1694 = vpop.f32.mrb[0].mxu0
        %1695 = vmatprep.mubr.bf16.mxu0 0
        %1696 = vmatmul.mubr.bf16.gmra.mrb[0].mxu0 %v1639
        %v1697 = vpop.f32.mrb[0].mxu0
        %v1698 = vadd.f32 0.0, %v1697
        %v1699 = vpop.f32.mrb[0].mxu0
        %v1700 = vpop.f32.mrb[0].mxu0
        %v1701 = vadd.f32 0.0, %v1700
        %v1702 = vpop.f32.mrb[0].mxu0
        %1703 = vmatprep.mubr.bf16.mxu0 0
        %1704 = vmatmul.mubr.bf16.gmra.mrb[0].mxu0 %v1642
        %v1705 = vpop.f32.mrb[0].mxu0
        %v1706 = vadd.f32 0.0, %v1705
        %v1707 = vpop.f32.mrb[0].mxu0
        %v1708 = vpop.f32.mrb[0].mxu0
        %v1709 = vadd.f32 0.0, %v1708
        %v1710 = vpop.f32.mrb[0].mxu0
        %1711 = vdwg.mxu0
        %v1712 = vpack.c.bf16 %v1685, %v1682
        %v1713 = vpack.c.bf16 %v1693, %v1690
        %v1714 = vpack.c.bf16 %v1701, %v1698
        %v1715 = vpack.c.bf16 %v1709, %v1706
        %v1716 = vld [vmem:[%s13] sm:$0xf]
        %v1717 = vld [vmem:[%s13 + $0x4] sm:$0x3]
        %v1720 = vunpack.c.l.b16 %v1716
        %v1721 = vunpack.c.l.b16 %v1717
        %v1722 = vpack.c.b16 %v1721, %v1720
        %v1724 = vsel %vm1631, %v1712, 0
        %v1727 = vsel %vm1631, %v1713, 0
        %v1730 = vsel %vm1631, %v1714, 0
        %v1733 = vsel %vm1631, %v1715, 0
        %v1736 = vsel %vm1595, %v1722, 0
        %1738 = vmatprep.subr.bf16.mxu0 0
        %1739 = vmatpush1.bf16.msra.mxu0 %v1736
        %1740 = vmatprep.subr.bf16.mxu0 0
        %1741 = vmatpush1.bf16.msra.mxu0 0
        %1742 = vmatprep.subr.bf16.mxu0 0
        %1743 = vmatpush1.bf16.msra.mxu0 0
        %1744 = vmatprep.subr.bf16.mxu0 0
        %1745 = vmatpush1.bf16.msra.mxu0 0
        %1746 = vmatprep.subr.bf16.mxu0 0
        %1747 = vmatpush1.bf16.msra.mxu0 0
        %1748 = vmatprep.subr.bf16.mxu0 0
        %1749 = vmatpush1.bf16.msra.mxu0 0
        %1750 = vmatprep.subr.bf16.mxu0 0
        %1751 = vmatpush1.bf16.msra.mxu0 0
        %1752 = vmatprep.subr.bf16.mxu0 0
        %1753 = vmatpush1.bf16.msra.mxu0 0
        %1754 = vmatprep.subr.bf16.mxu0 0
        %1755 = vmatpush1.bf16.msra.mxu0 0
        %1756 = vmatprep.subr.bf16.mxu0 0
        %1757 = vmatpush1.bf16.msra.mxu0 0
        %1758 = vmatprep.subr.bf16.mxu0 0
        %1759 = vmatpush1.bf16.msra.mxu0 0
        %1760 = vmatprep.subr.bf16.mxu0 0
        %1761 = vmatpush1.bf16.msra.mxu0 0
        %1762 = vmatprep.subr.bf16.mxu0 0
        %1763 = vmatpush1.bf16.msra.mxu0 0
        %1764 = vmatprep.subr.bf16.mxu0 0
        %1765 = vmatpush1.bf16.msra.mxu0 0
        %1766 = vmatprep.subr.bf16.mxu0 0
        %1767 = vmatpush1.bf16.msra.mxu0 0
        %1768 = vmatprep.subr.bf16.mxu0 0
        %1769 = vmatpush1.bf16.msra.mxu0 0
        %1770 = vmatprep.mubr.bf16.mxu0 0
        %1771 = vmatmul.mubr.bf16.gmra.mrb[0].mxu0 %v1724
        %v1772 = vpop.f32.mrb[0].mxu0
        %v1773 = vadd.f32 0.0, %v1772
        %v1774 = vpop.f32.mrb[0].mxu0
        %v1775 = vpop.f32.mrb[0].mxu0
        %v1776 = vadd.f32 0.0, %v1775
        %v1777 = vpop.f32.mrb[0].mxu0
        %1778 = vmatprep.mubr.bf16.mxu0 0
        %1779 = vmatmul.mubr.bf16.gmra.mrb[0].mxu0 %v1727
        %v1780 = vpop.f32.mrb[0].mxu0
        %v1781 = vadd.f32 0.0, %v1780
        %v1782 = vpop.f32.mrb[0].mxu0
        %v1783 = vpop.f32.mrb[0].mxu0
        %v1784 = vadd.f32 0.0, %v1783
        %v1785 = vpop.f32.mrb[0].mxu0
        %1786 = vmatprep.mubr.bf16.mxu0 0
        %1787 = vmatmul.mubr.bf16.gmra.mrb[0].mxu0 %v1730
        %v1788 = vpop.f32.mrb[0].mxu0
        %v1789 = vadd.f32 0.0, %v1788
        %v1790 = vpop.f32.mrb[0].mxu0
        %v1791 = vpop.f32.mrb[0].mxu0
        %v1792 = vadd.f32 0.0, %v1791
        %v1793 = vpop.f32.mrb[0].mxu0
        %1794 = vmatprep.mubr.bf16.mxu0 0
        %1795 = vmatmul.mubr.bf16.gmra.mrb[0].mxu0 %v1733
        %v1796 = vpop.f32.mrb[0].mxu0
        %v1797 = vadd.f32 0.0, %v1796
        %v1798 = vpop.f32.mrb[0].mxu0
        %v1799 = vpop.f32.mrb[0].mxu0
        %v1800 = vadd.f32 0.0, %v1799
        %v1801 = vpop.f32.mrb[0].mxu0
        %1802 = vdwg.mxu0
        %v1803 = vxor.u32 %v1773, 2147483648
        %v1804 = vxor.u32 %v1776, 2147483648
        %v1805 = vxor.u32 %v1781, 2147483648
        %v1806 = vxor.u32 %v1784, 2147483648
        %v1807 = vxor.u32 %v1789, 2147483648
        %v1808 = vxor.u32 %v1792, 2147483648
        %v1809 = vxor.u32 %v1797, 2147483648
        %v1810 = vxor.u32 %v1800, 2147483648
        %v1811 = vmul.f32 %v1803, 1.442695
        %v1812 = vpow.pop %v1811
        %v1813 = vmul.f32 %v1804, 1.442695
        %v1814 = vpow.pop %v1813
        %v1815 = vmul.f32 %v1805, 1.442695
        %v1816 = vpow.pop %v1815
        %v1817 = vmul.f32 %v1806, 1.442695
        %v1818 = vpow.pop %v1817
        %v1819 = vmul.f32 %v1807, 1.442695
        %v1820 = vpow.pop %v1819
        %v1821 = vmul.f32 %v1808, 1.442695
        %v1822 = vpow.pop %v1821
        %v1823 = vmul.f32 %v1809, 1.442695
        %v1824 = vpow.pop %v1823
        %v1825 = vmul.f32 %v1810, 1.442695
        %v1826 = vpow.pop %v1825
        %v1827 = vadd.f32 %v1812, 1.0
        %v1828 = vadd.f32 %v1814, 1.0
        %v1829 = vadd.f32 %v1816, 1.0
        %v1830 = vadd.f32 %v1818, 1.0
        %v1831 = vadd.f32 %v1820, 1.0
        %v1832 = vadd.f32 %v1822, 1.0
        %v1833 = vadd.f32 %v1824, 1.0
        %v1834 = vadd.f32 %v1826, 1.0
        %v1835 = vrcp.pop %v1827
        %v1836 = vmul.f32 1.0, %v1835
        %v1837 = vrcp.pop %v1828
        %v1838 = vmul.f32 1.0, %v1837
        %v1839 = vrcp.pop %v1829
        %v1840 = vmul.f32 1.0, %v1839
        %v1841 = vrcp.pop %v1830
        %v1842 = vmul.f32 1.0, %v1841
        %v1843 = vrcp.pop %v1831
        %v1844 = vmul.f32 1.0, %v1843
        %v1845 = vrcp.pop %v1832
        %v1846 = vmul.f32 1.0, %v1845
        %v1847 = vrcp.pop %v1833
        %v1848 = vmul.f32 1.0, %v1847
        %v1849 = vrcp.pop %v1834
        %v1850 = vmul.f32 1.0, %v1849
        %1851 = vst [vmem:[%s477] sm:$0xff] %v1836
        %1852 = vst [vmem:[%s477 + $0x8] sm:$0xff] %v1838
        %1853 = vst [vmem:[%s477 + $0x10] sm:$0xff] %v1840
        %1854 = vst [vmem:[%s477 + $0x18] sm:$0xff] %v1842
        %1855 = vst [vmem:[%s477 + $0x20] sm:$0xff] %v1844
        %1856 = vst [vmem:[%s477 + $0x28] sm:$0xff] %v1846
        %1857 = vst [vmem:[%s477 + $0x30] sm:$0xff] %v1848
        %1858 = vst [vmem:[%s477 + $0x38] sm:$0xff] %v1850
        %s1859 = sand.u32 %s342, 1
        %s1860 = scalar_lea.sflag [#allocation5], %s1859
        %s1861 = sand.u32 %s342, 1
        %s1862 = smul.addr %s1861, 64
        %s1863 = scalar_lea.vmem [#allocation4], %s1862
        // Predicated region
        $region77: #{tpu_custom_call.1} parent=75 // pred_check
          %p1864 = pneg %p352
        $region78: #{tpu_custom_call.1} parent=75 // pred_check_branch
          %1866 = sbr.rel (%p1864) target = $region80
        $region79: #{tpu_custom_call.1} parent=75 // pred_region
          %s1868 = ssub.s32 1024, 1024
          %1869 = vsyncadd %s1860, %s1868
          %s1870 = smul.addr %s30, 8
          %s1871 = smul.addr %s1870, 128
          %s1872 = scalar_lea.hbm %s14, %s1871
          %s1873 = sshll.u32 %s1863, 4
          %s1874 = int_to_ptr.vmem [resolvable:$true] %s1873
          %1879 = dma.vmem_to_hbm [thread:$0]  %s1874, 1024, %s1872, %s1860, 128, 128, 8
        $region80: #{tpu_custom_call.1} parent=75 // pred_fallthru
          _
      $region76: #{tpu_custom_call.1} parent=5 // pred_fallthru
        _
      %p1880 = scmp.le.s32.totalorder 2, %s25
      // Predicated region
      $region81: #{tpu_custom_call.1} parent=5 // pred_check
        %p1881 = pneg %p1880
      $region82: #{tpu_custom_call.1} parent=5 // pred_check_branch
        %1883 = sbr.rel (%p1881) target = $region84
      $region83: #{tpu_custom_call.1} parent=5 // pred_region
        %s1884 = ssub.s32 %s25, 2
        // Predicated region
        $region85: #{tpu_custom_call.1} parent=83 // pred_check
          %p1885 = pneg %p358
        $region86: #{tpu_custom_call.1} parent=83 // pred_check_branch
          %1887 = sbr.rel (%p1885) target = $region88
        $region87: #{tpu_custom_call.1} parent=83 // pred_region
          %s1888 = sand.u32 %s343, 1
          %s1889 = scalar_lea.sflag [#allocation5], %s1888
          %s1890 = sand.u32 %s343, 1
          %s1891 = smul.addr %s1890, 64
          %s1892 = scalar_lea.vmem [#allocation4], %s1891
          %1893 = dma.done %s1889, 1024
        $region88: #{tpu_custom_call.1} parent=83 // pred_fallthru
          _
      $region84: #{tpu_custom_call.1} parent=5 // pred_fallthru
        _
    $region6: #{tpu_custom_call.1} parent=1 // loop_footer
      %s29 = sadd.s32 1, %s25
    $region7: #{tpu_custom_call.1} parent=1 // loop_footer_branch
      %24 = sbr.rel target = $region3
    $region8: #{tpu_custom_call.1} parent=1 // loop_exit
      _
    %1894 = vsyncpa [#allocation5], 1
    %s1895 = scalar_lea.sflag [#allocation5], 1
    %1896 = vsyncpa %s1895, 1

</llo_original>
